<compile_context>
chip_gen: v5e
topology: v5e:2x2
jax: 0.10.0
libtpu: 0.0.40
codegen_flags: <defaults>
</compile_context>

<pallas_src>
import functools
import math

import jax
import jax.numpy as jnp
from jax.experimental import pallas as pl
from jax.experimental.pallas import tpu as pltpu


# ----------------------------- helpers -----------------------------

def _round_up(x, m):
    return (x + m - 1) // m * m


def _pad_rows(x2d, rows_padded):
    rows = x2d.shape[0]
    if rows_padded == rows:
        return x2d
    return jnp.pad(x2d, ((0, rows_padded - rows), (0, 0)))


# ----------------------------- Pallas kernels -----------------------------

def _dense_kernel(x_ref, w_ref, b_ref, o_ref, *, activation):
    # bf16 operands -> MXU, f32 accumulation, f32 elementwise (v5e-safe)
    y = jnp.dot(x_ref[...], w_ref[...], preferred_element_type=jnp.float32)
    y = y + b_ref[...].astype(jnp.float32)
    if activation == "gelu":
        # TODO(synk): exact erf GELU (HF BERT default); tanh approximation used here.
        c = jnp.float32(math.sqrt(2.0 / math.pi))
        y = 0.5 * y * (1.0 + jnp.tanh(c * (y + 0.044715 * y * y * y)))
    o_ref[...] = y.astype(o_ref.dtype)


def dense(x2d, w, b, activation=None, out_dtype=jnp.bfloat16,
          target_rows=256, max_cols=512):
    """(M, K) @ (K, N) + (N,). Rows tiled to <=256 (padded), cols tiled to <=512."""
    M, K = x2d.shape
    Kw, N = w.shape
    assert K == Kw
    tm = min(target_rows, _round_up(M, 8))
    Mp = _round_up(M, tm)
    if N <= max_cols:
        tn, Np = N, N
    else:
        tn = max_cols
        Np = _round_up(N, tn)

    xp = _pad_rows(x2d.astype(jnp.bfloat16), Mp)
    wp = w.astype(jnp.bfloat16)
    bp = b.astype(jnp.float32).reshape(1, N)
    if Np != N:
        wp = jnp.pad(wp, ((0, 0), (0, Np - N)))
        bp = jnp.pad(bp, ((0, 0), (0, Np - N)))

    kernel = functools.partial(_dense_kernel, activation=activation)
    out = pl.pallas_call(
        kernel,
        out_shape=jax.ShapeDtypeStruct((Mp, Np), out_dtype),
        grid=(Mp // tm, Np // tn),
        in_specs=[
            pl.BlockSpec((tm, K), lambda i, j: (i, 0)),
            pl.BlockSpec((K, tn), lambda i, j: (0, j)),
            pl.BlockSpec((1, tn), lambda i, j: (0, j)),
        ],
        out_specs=pl.BlockSpec((tm, tn), lambda i, j: (i, j)),
        compiler_params=pltpu.CompilerParams(
            dimension_semantics=("parallel", "parallel"),
            vmem_limit_bytes=32 * 1024 * 1024),
    )(xp, wp, bp)
    if Mp != M or Np != N:
        out = out[:M, :N]
    return out


def _ln_kernel(x_ref, g_ref, b_ref, o_ref):
    x = x_ref[...].astype(jnp.float32)
    mu = jnp.mean(x, axis=-1, keepdims=True)
    var = jnp.mean(jnp.square(x - mu), axis=-1, keepdims=True)
    y = (x - mu) * jax.lax.rsqrt(var + 1e-12)  # BERT LayerNorm eps
    o_ref[...] = (y * g_ref[...] + b_ref[...]).astype(o_ref.dtype)


def _add_ln_kernel(x_ref, r_ref, g_ref, b_ref, o_ref):
    # fused residual add + layernorm
    x = x_ref[...].astype(jnp.float32) + r_ref[...].astype(jnp.float32)
    mu = jnp.mean(x, axis=-1, keepdims=True)
    var = jnp.mean(jnp.square(x - mu), axis=-1, keepdims=True)
    y = (x - mu) * jax.lax.rsqrt(var + 1e-12)
    o_ref[...] = (y * g_ref[...] + b_ref[...]).astype(o_ref.dtype)


def layernorm(x2d, gamma, beta, residual2d=None, out_dtype=jnp.bfloat16,
              target_rows=256):
    M, D = x2d.shape
    tm = min(target_rows, _round_up(M, 8))
    Mp = _round_up(M, tm)
    g = gamma.astype(jnp.float32).reshape(1, D)
    b = beta.astype(jnp.float32).reshape(1, D)

    row_spec = pl.BlockSpec((tm, D), lambda i: (i, 0))
    vec_spec = pl.BlockSpec((1, D), lambda i: (0, 0))

    if residual2d is None:
        operands = (_pad_rows(x2d, Mp), g, b)
        in_specs = [row_spec, vec_spec, vec_spec]
        kern = _ln_kernel
    else:
        operands = (_pad_rows(x2d, Mp), _pad_rows(residual2d, Mp), g, b)
        in_specs = [row_spec, row_spec, vec_spec, vec_spec]
        kern = _add_ln_kernel

    out = pl.pallas_call(
        kern,
        out_shape=jax.ShapeDtypeStruct((Mp, D), out_dtype),
        grid=(Mp // tm,),
        in_specs=in_specs,
        out_specs=row_spec,
        compiler_params=pltpu.CompilerParams(
            dimension_semantics=("parallel",),
            vmem_limit_bytes=32 * 1024 * 1024),
    )(*operands)
    return out[:M] if Mp != M else out


def _attention_kernel(q_ref, k_ref, v_ref, m_ref, o_ref, *, n_heads, scale, causal):
    # q_ref: (1, Sq, D); k_ref/v_ref: (1, Sk, D); m_ref: (1, 1, Sk); o_ref: (1, Sq, D)
    Sq, D = q_ref.shape[1], q_ref.shape[2]
    Sk = k_ref.shape[1]
    dh = D // n_heads
    neg = jnp.float32(-1e9)

    # Additive mask built in-kernel (no (B, Sq, Sk) HBM tensor).
    pad = m_ref[0].astype(jnp.float32)          # (1, Sk)
    add = (1.0 - pad) * neg                     # (1, Sk) broadcast over queries
    if causal:
        qpos = jax.lax.broadcasted_iota(jnp.int32, (Sq, Sk), 0)
        kpos = jax.lax.broadcasted_iota(jnp.int32, (Sq, Sk), 1)
        add = add + jnp.where(kpos > qpos, neg, jnp.float32(0.0))

    # TODO(synk): flash-style Sk streaming + (B, H) grid for long sequences (v7x VMEM).
    for h in range(n_heads):
        lo = h * dh
        qh = q_ref[0, :, lo:lo + dh]            # (Sq, dh) bf16
        kh = k_ref[0, :, lo:lo + dh]            # (Sk, dh) bf16
        vh = v_ref[0, :, lo:lo + dh]            # (Sk, dh) bf16
        s = jnp.einsum("qd,kd->qk", qh, kh,
                       preferred_element_type=jnp.float32) * scale
        s = s + add
        mmax = jnp.max(s, axis=-1, keepdims=True)
        p = jnp.exp(s - mmax)
        denom = jnp.sum(p, axis=-1, keepdims=True)
        p = p * pl.reciprocal(denom, approx=True)
        ctx = jnp.einsum("qk,kd->qd", p.astype(vh.dtype), vh,
                         preferred_element_type=jnp.float32)
        o_ref[0, :, lo:lo + dh] = ctx.astype(o_ref.dtype)


def attention(q, k, v, pad_mask, n_heads, causal):
    """q: (B, Sq, D); k, v: (B, Sk, D); pad_mask: (B, Sk) of 1/0. Output (B, Sq, D)."""
    B, Sq, D = q.shape
    Sk = k.shape[1]
    dh = D // n_heads
    scale = 1.0 / math.sqrt(dh)
    kernel = functools.partial(_attention_kernel, n_heads=n_heads,
                               scale=scale, causal=causal)
    return pl.pallas_call(
        kernel,
        out_shape=jax.ShapeDtypeStruct((B, Sq, D), q.dtype),
        grid=(B,),
        in_specs=[
            pl.BlockSpec((1, Sq, D), lambda b: (b, 0, 0)),
            pl.BlockSpec((1, Sk, D), lambda b: (b, 0, 0)),
            pl.BlockSpec((1, Sk, D), lambda b: (b, 0, 0)),
            pl.BlockSpec((1, 1, Sk), lambda b: (b, 0, 0)),
        ],
        out_specs=pl.BlockSpec((1, Sq, D), lambda b: (b, 0, 0)),
        compiler_params=pltpu.CompilerParams(
            dimension_semantics=("parallel",),
            vmem_limit_bytes=32 * 1024 * 1024),
    )(q, k, v, pad_mask.reshape(B, 1, Sk).astype(jnp.float32))


# ----------------------------- Parameter init -----------------------------
# "Pretrained" BERTs replaced with deterministic random init; weights in bf16,
# biases / LN params / embeddings in f32.

def _init_bert_params(key, *, vocab, max_pos, d_model, d_ff, n_layers, cross):
    keys = iter(jax.random.split(key, 8 + n_layers * 8))

    def nrm(shape, dtype=jnp.bfloat16):
        return (jax.random.normal(next(keys), shape, jnp.float32) * 0.02).astype(dtype)

    p = {
        "word_emb": nrm((vocab, d_model), jnp.float32),
        "pos_emb": nrm((max_pos, d_model), jnp.float32),
        "type_emb": nrm((2, d_model), jnp.float32),
        "emb_ln_g": jnp.ones((d_model,), jnp.float32),
        "emb_ln_b": jnp.zeros((d_model,), jnp.float32),
        "layers": [],
    }
    for _ in range(n_layers):
        lp = {
            # fused QKV projection
            "qkv_w": nrm((d_model, 3 * d_model)),
            "qkv_b": jnp.zeros((3 * d_model,), jnp.float32),
            "self_o_w": nrm((d_model, d_model)),
            "self_o_b": jnp.zeros((d_model,), jnp.float32),
            "self_ln_g": jnp.ones((d_model,), jnp.float32),
            "self_ln_b": jnp.zeros((d_model,), jnp.float32),
            "ffn1_w": nrm((d_model, d_ff)),
            "ffn1_b": jnp.zeros((d_ff,), jnp.float32),
            "ffn2_w": nrm((d_ff, d_model)),
            "ffn2_b": jnp.zeros((d_model,), jnp.float32),
            "ffn_ln_g": jnp.ones((d_model,), jnp.float32),
            "ffn_ln_b": jnp.zeros((d_model,), jnp.float32),
        }
        if cross:
            lp.update({
                "cross_q_w": nrm((d_model, d_model)),
                "cross_q_b": jnp.zeros((d_model,), jnp.float32),
                # fused K/V projection of the encoder hidden states
                "cross_kv_w": nrm((d_model, 2 * d_model)),
                "cross_kv_b": jnp.zeros((2 * d_model,), jnp.float32),
                "cross_o_w": nrm((d_model, d_model)),
                "cross_o_b": jnp.zeros((d_model,), jnp.float32),
                "cross_ln_g": jnp.ones((d_model,), jnp.float32),
                "cross_ln_b": jnp.zeros((d_model,), jnp.float32),
            })
        p["layers"].append(lp)
    return p


# ----------------------------- Model (glue in JAX) -----------------------------

def _self_mha(x, pad_mask, lp, n_heads, causal):
    B, S, D = x.shape
    qkv = dense(x.reshape(B * S, D), lp["qkv_w"], lp["qkv_b"]).reshape(B, S, 3 * D)
    q, k, v = qkv[..., :D], qkv[..., D:2 * D], qkv[..., 2 * D:]
    ctx = attention(q, k, v, pad_mask, n_heads, causal)            # (B, S, D)
    out = dense(ctx.reshape(B * S, D), lp["self_o_w"], lp["self_o_b"])
    return out.reshape(B, S, D)


def _cross_mha(x, enc_hidden, enc_mask, lp, n_heads):
    B, Sq, D = x.shape
    Sk = enc_hidden.shape[1]
    q = dense(x.reshape(B * Sq, D), lp["cross_q_w"], lp["cross_q_b"]).reshape(B, Sq, D)
    kv = dense(enc_hidden.reshape(B * Sk, D), lp["cross_kv_w"],
               lp["cross_kv_b"]).reshape(B, Sk, 2 * D)
    k, v = kv[..., :D], kv[..., D:]
    ctx = attention(q, k, v, enc_mask, n_heads, causal=False)      # (B, Sq, D)
    out = dense(ctx.reshape(B * Sq, D), lp["cross_o_w"], lp["cross_o_b"])
    return out.reshape(B, Sq, D)


def bert_forward(p, input_ids, attention_mask, *, n_heads, causal=False,
                 enc_hidden=None, enc_mask=None):
    B, S = input_ids.shape
    D = p["word_emb"].shape[1]
    # Embeddings (gather stays in plain JAX), token_type_ids = 0.
    x = (p["word_emb"][input_ids]
         + p["pos_emb"][:S][None, :, :]
         + p["type_emb"][0][None, None, :])
    x = layernorm(x.reshape(B * S, D), p["emb_ln_g"], p["emb_ln_b"]).reshape(B, S, D)

    for lp in p["layers"]:
        a = _self_mha(x, attention_mask, lp, n_heads, causal)
        x = layernorm(a.reshape(B * S, D), lp["self_ln_g"], lp["self_ln_b"],
                      residual2d=x.reshape(B * S, D)).reshape(B, S, D)
        if enc_hidden is not None:
            c = _cross_mha(x, enc_hidden, enc_mask, lp, n_heads)
            x = layernorm(c.reshape(B * S, D), lp["cross_ln_g"], lp["cross_ln_b"],
                          residual2d=x.reshape(B * S, D)).reshape(B, S, D)
        h = dense(x.reshape(B * S, D), lp["ffn1_w"], lp["ffn1_b"], activation="gelu")
        h = dense(h, lp["ffn2_w"], lp["ffn2_b"])
        x = layernorm(h, lp["ffn_ln_g"], lp["ffn_ln_b"],
                      residual2d=x.reshape(B * S, D)).reshape(B, S, D)
    return x  # last_hidden_state


def mtqe_forward(params, src_ids, src_mask, tgt_ids, tgt_mask, *, n_heads):
    src_encoded = bert_forward(params["encoder"], src_ids, src_mask,
                               n_heads=n_heads, causal=False)
    tgt_decoded = bert_forward(params["decoder"], tgt_ids, tgt_mask,
                               n_heads=n_heads, causal=True,
                               enc_hidden=src_encoded, enc_mask=src_mask)
    B, S, D = tgt_decoded.shape
    num_classes = params["fc_b"].shape[0]
    # Lane-dense classifier head: pad N to 128 lanes, slice back in JAX.
    n_pad = _round_up(max(num_classes, 128), 128)
    fc_w = jnp.pad(params["fc_w"], ((0, 0), (0, n_pad - num_classes)))
    fc_b = jnp.pad(params["fc_b"], ((0, n_pad - num_classes),))
    logits = dense(tgt_decoded.reshape(B * S, D), fc_w, fc_b, out_dtype=jnp.float32)
    return logits[:, :num_classes].reshape(B, S, num_classes)  # token_outputs


# ----------------------------- Main -----------------------------

if __name__ == "__main__":
    # Small synthetic config (pretrained BERTs replaced with deterministic random init).
    VOCAB, MAX_POS = 100, 64
    D_MODEL, N_HEADS, D_FF, N_LAYERS = 32, 4, 64, 2
    NUM_CLASSES = 3
    B, S_SRC, S_TGT = 2, 8, 8

    key = jax.random.PRNGKey(0)
    k_enc, k_dec, k_fc, k_si, k_ti = jax.random.split(key, 5)

    params = {
        "encoder": _init_bert_params(k_enc, vocab=VOCAB, max_pos=MAX_POS,
                                     d_model=D_MODEL, d_ff=D_FF,
                                     n_layers=N_LAYERS, cross=False),
        "decoder": _init_bert_params(k_dec, vocab=VOCAB, max_pos=MAX_POS,
                                     d_model=D_MODEL, d_ff=D_FF,
                                     n_layers=N_LAYERS, cross=True),
        "fc_w": (jax.random.normal(k_fc, (D_MODEL, NUM_CLASSES), jnp.float32)
                 * 0.02).astype(jnp.bfloat16),
        "fc_b": jnp.zeros((NUM_CLASSES,), jnp.float32),
    }

    src_input_ids = jax.random.randint(k_si, (B, S_SRC), 0, VOCAB)
    tgt_input_ids = jax.random.randint(k_ti, (B, S_TGT), 0, VOCAB)
    # Pad the tail of the second sequence to exercise the attention masks.
    src_attention_mask = jnp.array([[1] * S_SRC, [1] * (S_SRC - 2) + [0, 0]], jnp.float32)
    tgt_attention_mask = jnp.array([[1] * S_TGT, [1] * (S_TGT - 3) + [0, 0, 0]], jnp.float32)

    fwd = jax.jit(functools.partial(mtqe_forward, n_heads=N_HEADS))
    out = fwd(params, src_input_ids, src_attention_mask,
              tgt_input_ids, tgt_attention_mask)
    out = jax.block_until_ready(out)

    assert out.shape == (B, S_TGT, NUM_CLASSES), out.shape
    assert bool(jnp.all(jnp.isfinite(out)))
    print("KERNEL_OK")
</pallas_src>

<mosaic_0001>
module attributes {stable_mosaic.version = 11 : i64} {
  func.func @_ln_kernel(%arg0: i32, %arg1: memref<16x32xf32, #tpu.memory_space<vmem>>, %arg2: memref<1x32xf32, #tpu.memory_space<vmem>>, %arg3: memref<1x32xf32, #tpu.memory_space<vmem>>, %arg4: memref<16x32xbf16, #tpu.memory_space<vmem>>) attributes {dimension_semantics = [#tpu.dimension_semantics<parallel>], iteration_bounds = array<i64: 1>, scalar_prefetch = 0 : i64, scratch_operands = 0 : i64, tpu.core_type = #tpu.core_type<tc>, window_params = [{transform_indices = @transform_0, window_bounds = array<i64: 16, 32>}, {pipeline_mode = #tpu.pipeline_mode<synchronous>, transform_indices = @transform_1, window_bounds = array<i64: 1, 32>}, {pipeline_mode = #tpu.pipeline_mode<synchronous>, transform_indices = @transform_2, window_bounds = array<i64: 1, 32>}, {transform_indices = @transform_3, window_bounds = array<i64: 16, 32>}]} {
    %c0 = arith.constant 0 : index
    %c0_0 = arith.constant 0 : index
    %0 = vector.load %arg1[%c0, %c0_0] : memref<16x32xf32, #tpu.memory_space<vmem>>, vector<16x32xf32>
    %cst = arith.constant dense<0.000000e+00> : vector<16xf32>
    %1 = vector.multi_reduction <add>, %0, %cst [1] : vector<16x32xf32> to vector<16xf32>
    %2 = vector.shape_cast %1 : vector<16xf32> to vector<16x1xf32>
    %cst_1 = arith.constant 3.200000e+01 : f32
    %3 = vector.broadcast %cst_1 : f32 to vector<16x1xf32>
    %4 = arith.divf %2, %3 : vector<16x1xf32>
    %5 = vector.broadcast %4 : vector<16x1xf32> to vector<16x32xf32>
    %6 = arith.subf %0, %5 : vector<16x32xf32>
    %7 = arith.mulf %6, %6 : vector<16x32xf32>
    %cst_2 = arith.constant dense<0.000000e+00> : vector<16xf32>
    %8 = vector.multi_reduction <add>, %7, %cst_2 [1] : vector<16x32xf32> to vector<16xf32>
    %9 = vector.shape_cast %8 : vector<16xf32> to vector<16x1xf32>
    %cst_3 = arith.constant 3.200000e+01 : f32
    %10 = vector.broadcast %cst_3 : f32 to vector<16x1xf32>
    %11 = arith.divf %9, %10 : vector<16x1xf32>
    %12 = vector.broadcast %4 : vector<16x1xf32> to vector<16x32xf32>
    %13 = arith.subf %0, %12 : vector<16x32xf32>
    %cst_4 = arith.constant 9.99999996E-13 : f32
    %14 = vector.broadcast %cst_4 : f32 to vector<16x1xf32>
    %15 = arith.addf %11, %14 : vector<16x1xf32>
    %16 = math.rsqrt %15 : vector<16x1xf32>
    %17 = vector.broadcast %16 : vector<16x1xf32> to vector<16x32xf32>
    %18 = arith.mulf %13, %17 : vector<16x32xf32>
    %c0_5 = arith.constant 0 : index
    %c0_6 = arith.constant 0 : index
    %19 = vector.load %arg2[%c0_5, %c0_6] : memref<1x32xf32, #tpu.memory_space<vmem>>, vector<1x32xf32>
    %20 = vector.broadcast %19 : vector<1x32xf32> to vector<16x32xf32>
    %21 = arith.mulf %18, %20 : vector<16x32xf32>
    %c0_7 = arith.constant 0 : index
    %c0_8 = arith.constant 0 : index
    %22 = vector.load %arg3[%c0_7, %c0_8] : memref<1x32xf32, #tpu.memory_space<vmem>>, vector<1x32xf32>
    %23 = vector.broadcast %22 : vector<1x32xf32> to vector<16x32xf32>
    %24 = arith.addf %21, %23 : vector<16x32xf32>
    %25 = arith.truncf %24 : vector<16x32xf32> to vector<16x32xbf16>
    %c0_9 = arith.constant 0 : index
    %c0_10 = arith.constant 0 : index
    %26 = vector.load %arg4[%c0_9, %c0_10] : memref<16x32xbf16, #tpu.memory_space<vmem>>, vector<16x32xbf16>
    tpu.vector_store %arg4[%c0_9, %c0_10], %25 {strides = array<i32>} : memref<16x32xbf16, #tpu.memory_space<vmem>>, vector<16x32xbf16>,
    return
  }
  func.func @transform_0(%arg0: i32) -> (i32, i32) {
    %c0_i32 = arith.constant 0 : i32
    %c0_i32_0 = arith.constant 0 : i32
    return %arg0, %c0_i32 : i32, i32
  }
  func.func @transform_1(%arg0: i32) -> (i32, i32) {
    %c0_i32 = arith.constant 0 : i32
    %c0_i32_0 = arith.constant 0 : i32
    %c0_i32_1 = arith.constant 0 : i32
    return %c0_i32, %c0_i32_0 : i32, i32
  }
  func.func @transform_2(%arg0: i32) -> (i32, i32) {
    %c0_i32 = arith.constant 0 : i32
    %c0_i32_0 = arith.constant 0 : i32
    %c0_i32_1 = arith.constant 0 : i32
    return %c0_i32, %c0_i32_0 : i32, i32
  }
  func.func @transform_3(%arg0: i32) -> (i32, i32) {
    %c0_i32 = arith.constant 0 : i32
    %c0_i32_0 = arith.constant 0 : i32
    return %arg0, %c0_i32 : i32, i32
  }
}

module attributes {stable_mosaic.version = 11 : i64} {
  func.func @_dense_kernel(%arg0: i32, %arg1: i32, %arg2: memref<16x32xbf16, #tpu.memory_space<vmem>>, %arg3: memref<32x96xbf16, #tpu.memory_space<vmem>>, %arg4: memref<1x96xf32, #tpu.memory_space<vmem>>, %arg5: memref<16x96xbf16, #tpu.memory_space<vmem>>) attributes {dimension_semantics = [#tpu.dimension_semantics<parallel>, #tpu.dimension_semantics<parallel>], iteration_bounds = array<i64: 1, 1>, scalar_prefetch = 0 : i64, scratch_operands = 0 : i64, tpu.core_type = #tpu.core_type<tc>, window_params = [{transform_indices = @transform_0, window_bounds = array<i64: 16, 32>}, {transform_indices = @transform_1, window_bounds = array<i64: 32, 96>}, {transform_indices = @transform_2, window_bounds = array<i64: 1, 96>}, {transform_indices = @transform_3, window_bounds = array<i64: 16, 96>}]} {
    %c0 = arith.constant 0 : index
    %c0_0 = arith.constant 0 : index
    %0 = vector.load %arg2[%c0, %c0_0] : memref<16x32xbf16, #tpu.memory_space<vmem>>, vector<16x32xbf16>
    %c0_1 = arith.constant 0 : index
    %c0_2 = arith.constant 0 : index
    %1 = vector.load %arg3[%c0_1, %c0_2] : memref<32x96xbf16, #tpu.memory_space<vmem>>, vector<32x96xbf16>
    %cst = arith.constant dense<0.000000e+00> : vector<16x96xf32>
    %2 = tpu.matmul %0, %1, %cst {dimension_numbers = #tpu.dot_dimension_numbers<[1], [0], [0], [1], [0, 0, 1, 1], [], []>} : vector<16x32xbf16>, vector<32x96xbf16>, vector<16x96xf32> -> vector<16x96xf32>
    %c0_3 = arith.constant 0 : index
    %c0_4 = arith.constant 0 : index
    %3 = vector.load %arg4[%c0_3, %c0_4] : memref<1x96xf32, #tpu.memory_space<vmem>>, vector<1x96xf32>
    %4 = vector.broadcast %3 : vector<1x96xf32> to vector<16x96xf32>
    %5 = arith.addf %2, %4 : vector<16x96xf32>
    %6 = arith.truncf %5 : vector<16x96xf32> to vector<16x96xbf16>
    %c0_5 = arith.constant 0 : index
    %c0_6 = arith.constant 0 : index
    %7 = vector.load %arg5[%c0_5, %c0_6] : memref<16x96xbf16, #tpu.memory_space<vmem>>, vector<16x96xbf16>
    tpu.vector_store %arg5[%c0_5, %c0_6], %6 {strides = array<i32>} : memref<16x96xbf16, #tpu.memory_space<vmem>>, vector<16x96xbf16>,
    return
  }
  func.func @transform_0(%arg0: i32, %arg1: i32) -> (i32, i32) {
    %c0_i32 = arith.constant 0 : i32
    %c0_i32_0 = arith.constant 0 : i32
    return %arg0, %c0_i32 : i32, i32
  }
  func.func @transform_1(%arg0: i32, %arg1: i32) -> (i32, i32) {
    %c0_i32 = arith.constant 0 : i32
    %c0_i32_0 = arith.constant 0 : i32
    return %c0_i32, %arg1 : i32, i32
  }
  func.func @transform_2(%arg0: i32, %arg1: i32) -> (i32, i32) {
    %c0_i32 = arith.constant 0 : i32
    %c0_i32_0 = arith.constant 0 : i32
    return %c0_i32, %arg1 : i32, i32
  }
  func.func @transform_3(%arg0: i32, %arg1: i32) -> (i32, i32) {
    %c0_i32 = arith.constant 0 : i32
    return %arg0, %arg1 : i32, i32
  }
}

module attributes {stable_mosaic.version = 11 : i64} {
  func.func @_dense_kernel(%arg0: i32, %arg1: i32, %arg2: memref<16x32xbf16, #tpu.memory_space<vmem>>, %arg3: memref<32x32xbf16, #tpu.memory_space<vmem>>, %arg4: memref<1x32xf32, #tpu.memory_space<vmem>>, %arg5: memref<16x32xbf16, #tpu.memory_space<vmem>>) attributes {dimension_semantics = [#tpu.dimension_semantics<parallel>, #tpu.dimension_semantics<parallel>], iteration_bounds = array<i64: 1, 1>, scalar_prefetch = 0 : i64, scratch_operands = 0 : i64, tpu.core_type = #tpu.core_type<tc>, window_params = [{transform_indices = @transform_0, window_bounds = array<i64: 16, 32>}, {transform_indices = @transform_1, window_bounds = array<i64: 32, 32>}, {transform_indices = @transform_2, window_bounds = array<i64: 1, 32>}, {transform_indices = @transform_3, window_bounds = array<i64: 16, 32>}]} {
    %c0 = arith.constant 0 : index
    %c0_0 = arith.constant 0 : index
    %0 = vector.load %arg2[%c0, %c0_0] : memref<16x32xbf16, #tpu.memory_space<vmem>>, vector<16x32xbf16>
    %c0_1 = arith.constant 0 : index
    %c0_2 = arith.constant 0 : index
    %1 = vector.load %arg3[%c0_1, %c0_2] : memref<32x32xbf16, #tpu.memory_space<vmem>>, vector<32x32xbf16>
    %cst = arith.constant dense<0.000000e+00> : vector<16x32xf32>
    %2 = tpu.matmul %0, %1, %cst {dimension_numbers = #tpu.dot_dimension_numbers<[1], [0], [0], [1], [0, 0, 1, 1], [], []>} : vector<16x32xbf16>, vector<32x32xbf16>, vector<16x32xf32> -> vector<16x32xf32>
    %c0_3 = arith.constant 0 : index
    %c0_4 = arith.constant 0 : index
    %3 = vector.load %arg4[%c0_3, %c0_4] : memref<1x32xf32, #tpu.memory_space<vmem>>, vector<1x32xf32>
    %4 = vector.broadcast %3 : vector<1x32xf32> to vector<16x32xf32>
    %5 = arith.addf %2, %4 : vector<16x32xf32>
    %6 = arith.truncf %5 : vector<16x32xf32> to vector<16x32xbf16>
    %c0_5 = arith.constant 0 : index
    %c0_6 = arith.constant 0 : index
    %7 = vector.load %arg5[%c0_5, %c0_6] : memref<16x32xbf16, #tpu.memory_space<vmem>>, vector<16x32xbf16>
    tpu.vector_store %arg5[%c0_5, %c0_6], %6 {strides = array<i32>} : memref<16x32xbf16, #tpu.memory_space<vmem>>, vector<16x32xbf16>,
    return
  }
  func.func @transform_0(%arg0: i32, %arg1: i32) -> (i32, i32) {
    %c0_i32 = arith.constant 0 : i32
    %c0_i32_0 = arith.constant 0 : i32
    return %arg0, %c0_i32 : i32, i32
  }
  func.func @transform_1(%arg0: i32, %arg1: i32) -> (i32, i32) {
    %c0_i32 = arith.constant 0 : i32
    %c0_i32_0 = arith.constant 0 : i32
    return %c0_i32, %arg1 : i32, i32
  }
  func.func @transform_2(%arg0: i32, %arg1: i32) -> (i32, i32) {
    %c0_i32 = arith.constant 0 : i32
    %c0_i32_0 = arith.constant 0 : i32
    return %c0_i32, %arg1 : i32, i32
  }
  func.func @transform_3(%arg0: i32, %arg1: i32) -> (i32, i32) {
    %c0_i32 = arith.constant 0 : i32
    return %arg0, %arg1 : i32, i32
  }
}

module attributes {stable_mosaic.version = 11 : i64} {
  func.func @_attention_kernel(%arg0: i32, %arg1: memref<1x8x32xbf16, #tpu.memory_space<vmem>>, %arg2: memref<1x8x32xbf16, #tpu.memory_space<vmem>>, %arg3: memref<1x8x32xbf16, #tpu.memory_space<vmem>>, %arg4: memref<1x1x8xf32, #tpu.memory_space<vmem>>, %arg5: memref<1x8x32xbf16, #tpu.memory_space<vmem>>) attributes {dimension_semantics = [#tpu.dimension_semantics<parallel>], iteration_bounds = array<i64: 2>, scalar_prefetch = 0 : i64, scratch_operands = 0 : i64, tpu.core_type = #tpu.core_type<tc>, window_params = [{transform_indices = @transform_0, window_bounds = array<i64: 1, 8, 32>}, {transform_indices = @transform_1, window_bounds = array<i64: 1, 8, 32>}, {transform_indices = @transform_2, window_bounds = array<i64: 1, 8, 32>}, {transform_indices = @transform_3, window_bounds = array<i64: 1, 1, 8>}, {transform_indices = @transform_4, window_bounds = array<i64: 1, 8, 32>}]} {
    %c0 = arith.constant 0 : index
    %c0_0 = arith.constant 0 : index
    %c0_1 = arith.constant 0 : index
    %0 = vector.load %arg4[%c0, %c0_0, %c0_1] : memref<1x1x8xf32, #tpu.memory_space<vmem>>, vector<1x1x8xf32>
    %1 = vector.shape_cast %0 : vector<1x1x8xf32> to vector<1x8xf32>
    %cst = arith.constant 1.000000e+00 : f32
    %2 = vector.broadcast %cst : f32 to vector<1x8xf32>
    %3 = arith.subf %2, %1 : vector<1x8xf32>
    %cst_2 = arith.constant -1.000000e+09 : f32
    %4 = vector.broadcast %cst_2 : f32 to vector<1x8xf32>
    %5 = arith.mulf %3, %4 : vector<1x8xf32>
    %6 = tpu.iota {dimensions = array<i32: 0>} : vector<8x8xi32>
    %7 = tpu.iota {dimensions = array<i32: 1>} : vector<8x8xi32>
    %8 = arith.cmpi sgt, %7, %6 : vector<8x8xi32>
    %cst_3 = arith.constant -1.000000e+09 : f32
    %cst_4 = arith.constant 0.000000e+00 : f32
    %9 = vector.broadcast %cst_3 : f32 to vector<8x8xf32>
    %10 = vector.broadcast %cst_4 : f32 to vector<8x8xf32>
    %11 = arith.select %8, %9, %10 : vector<8x8xi1>, vector<8x8xf32>
    %12 = vector.broadcast %5 : vector<1x8xf32> to vector<8x8xf32>
    %13 = arith.addf %12, %11 : vector<8x8xf32>
    %c0_5 = arith.constant 0 : index
    %c0_6 = arith.constant 0 : index
    %c0_7 = arith.constant 0 : index
    %14 = vector.load %arg1[%c0_5, %c0_6, %c0_7] : memref<1x8x32xbf16, #tpu.memory_space<vmem>>, vector<1x8x8xbf16>
    %15 = vector.shape_cast %14 : vector<1x8x8xbf16> to vector<8x8xbf16>
    %c0_8 = arith.constant 0 : index
    %c0_9 = arith.constant 0 : index
    %c0_10 = arith.constant 0 : index
    %16 = vector.load %arg2[%c0_8, %c0_9, %c0_10] : memref<1x8x32xbf16, #tpu.memory_space<vmem>>, vector<1x8x8xbf16>
    %17 = vector.shape_cast %16 : vector<1x8x8xbf16> to vector<8x8xbf16>
    %c0_11 = arith.constant 0 : index
    %c0_12 = arith.constant 0 : index
    %c0_13 = arith.constant 0 : index
    %18 = vector.load %arg3[%c0_11, %c0_12, %c0_13] : memref<1x8x32xbf16, #tpu.memory_space<vmem>>, vector<1x8x8xbf16>
    %19 = vector.shape_cast %18 : vector<1x8x8xbf16> to vector<8x8xbf16>
    "tpu.trace_start"() <{level = 10 : i32, message = "qd,kd->qk"}> : () -> ()
    %cst_14 = arith.constant dense<0.000000e+00> : vector<8x8xf32>
    %20 = tpu.matmul %15, %17, %cst_14 {dimension_numbers = #tpu.dot_dimension_numbers<[1], [1], [0], [0], [0, 0, 1, 0], [], []>} : vector<8x8xbf16>, vector<8x8xbf16>, vector<8x8xf32> -> vector<8x8xf32>
    "tpu.trace_stop"() : () -> ()
    %cst_15 = arith.constant 0.353553385 : f32
    %21 = vector.broadcast %cst_15 : f32 to vector<8x8xf32>
    %22 = arith.mulf %20, %21 : vector<8x8xf32>
    %23 = arith.addf %22, %13 : vector<8x8xf32>
    %cst_16 = arith.constant dense<0xFF800000> : vector<8xf32>
    %24 = vector.multi_reduction <maximumf>, %23, %cst_16 [1] : vector<8x8xf32> to vector<8xf32>
    %25 = vector.shape_cast %24 : vector<8xf32> to vector<8x1xf32>
    %26 = vector.broadcast %25 : vector<8x1xf32> to vector<8x8xf32>
    %27 = arith.subf %23, %26 : vector<8x8xf32>
    %28 = math.exp %27 : vector<8x8xf32>
    %cst_17 = arith.constant dense<0.000000e+00> : vector<8xf32>
    %29 = vector.multi_reduction <add>, %28, %cst_17 [1] : vector<8x8xf32> to vector<8xf32>
    %30 = vector.shape_cast %29 : vector<8xf32> to vector<8x1xf32>
    %31 = tpu.reciprocal %30 {approx = true} : vector<8x1xf32> -> vector<8x1xf32>
    %32 = vector.broadcast %31 : vector<8x1xf32> to vector<8x8xf32>
    %33 = arith.mulf %28, %32 : vector<8x8xf32>
    %34 = arith.truncf %33 : vector<8x8xf32> to vector<8x8xbf16>
    "tpu.trace_start"() <{level = 10 : i32, message = "qk,kd->qd"}> : () -> ()
    %cst_18 = arith.constant dense<0.000000e+00> : vector<8x8xf32>
    %35 = tpu.matmul %34, %19, %cst_18 {dimension_numbers = #tpu.dot_dimension_numbers<[1], [0], [0], [1], [0, 0, 1, 1], [], []>} : vector<8x8xbf16>, vector<8x8xbf16>, vector<8x8xf32> -> vector<8x8xf32>
    "tpu.trace_stop"() : () -> ()
    %36 = arith.truncf %35 : vector<8x8xf32> to vector<8x8xbf16>
    %c0_19 = arith.constant 0 : index
    %c0_20 = arith.constant 0 : index
    %c0_21 = arith.constant 0 : index
    %37 = vector.load %arg5[%c0_19, %c0_20, %c0_21] : memref<1x8x32xbf16, #tpu.memory_space<vmem>>, vector<1x8x8xbf16>
    %38 = vector.shape_cast %37 : vector<1x8x8xbf16> to vector<8x8xbf16>
    %39 = vector.shape_cast %36 : vector<8x8xbf16> to vector<1x8x8xbf16>
    tpu.vector_store %arg5[%c0_19, %c0_20, %c0_21], %39 {strides = array<i32>} : memref<1x8x32xbf16, #tpu.memory_space<vmem>>, vector<1x8x8xbf16>,
    %c0_22 = arith.constant 0 : index
    %c0_23 = arith.constant 0 : index
    %c8 = arith.constant 8 : index
    %40 = vector.load %arg1[%c0_22, %c0_23, %c8] : memref<1x8x32xbf16, #tpu.memory_space<vmem>>, vector<1x8x8xbf16>
    %41 = vector.shape_cast %40 : vector<1x8x8xbf16> to vector<8x8xbf16>
    %c0_24 = arith.constant 0 : index
    %c0_25 = arith.constant 0 : index
    %c8_26 = arith.constant 8 : index
    %42 = vector.load %arg2[%c0_24, %c0_25, %c8_26] : memref<1x8x32xbf16, #tpu.memory_space<vmem>>, vector<1x8x8xbf16>
    %43 = vector.shape_cast %42 : vector<1x8x8xbf16> to vector<8x8xbf16>
    %c0_27 = arith.constant 0 : index
    %c0_28 = arith.constant 0 : index
    %c8_29 = arith.constant 8 : index
    %44 = vector.load %arg3[%c0_27, %c0_28, %c8_29] : memref<1x8x32xbf16, #tpu.memory_space<vmem>>, vector<1x8x8xbf16>
    %45 = vector.shape_cast %44 : vector<1x8x8xbf16> to vector<8x8xbf16>
    "tpu.trace_start"() <{level = 10 : i32, message = "qd,kd->qk"}> : () -> ()
    %cst_30 = arith.constant dense<0.000000e+00> : vector<8x8xf32>
    %46 = tpu.matmul %41, %43, %cst_30 {dimension_numbers = #tpu.dot_dimension_numbers<[1], [1], [0], [0], [0, 0, 1, 0], [], []>} : vector<8x8xbf16>, vector<8x8xbf16>, vector<8x8xf32> -> vector<8x8xf32>
    "tpu.trace_stop"() : () -> ()
    %cst_31 = arith.constant 0.353553385 : f32
    %47 = vector.broadcast %cst_31 : f32 to vector<8x8xf32>
    %48 = arith.mulf %46, %47 : vector<8x8xf32>
    %49 = arith.addf %48, %13 : vector<8x8xf32>
    %cst_32 = arith.constant dense<0xFF800000> : vector<8xf32>
    %50 = vector.multi_reduction <maximumf>, %49, %cst_32 [1] : vector<8x8xf32> to vector<8xf32>
    %51 = vector.shape_cast %50 : vector<8xf32> to vector<8x1xf32>
    %52 = vector.broadcast %51 : vector<8x1xf32> to vector<8x8xf32>
    %53 = arith.subf %49, %52 : vector<8x8xf32>
    %54 = math.exp %53 : vector<8x8xf32>
    %cst_33 = arith.constant dense<0.000000e+00> : vector<8xf32>
    %55 = vector.multi_reduction <add>, %54, %cst_33 [1] : vector<8x8xf32> to vector<8xf32>
    %56 = vector.shape_cast %55 : vector<8xf32> to vector<8x1xf32>
    %57 = tpu.reciprocal %56 {approx = true} : vector<8x1xf32> -> vector<8x1xf32>
    %58 = vector.broadcast %57 : vector<8x1xf32> to vector<8x8xf32>
    %59 = arith.mulf %54, %58 : vector<8x8xf32>
    %60 = arith.truncf %59 : vector<8x8xf32> to vector<8x8xbf16>
    "tpu.trace_start"() <{level = 10 : i32, message = "qk,kd->qd"}> : () -> ()
    %cst_34 = arith.constant dense<0.000000e+00> : vector<8x8xf32>
    %61 = tpu.matmul %60, %45, %cst_34 {dimension_numbers = #tpu.dot_dimension_numbers<[1], [0], [0], [1], [0, 0, 1, 1], [], []>} : vector<8x8xbf16>, vector<8x8xbf16>, vector<8x8xf32> -> vector<8x8xf32>
    "tpu.trace_stop"() : () -> ()
    %62 = arith.truncf %61 : vector<8x8xf32> to vector<8x8xbf16>
    %c0_35 = arith.constant 0 : index
    %c0_36 = arith.constant 0 : index
    %c8_37 = arith.constant 8 : index
    %63 = vector.load %arg5[%c0_35, %c0_36, %c8_37] : memref<1x8x32xbf16, #tpu.memory_space<vmem>>, vector<1x8x8xbf16>
    %64 = vector.shape_cast %63 : vector<1x8x8xbf16> to vector<8x8xbf16>
    %65 = vector.shape_cast %62 : vector<8x8xbf16> to vector<1x8x8xbf16>
    tpu.vector_store %arg5[%c0_35, %c0_36, %c8_37], %65 {strides = array<i32>} : memref<1x8x32xbf16, #tpu.memory_space<vmem>>, vector<1x8x8xbf16>,
    %c0_38 = arith.constant 0 : index
    %c0_39 = arith.constant 0 : index
    %c16 = arith.constant 16 : index
    %66 = vector.load %arg1[%c0_38, %c0_39, %c16] : memref<1x8x32xbf16, #tpu.memory_space<vmem>>, vector<1x8x8xbf16>
    %67 = vector.shape_cast %66 : vector<1x8x8xbf16> to vector<8x8xbf16>
    %c0_40 = arith.constant 0 : index
    %c0_41 = arith.constant 0 : index
    %c16_42 = arith.constant 16 : index
    %68 = vector.load %arg2[%c0_40, %c0_41, %c16_42] : memref<1x8x32xbf16, #tpu.memory_space<vmem>>, vector<1x8x8xbf16>
    %69 = vector.shape_cast %68 : vector<1x8x8xbf16> to vector<8x8xbf16>
    %c0_43 = arith.constant 0 : index
    %c0_44 = arith.constant 0 : index
    %c16_45 = arith.constant 16 : index
    %70 = vector.load %arg3[%c0_43, %c0_44, %c16_45] : memref<1x8x32xbf16, #tpu.memory_space<vmem>>, vector<1x8x8xbf16>
    %71 = vector.shape_cast %70 : vector<1x8x8xbf16> to vector<8x8xbf16>
    "tpu.trace_start"() <{level = 10 : i32, message = "qd,kd->qk"}> : () -> ()
    %cst_46 = arith.constant dense<0.000000e+00> : vector<8x8xf32>
    %72 = tpu.matmul %67, %69, %cst_46 {dimension_numbers = #tpu.dot_dimension_numbers<[1], [1], [0], [0], [0, 0, 1, 0], [], []>} : vector<8x8xbf16>, vector<8x8xbf16>, vector<8x8xf32> -> vector<8x8xf32>
    "tpu.trace_stop"() : () -> ()
    %cst_47 = arith.constant 0.353553385 : f32
    %73 = vector.broadcast %cst_47 : f32 to vector<8x8xf32>
    %74 = arith.mulf %72, %73 : vector<8x8xf32>
    %75 = arith.addf %74, %13 : vector<8x8xf32>
    %cst_48 = arith.constant dense<0xFF800000> : vector<8xf32>
    %76 = vector.multi_reduction <maximumf>, %75, %cst_48 [1] : vector<8x8xf32> to vector<8xf32>
    %77 = vector.shape_cast %76 : vector<8xf32> to vector<8x1xf32>
    %78 = vector.broadcast %77 : vector<8x1xf32> to vector<8x8xf32>
    %79 = arith.subf %75, %78 : vector<8x8xf32>
    %80 = math.exp %79 : vector<8x8xf32>
    %cst_49 = arith.constant dense<0.000000e+00> : vector<8xf32>
    %81 = vector.multi_reduction <add>, %80, %cst_49 [1] : vector<8x8xf32> to vector<8xf32>
    %82 = vector.shape_cast %81 : vector<8xf32> to vector<8x1xf32>
    %83 = tpu.reciprocal %82 {approx = true} : vector<8x1xf32> -> vector<8x1xf32>
    %84 = vector.broadcast %83 : vector<8x1xf32> to vector<8x8xf32>
    %85 = arith.mulf %80, %84 : vector<8x8xf32>
    %86 = arith.truncf %85 : vector<8x8xf32> to vector<8x8xbf16>
    "tpu.trace_start"() <{level = 10 : i32, message = "qk,kd->qd"}> : () -> ()
    %cst_50 = arith.constant dense<0.000000e+00> : vector<8x8xf32>
    %87 = tpu.matmul %86, %71, %cst_50 {dimension_numbers = #tpu.dot_dimension_numbers<[1], [0], [0], [1], [0, 0, 1, 1], [], []>} : vector<8x8xbf16>, vector<8x8xbf16>, vector<8x8xf32> -> vector<8x8xf32>
    "tpu.trace_stop"() : () -> ()
    %88 = arith.truncf %87 : vector<8x8xf32> to vector<8x8xbf16>
    %c0_51 = arith.constant 0 : index
    %c0_52 = arith.constant 0 : index
    %c16_53 = arith.constant 16 : index
    %89 = vector.load %arg5[%c0_51, %c0_52, %c16_53] : memref<1x8x32xbf16, #tpu.memory_space<vmem>>, vector<1x8x8xbf16>
    %90 = vector.shape_cast %89 : vector<1x8x8xbf16> to vector<8x8xbf16>
    %91 = vector.shape_cast %88 : vector<8x8xbf16> to vector<1x8x8xbf16>
    tpu.vector_store %arg5[%c0_51, %c0_52, %c16_53], %91 {strides = array<i32>} : memref<1x8x32xbf16, #tpu.memory_space<vmem>>, vector<1x8x8xbf16>,
    %c0_54 = arith.constant 0 : index
    %c0_55 = arith.constant 0 : index
    %c24 = arith.constant 24 : index
    %92 = vector.load %arg1[%c0_54, %c0_55, %c24] : memref<1x8x32xbf16, #tpu.memory_space<vmem>>, vector<1x8x8xbf16>
    %93 = vector.shape_cast %92 : vector<1x8x8xbf16> to vector<8x8xbf16>
    %c0_56 = arith.constant 0 : index
    %c0_57 = arith.constant 0 : index
    %c24_58 = arith.constant 24 : index
    %94 = vector.load %arg2[%c0_56, %c0_57, %c24_58] : memref<1x8x32xbf16, #tpu.memory_space<vmem>>, vector<1x8x8xbf16>
    %95 = vector.shape_cast %94 : vector<1x8x8xbf16> to vector<8x8xbf16>
    %c0_59 = arith.constant 0 : index
    %c0_60 = arith.constant 0 : index
    %c24_61 = arith.constant 24 : index
    %96 = vector.load %arg3[%c0_59, %c0_60, %c24_61] : memref<1x8x32xbf16, #tpu.memory_space<vmem>>, vector<1x8x8xbf16>
    %97 = vector.shape_cast %96 : vector<1x8x8xbf16> to vector<8x8xbf16>
    "tpu.trace_start"() <{level = 10 : i32, message = "qd,kd->qk"}> : () -> ()
    %cst_62 = arith.constant dense<0.000000e+00> : vector<8x8xf32>
    %98 = tpu.matmul %93, %95, %cst_62 {dimension_numbers = #tpu.dot_dimension_numbers<[1], [1], [0], [0], [0, 0, 1, 0], [], []>} : vector<8x8xbf16>, vector<8x8xbf16>, vector<8x8xf32> -> vector<8x8xf32>
    "tpu.trace_stop"() : () -> ()
    %cst_63 = arith.constant 0.353553385 : f32
    %99 = vector.broadcast %cst_63 : f32 to vector<8x8xf32>
    %100 = arith.mulf %98, %99 : vector<8x8xf32>
    %101 = arith.addf %100, %13 : vector<8x8xf32>
    %cst_64 = arith.constant dense<0xFF800000> : vector<8xf32>
    %102 = vector.multi_reduction <maximumf>, %101, %cst_64 [1] : vector<8x8xf32> to vector<8xf32>
    %103 = vector.shape_cast %102 : vector<8xf32> to vector<8x1xf32>
    %104 = vector.broadcast %103 : vector<8x1xf32> to vector<8x8xf32>
    %105 = arith.subf %101, %104 : vector<8x8xf32>
    %106 = math.exp %105 : vector<8x8xf32>
    %cst_65 = arith.constant dense<0.000000e+00> : vector<8xf32>
    %107 = vector.multi_reduction <add>, %106, %cst_65 [1] : vector<8x8xf32> to vector<8xf32>
    %108 = vector.shape_cast %107 : vector<8xf32> to vector<8x1xf32>
    %109 = tpu.reciprocal %108 {approx = true} : vector<8x1xf32> -> vector<8x1xf32>
    %110 = vector.broadcast %109 : vector<8x1xf32> to vector<8x8xf32>
    %111 = arith.mulf %106, %110 : vector<8x8xf32>
    %112 = arith.truncf %111 : vector<8x8xf32> to vector<8x8xbf16>
    "tpu.trace_start"() <{level = 10 : i32, message = "qk,kd->qd"}> : () -> ()
    %cst_66 = arith.constant dense<0.000000e+00> : vector<8x8xf32>
    %113 = tpu.matmul %112, %97, %cst_66 {dimension_numbers = #tpu.dot_dimension_numbers<[1], [0], [0], [1], [0, 0, 1, 1], [], []>} : vector<8x8xbf16>, vector<8x8xbf16>, vector<8x8xf32> -> vector<8x8xf32>
    "tpu.trace_stop"() : () -> ()
    %114 = arith.truncf %113 : vector<8x8xf32> to vector<8x8xbf16>
    %c0_67 = arith.constant 0 : index
    %c0_68 = arith.constant 0 : index
    %c24_69 = arith.constant 24 : index
    %115 = vector.load %arg5[%c0_67, %c0_68, %c24_69] : memref<1x8x32xbf16, #tpu.memory_space<vmem>>, vector<1x8x8xbf16>
    %116 = vector.shape_cast %115 : vector<1x8x8xbf16> to vector<8x8xbf16>
    %117 = vector.shape_cast %114 : vector<8x8xbf16> to vector<1x8x8xbf16>
    tpu.vector_store %arg5[%c0_67, %c0_68, %c24_69], %117 {strides = array<i32>} : memref<1x8x32xbf16, #tpu.memory_space<vmem>>, vector<1x8x8xbf16>,
    return
  }
  func.func @transform_0(%arg0: i32) -> (i32, i32, i32) {
    %c0_i32 = arith.constant 0 : i32
    %c0_i32_0 = arith.constant 0 : i32
    %c0_i32_1 = arith.constant 0 : i32
    return %arg0, %c0_i32, %c0_i32_0 : i32, i32, i32
  }
  func.func @transform_1(%arg0: i32) -> (i32, i32, i32) {
    %c0_i32 = arith.constant 0 : i32
    %c0_i32_0 = arith.constant 0 : i32
    %c0_i32_1 = arith.constant 0 : i32
    return %arg0, %c0_i32, %c0_i32_0 : i32, i32, i32
  }
  func.func @transform_2(%arg0: i32) -> (i32, i32, i32) {
    %c0_i32 = arith.constant 0 : i32
    %c0_i32_0 = arith.constant 0 : i32
    %c0_i32_1 = arith.constant 0 : i32
    return %arg0, %c0_i32, %c0_i32_0 : i32, i32, i32
  }
  func.func @transform_3(%arg0: i32) -> (i32, i32, i32) {
    %c0_i32 = arith.constant 0 : i32
    %c0_i32_0 = arith.constant 0 : i32
    %c0_i32_1 = arith.constant 0 : i32
    return %arg0, %c0_i32, %c0_i32_0 : i32, i32, i32
  }
  func.func @transform_4(%arg0: i32) -> (i32, i32, i32) {
    %c0_i32 = arith.constant 0 : i32
    %c0_i32_0 = arith.constant 0 : i32
    %c0_i32_1 = arith.constant 0 : i32
    return %arg0, %c0_i32, %c0_i32_0 : i32, i32, i32
  }
}

module attributes {stable_mosaic.version = 11 : i64} {
  func.func @_add_ln_kernel(%arg0: i32, %arg1: memref<16x32xbf16, #tpu.memory_space<vmem>>, %arg2: memref<16x32xbf16, #tpu.memory_space<vmem>>, %arg3: memref<1x32xf32, #tpu.memory_space<vmem>>, %arg4: memref<1x32xf32, #tpu.memory_space<vmem>>, %arg5: memref<16x32xbf16, #tpu.memory_space<vmem>>) attributes {dimension_semantics = [#tpu.dimension_semantics<parallel>], iteration_bounds = array<i64: 1>, scalar_prefetch = 0 : i64, scratch_operands = 0 : i64, tpu.core_type = #tpu.core_type<tc>, window_params = [{transform_indices = @transform_0, window_bounds = array<i64: 16, 32>}, {transform_indices = @transform_1, window_bounds = array<i64: 16, 32>}, {pipeline_mode = #tpu.pipeline_mode<synchronous>, transform_indices = @transform_2, window_bounds = array<i64: 1, 32>}, {pipeline_mode = #tpu.pipeline_mode<synchronous>, transform_indices = @transform_3, window_bounds = array<i64: 1, 32>}, {transform_indices = @transform_4, window_bounds = array<i64: 16, 32>}]} {
    %c0 = arith.constant 0 : index
    %c0_0 = arith.constant 0 : index
    %0 = vector.load %arg1[%c0, %c0_0] : memref<16x32xbf16, #tpu.memory_space<vmem>>, vector<16x32xbf16>
    %1 = arith.extf %0 : vector<16x32xbf16> to vector<16x32xf32>
    %c0_1 = arith.constant 0 : index
    %c0_2 = arith.constant 0 : index
    %2 = vector.load %arg2[%c0_1, %c0_2] : memref<16x32xbf16, #tpu.memory_space<vmem>>, vector<16x32xbf16>
    %3 = arith.extf %2 : vector<16x32xbf16> to vector<16x32xf32>
    %4 = arith.addf %1, %3 : vector<16x32xf32>
    %cst = arith.constant dense<0.000000e+00> : vector<16xf32>
    %5 = vector.multi_reduction <add>, %4, %cst [1] : vector<16x32xf32> to vector<16xf32>
    %6 = vector.shape_cast %5 : vector<16xf32> to vector<16x1xf32>
    %cst_3 = arith.constant 3.200000e+01 : f32
    %7 = vector.broadcast %cst_3 : f32 to vector<16x1xf32>
    %8 = arith.divf %6, %7 : vector<16x1xf32>
    %9 = vector.broadcast %8 : vector<16x1xf32> to vector<16x32xf32>
    %10 = arith.subf %4, %9 : vector<16x32xf32>
    %11 = arith.mulf %10, %10 : vector<16x32xf32>
    %cst_4 = arith.constant dense<0.000000e+00> : vector<16xf32>
    %12 = vector.multi_reduction <add>, %11, %cst_4 [1] : vector<16x32xf32> to vector<16xf32>
    %13 = vector.shape_cast %12 : vector<16xf32> to vector<16x1xf32>
    %cst_5 = arith.constant 3.200000e+01 : f32
    %14 = vector.broadcast %cst_5 : f32 to vector<16x1xf32>
    %15 = arith.divf %13, %14 : vector<16x1xf32>
    %16 = vector.broadcast %8 : vector<16x1xf32> to vector<16x32xf32>
    %17 = arith.subf %4, %16 : vector<16x32xf32>
    %cst_6 = arith.constant 9.99999996E-13 : f32
    %18 = vector.broadcast %cst_6 : f32 to vector<16x1xf32>
    %19 = arith.addf %15, %18 : vector<16x1xf32>
    %20 = math.rsqrt %19 : vector<16x1xf32>
    %21 = vector.broadcast %20 : vector<16x1xf32> to vector<16x32xf32>
    %22 = arith.mulf %17, %21 : vector<16x32xf32>
    %c0_7 = arith.constant 0 : index
    %c0_8 = arith.constant 0 : index
    %23 = vector.load %arg3[%c0_7, %c0_8] : memref<1x32xf32, #tpu.memory_space<vmem>>, vector<1x32xf32>
    %24 = vector.broadcast %23 : vector<1x32xf32> to vector<16x32xf32>
    %25 = arith.mulf %22, %24 : vector<16x32xf32>
    %c0_9 = arith.constant 0 : index
    %c0_10 = arith.constant 0 : index
    %26 = vector.load %arg4[%c0_9, %c0_10] : memref<1x32xf32, #tpu.memory_space<vmem>>, vector<1x32xf32>
    %27 = vector.broadcast %26 : vector<1x32xf32> to vector<16x32xf32>
    %28 = arith.addf %25, %27 : vector<16x32xf32>
    %29 = arith.truncf %28 : vector<16x32xf32> to vector<16x32xbf16>
    %c0_11 = arith.constant 0 : index
    %c0_12 = arith.constant 0 : index
    %30 = vector.load %arg5[%c0_11, %c0_12] : memref<16x32xbf16, #tpu.memory_space<vmem>>, vector<16x32xbf16>
    tpu.vector_store %arg5[%c0_11, %c0_12], %29 {strides = array<i32>} : memref<16x32xbf16, #tpu.memory_space<vmem>>, vector<16x32xbf16>,
    return
  }
  func.func @transform_0(%arg0: i32) -> (i32, i32) {
    %c0_i32 = arith.constant 0 : i32
    %c0_i32_0 = arith.constant 0 : i32
    return %arg0, %c0_i32 : i32, i32
  }
  func.func @transform_1(%arg0: i32) -> (i32, i32) {
    %c0_i32 = arith.constant 0 : i32
    %c0_i32_0 = arith.constant 0 : i32
    return %arg0, %c0_i32 : i32, i32
  }
  func.func @transform_2(%arg0: i32) -> (i32, i32) {
    %c0_i32 = arith.constant 0 : i32
    %c0_i32_0 = arith.constant 0 : i32
    %c0_i32_1 = arith.constant 0 : i32
    return %c0_i32, %c0_i32_0 : i32, i32
  }
  func.func @transform_3(%arg0: i32) -> (i32, i32) {
    %c0_i32 = arith.constant 0 : i32
    %c0_i32_0 = arith.constant 0 : i32
    %c0_i32_1 = arith.constant 0 : i32
    return %c0_i32, %c0_i32_0 : i32, i32
  }
  func.func @transform_4(%arg0: i32) -> (i32, i32) {
    %c0_i32 = arith.constant 0 : i32
    %c0_i32_0 = arith.constant 0 : i32
    return %arg0, %c0_i32 : i32, i32
  }
}

module attributes {stable_mosaic.version = 11 : i64} {
  func.func @_dense_kernel(%arg0: i32, %arg1: i32, %arg2: memref<16x32xbf16, #tpu.memory_space<vmem>>, %arg3: memref<32x64xbf16, #tpu.memory_space<vmem>>, %arg4: memref<1x64xf32, #tpu.memory_space<vmem>>, %arg5: memref<16x64xbf16, #tpu.memory_space<vmem>>) attributes {dimension_semantics = [#tpu.dimension_semantics<parallel>, #tpu.dimension_semantics<parallel>], iteration_bounds = array<i64: 1, 1>, scalar_prefetch = 0 : i64, scratch_operands = 0 : i64, tpu.core_type = #tpu.core_type<tc>, window_params = [{transform_indices = @transform_0, window_bounds = array<i64: 16, 32>}, {transform_indices = @transform_1, window_bounds = array<i64: 32, 64>}, {transform_indices = @transform_2, window_bounds = array<i64: 1, 64>}, {transform_indices = @transform_3, window_bounds = array<i64: 16, 64>}]} {
    %c0 = arith.constant 0 : index
    %c0_0 = arith.constant 0 : index
    %0 = vector.load %arg2[%c0, %c0_0] : memref<16x32xbf16, #tpu.memory_space<vmem>>, vector<16x32xbf16>
    %c0_1 = arith.constant 0 : index
    %c0_2 = arith.constant 0 : index
    %1 = vector.load %arg3[%c0_1, %c0_2] : memref<32x64xbf16, #tpu.memory_space<vmem>>, vector<32x64xbf16>
    %cst = arith.constant dense<0.000000e+00> : vector<16x64xf32>
    %2 = tpu.matmul %0, %1, %cst {dimension_numbers = #tpu.dot_dimension_numbers<[1], [0], [0], [1], [0, 0, 1, 1], [], []>} : vector<16x32xbf16>, vector<32x64xbf16>, vector<16x64xf32> -> vector<16x64xf32>
    %c0_3 = arith.constant 0 : index
    %c0_4 = arith.constant 0 : index
    %3 = vector.load %arg4[%c0_3, %c0_4] : memref<1x64xf32, #tpu.memory_space<vmem>>, vector<1x64xf32>
    %4 = vector.broadcast %3 : vector<1x64xf32> to vector<16x64xf32>
    %5 = arith.addf %2, %4 : vector<16x64xf32>
    %cst_5 = arith.constant 5.000000e-01 : f32
    %6 = vector.broadcast %cst_5 : f32 to vector<16x64xf32>
    %7 = arith.mulf %6, %5 : vector<16x64xf32>
    %cst_6 = arith.constant 4.471500e-02 : f32
    %8 = vector.broadcast %cst_6 : f32 to vector<16x64xf32>
    %9 = arith.mulf %8, %5 : vector<16x64xf32>
    %10 = arith.mulf %9, %5 : vector<16x64xf32>
    %11 = arith.mulf %10, %5 : vector<16x64xf32>
    %12 = arith.addf %5, %11 : vector<16x64xf32>
    %cst_7 = arith.constant 0.797884583 : f32
    %13 = vector.broadcast %cst_7 : f32 to vector<16x64xf32>
    %14 = arith.mulf %13, %12 : vector<16x64xf32>
    %15 = math.tanh %14 : vector<16x64xf32>
    %cst_8 = arith.constant 1.000000e+00 : f32
    %16 = vector.broadcast %cst_8 : f32 to vector<16x64xf32>
    %17 = arith.addf %16, %15 : vector<16x64xf32>
    %18 = arith.mulf %7, %17 : vector<16x64xf32>
    %19 = arith.truncf %18 : vector<16x64xf32> to vector<16x64xbf16>
    %c0_9 = arith.constant 0 : index
    %c0_10 = arith.constant 0 : index
    %20 = vector.load %arg5[%c0_9, %c0_10] : memref<16x64xbf16, #tpu.memory_space<vmem>>, vector<16x64xbf16>
    tpu.vector_store %arg5[%c0_9, %c0_10], %19 {strides = array<i32>} : memref<16x64xbf16, #tpu.memory_space<vmem>>, vector<16x64xbf16>,
    return
  }
  func.func @transform_0(%arg0: i32, %arg1: i32) -> (i32, i32) {
    %c0_i32 = arith.constant 0 : i32
    %c0_i32_0 = arith.constant 0 : i32
    return %arg0, %c0_i32 : i32, i32
  }
  func.func @transform_1(%arg0: i32, %arg1: i32) -> (i32, i32) {
    %c0_i32 = arith.constant 0 : i32
    %c0_i32_0 = arith.constant 0 : i32
    return %c0_i32, %arg1 : i32, i32
  }
  func.func @transform_2(%arg0: i32, %arg1: i32) -> (i32, i32) {
    %c0_i32 = arith.constant 0 : i32
    %c0_i32_0 = arith.constant 0 : i32
    return %c0_i32, %arg1 : i32, i32
  }
  func.func @transform_3(%arg0: i32, %arg1: i32) -> (i32, i32) {
    %c0_i32 = arith.constant 0 : i32
    return %arg0, %arg1 : i32, i32
  }
}

module attributes {stable_mosaic.version = 11 : i64} {
  func.func @_attention_kernel(%arg0: i32, %arg1: memref<1x8x32xbf16, #tpu.memory_space<vmem>>, %arg2: memref<1x8x32xbf16, #tpu.memory_space<vmem>>, %arg3: memref<1x8x32xbf16, #tpu.memory_space<vmem>>, %arg4: memref<1x1x8xf32, #tpu.memory_space<vmem>>, %arg5: memref<1x8x32xbf16, #tpu.memory_space<vmem>>) attributes {dimension_semantics = [#tpu.dimension_semantics<parallel>], iteration_bounds = array<i64: 2>, scalar_prefetch = 0 : i64, scratch_operands = 0 : i64, tpu.core_type = #tpu.core_type<tc>, window_params = [{transform_indices = @transform_0, window_bounds = array<i64: 1, 8, 32>}, {transform_indices = @transform_1, window_bounds = array<i64: 1, 8, 32>}, {transform_indices = @transform_2, window_bounds = array<i64: 1, 8, 32>}, {transform_indices = @transform_3, window_bounds = array<i64: 1, 1, 8>}, {transform_indices = @transform_4, window_bounds = array<i64: 1, 8, 32>}]} {
    %c0 = arith.constant 0 : index
    %c0_0 = arith.constant 0 : index
    %c0_1 = arith.constant 0 : index
    %0 = vector.load %arg4[%c0, %c0_0, %c0_1] : memref<1x1x8xf32, #tpu.memory_space<vmem>>, vector<1x1x8xf32>
    %1 = vector.shape_cast %0 : vector<1x1x8xf32> to vector<1x8xf32>
    %cst = arith.constant 1.000000e+00 : f32
    %2 = vector.broadcast %cst : f32 to vector<1x8xf32>
    %3 = arith.subf %2, %1 : vector<1x8xf32>
    %cst_2 = arith.constant -1.000000e+09 : f32
    %4 = vector.broadcast %cst_2 : f32 to vector<1x8xf32>
    %5 = arith.mulf %3, %4 : vector<1x8xf32>
    %c0_3 = arith.constant 0 : index
    %c0_4 = arith.constant 0 : index
    %c0_5 = arith.constant 0 : index
    %6 = vector.load %arg1[%c0_3, %c0_4, %c0_5] : memref<1x8x32xbf16, #tpu.memory_space<vmem>>, vector<1x8x8xbf16>
    %7 = vector.shape_cast %6 : vector<1x8x8xbf16> to vector<8x8xbf16>
    %c0_6 = arith.constant 0 : index
    %c0_7 = arith.constant 0 : index
    %c0_8 = arith.constant 0 : index
    %8 = vector.load %arg2[%c0_6, %c0_7, %c0_8] : memref<1x8x32xbf16, #tpu.memory_space<vmem>>, vector<1x8x8xbf16>
    %9 = vector.shape_cast %8 : vector<1x8x8xbf16> to vector<8x8xbf16>
    %c0_9 = arith.constant 0 : index
    %c0_10 = arith.constant 0 : index
    %c0_11 = arith.constant 0 : index
    %10 = vector.load %arg3[%c0_9, %c0_10, %c0_11] : memref<1x8x32xbf16, #tpu.memory_space<vmem>>, vector<1x8x8xbf16>
    %11 = vector.shape_cast %10 : vector<1x8x8xbf16> to vector<8x8xbf16>
    "tpu.trace_start"() <{level = 10 : i32, message = "qd,kd->qk"}> : () -> ()
    %cst_12 = arith.constant dense<0.000000e+00> : vector<8x8xf32>
    %12 = tpu.matmul %7, %9, %cst_12 {dimension_numbers = #tpu.dot_dimension_numbers<[1], [1], [0], [0], [0, 0, 1, 0], [], []>} : vector<8x8xbf16>, vector<8x8xbf16>, vector<8x8xf32> -> vector<8x8xf32>
    "tpu.trace_stop"() : () -> ()
    %cst_13 = arith.constant 0.353553385 : f32
    %13 = vector.broadcast %cst_13 : f32 to vector<8x8xf32>
    %14 = arith.mulf %12, %13 : vector<8x8xf32>
    %15 = vector.broadcast %5 : vector<1x8xf32> to vector<8x8xf32>
    %16 = arith.addf %14, %15 : vector<8x8xf32>
    %cst_14 = arith.constant dense<0xFF800000> : vector<8xf32>
    %17 = vector.multi_reduction <maximumf>, %16, %cst_14 [1] : vector<8x8xf32> to vector<8xf32>
    %18 = vector.shape_cast %17 : vector<8xf32> to vector<8x1xf32>
    %19 = vector.broadcast %18 : vector<8x1xf32> to vector<8x8xf32>
    %20 = arith.subf %16, %19 : vector<8x8xf32>
    %21 = math.exp %20 : vector<8x8xf32>
    %cst_15 = arith.constant dense<0.000000e+00> : vector<8xf32>
    %22 = vector.multi_reduction <add>, %21, %cst_15 [1] : vector<8x8xf32> to vector<8xf32>
    %23 = vector.shape_cast %22 : vector<8xf32> to vector<8x1xf32>
    %24 = tpu.reciprocal %23 {approx = true} : vector<8x1xf32> -> vector<8x1xf32>
    %25 = vector.broadcast %24 : vector<8x1xf32> to vector<8x8xf32>
    %26 = arith.mulf %21, %25 : vector<8x8xf32>
    %27 = arith.truncf %26 : vector<8x8xf32> to vector<8x8xbf16>
    "tpu.trace_start"() <{level = 10 : i32, message = "qk,kd->qd"}> : () -> ()
    %cst_16 = arith.constant dense<0.000000e+00> : vector<8x8xf32>
    %28 = tpu.matmul %27, %11, %cst_16 {dimension_numbers = #tpu.dot_dimension_numbers<[1], [0], [0], [1], [0, 0, 1, 1], [], []>} : vector<8x8xbf16>, vector<8x8xbf16>, vector<8x8xf32> -> vector<8x8xf32>
    "tpu.trace_stop"() : () -> ()
    %29 = arith.truncf %28 : vector<8x8xf32> to vector<8x8xbf16>
    %c0_17 = arith.constant 0 : index
    %c0_18 = arith.constant 0 : index
    %c0_19 = arith.constant 0 : index
    %30 = vector.load %arg5[%c0_17, %c0_18, %c0_19] : memref<1x8x32xbf16, #tpu.memory_space<vmem>>, vector<1x8x8xbf16>
    %31 = vector.shape_cast %30 : vector<1x8x8xbf16> to vector<8x8xbf16>
    %32 = vector.shape_cast %29 : vector<8x8xbf16> to vector<1x8x8xbf16>
    tpu.vector_store %arg5[%c0_17, %c0_18, %c0_19], %32 {strides = array<i32>} : memref<1x8x32xbf16, #tpu.memory_space<vmem>>, vector<1x8x8xbf16>,
    %c0_20 = arith.constant 0 : index
    %c0_21 = arith.constant 0 : index
    %c8 = arith.constant 8 : index
    %33 = vector.load %arg1[%c0_20, %c0_21, %c8] : memref<1x8x32xbf16, #tpu.memory_space<vmem>>, vector<1x8x8xbf16>
    %34 = vector.shape_cast %33 : vector<1x8x8xbf16> to vector<8x8xbf16>
    %c0_22 = arith.constant 0 : index
    %c0_23 = arith.constant 0 : index
    %c8_24 = arith.constant 8 : index
    %35 = vector.load %arg2[%c0_22, %c0_23, %c8_24] : memref<1x8x32xbf16, #tpu.memory_space<vmem>>, vector<1x8x8xbf16>
    %36 = vector.shape_cast %35 : vector<1x8x8xbf16> to vector<8x8xbf16>
    %c0_25 = arith.constant 0 : index
    %c0_26 = arith.constant 0 : index
    %c8_27 = arith.constant 8 : index
    %37 = vector.load %arg3[%c0_25, %c0_26, %c8_27] : memref<1x8x32xbf16, #tpu.memory_space<vmem>>, vector<1x8x8xbf16>
    %38 = vector.shape_cast %37 : vector<1x8x8xbf16> to vector<8x8xbf16>
    "tpu.trace_start"() <{level = 10 : i32, message = "qd,kd->qk"}> : () -> ()
    %cst_28 = arith.constant dense<0.000000e+00> : vector<8x8xf32>
    %39 = tpu.matmul %34, %36, %cst_28 {dimension_numbers = #tpu.dot_dimension_numbers<[1], [1], [0], [0], [0, 0, 1, 0], [], []>} : vector<8x8xbf16>, vector<8x8xbf16>, vector<8x8xf32> -> vector<8x8xf32>
    "tpu.trace_stop"() : () -> ()
    %cst_29 = arith.constant 0.353553385 : f32
    %40 = vector.broadcast %cst_29 : f32 to vector<8x8xf32>
    %41 = arith.mulf %39, %40 : vector<8x8xf32>
    %42 = vector.broadcast %5 : vector<1x8xf32> to vector<8x8xf32>
    %43 = arith.addf %41, %42 : vector<8x8xf32>
    %cst_30 = arith.constant dense<0xFF800000> : vector<8xf32>
    %44 = vector.multi_reduction <maximumf>, %43, %cst_30 [1] : vector<8x8xf32> to vector<8xf32>
    %45 = vector.shape_cast %44 : vector<8xf32> to vector<8x1xf32>
    %46 = vector.broadcast %45 : vector<8x1xf32> to vector<8x8xf32>
    %47 = arith.subf %43, %46 : vector<8x8xf32>
    %48 = math.exp %47 : vector<8x8xf32>
    %cst_31 = arith.constant dense<0.000000e+00> : vector<8xf32>
    %49 = vector.multi_reduction <add>, %48, %cst_31 [1] : vector<8x8xf32> to vector<8xf32>
    %50 = vector.shape_cast %49 : vector<8xf32> to vector<8x1xf32>
    %51 = tpu.reciprocal %50 {approx = true} : vector<8x1xf32> -> vector<8x1xf32>
    %52 = vector.broadcast %51 : vector<8x1xf32> to vector<8x8xf32>
    %53 = arith.mulf %48, %52 : vector<8x8xf32>
    %54 = arith.truncf %53 : vector<8x8xf32> to vector<8x8xbf16>
    "tpu.trace_start"() <{level = 10 : i32, message = "qk,kd->qd"}> : () -> ()
    %cst_32 = arith.constant dense<0.000000e+00> : vector<8x8xf32>
    %55 = tpu.matmul %54, %38, %cst_32 {dimension_numbers = #tpu.dot_dimension_numbers<[1], [0], [0], [1], [0, 0, 1, 1], [], []>} : vector<8x8xbf16>, vector<8x8xbf16>, vector<8x8xf32> -> vector<8x8xf32>
    "tpu.trace_stop"() : () -> ()
    %56 = arith.truncf %55 : vector<8x8xf32> to vector<8x8xbf16>
    %c0_33 = arith.constant 0 : index
    %c0_34 = arith.constant 0 : index
    %c8_35 = arith.constant 8 : index
    %57 = vector.load %arg5[%c0_33, %c0_34, %c8_35] : memref<1x8x32xbf16, #tpu.memory_space<vmem>>, vector<1x8x8xbf16>
    %58 = vector.shape_cast %57 : vector<1x8x8xbf16> to vector<8x8xbf16>
    %59 = vector.shape_cast %56 : vector<8x8xbf16> to vector<1x8x8xbf16>
    tpu.vector_store %arg5[%c0_33, %c0_34, %c8_35], %59 {strides = array<i32>} : memref<1x8x32xbf16, #tpu.memory_space<vmem>>, vector<1x8x8xbf16>,
    %c0_36 = arith.constant 0 : index
    %c0_37 = arith.constant 0 : index
    %c16 = arith.constant 16 : index
    %60 = vector.load %arg1[%c0_36, %c0_37, %c16] : memref<1x8x32xbf16, #tpu.memory_space<vmem>>, vector<1x8x8xbf16>
    %61 = vector.shape_cast %60 : vector<1x8x8xbf16> to vector<8x8xbf16>
    %c0_38 = arith.constant 0 : index
    %c0_39 = arith.constant 0 : index
    %c16_40 = arith.constant 16 : index
    %62 = vector.load %arg2[%c0_38, %c0_39, %c16_40] : memref<1x8x32xbf16, #tpu.memory_space<vmem>>, vector<1x8x8xbf16>
    %63 = vector.shape_cast %62 : vector<1x8x8xbf16> to vector<8x8xbf16>
    %c0_41 = arith.constant 0 : index
    %c0_42 = arith.constant 0 : index
    %c16_43 = arith.constant 16 : index
    %64 = vector.load %arg3[%c0_41, %c0_42, %c16_43] : memref<1x8x32xbf16, #tpu.memory_space<vmem>>, vector<1x8x8xbf16>
    %65 = vector.shape_cast %64 : vector<1x8x8xbf16> to vector<8x8xbf16>
    "tpu.trace_start"() <{level = 10 : i32, message = "qd,kd->qk"}> : () -> ()
    %cst_44 = arith.constant dense<0.000000e+00> : vector<8x8xf32>
    %66 = tpu.matmul %61, %63, %cst_44 {dimension_numbers = #tpu.dot_dimension_numbers<[1], [1], [0], [0], [0, 0, 1, 0], [], []>} : vector<8x8xbf16>, vector<8x8xbf16>, vector<8x8xf32> -> vector<8x8xf32>
    "tpu.trace_stop"() : () -> ()
    %cst_45 = arith.constant 0.353553385 : f32
    %67 = vector.broadcast %cst_45 : f32 to vector<8x8xf32>
    %68 = arith.mulf %66, %67 : vector<8x8xf32>
    %69 = vector.broadcast %5 : vector<1x8xf32> to vector<8x8xf32>
    %70 = arith.addf %68, %69 : vector<8x8xf32>
    %cst_46 = arith.constant dense<0xFF800000> : vector<8xf32>
    %71 = vector.multi_reduction <maximumf>, %70, %cst_46 [1] : vector<8x8xf32> to vector<8xf32>
    %72 = vector.shape_cast %71 : vector<8xf32> to vector<8x1xf32>
    %73 = vector.broadcast %72 : vector<8x1xf32> to vector<8x8xf32>
    %74 = arith.subf %70, %73 : vector<8x8xf32>
    %75 = math.exp %74 : vector<8x8xf32>
    %cst_47 = arith.constant dense<0.000000e+00> : vector<8xf32>
    %76 = vector.multi_reduction <add>, %75, %cst_47 [1] : vector<8x8xf32> to vector<8xf32>
    %77 = vector.shape_cast %76 : vector<8xf32> to vector<8x1xf32>
    %78 = tpu.reciprocal %77 {approx = true} : vector<8x1xf32> -> vector<8x1xf32>
    %79 = vector.broadcast %78 : vector<8x1xf32> to vector<8x8xf32>
    %80 = arith.mulf %75, %79 : vector<8x8xf32>
    %81 = arith.truncf %80 : vector<8x8xf32> to vector<8x8xbf16>
    "tpu.trace_start"() <{level = 10 : i32, message = "qk,kd->qd"}> : () -> ()
    %cst_48 = arith.constant dense<0.000000e+00> : vector<8x8xf32>
    %82 = tpu.matmul %81, %65, %cst_48 {dimension_numbers = #tpu.dot_dimension_numbers<[1], [0], [0], [1], [0, 0, 1, 1], [], []>} : vector<8x8xbf16>, vector<8x8xbf16>, vector<8x8xf32> -> vector<8x8xf32>
    "tpu.trace_stop"() : () -> ()
    %83 = arith.truncf %82 : vector<8x8xf32> to vector<8x8xbf16>
    %c0_49 = arith.constant 0 : index
    %c0_50 = arith.constant 0 : index
    %c16_51 = arith.constant 16 : index
    %84 = vector.load %arg5[%c0_49, %c0_50, %c16_51] : memref<1x8x32xbf16, #tpu.memory_space<vmem>>, vector<1x8x8xbf16>
    %85 = vector.shape_cast %84 : vector<1x8x8xbf16> to vector<8x8xbf16>
    %86 = vector.shape_cast %83 : vector<8x8xbf16> to vector<1x8x8xbf16>
    tpu.vector_store %arg5[%c0_49, %c0_50, %c16_51], %86 {strides = array<i32>} : memref<1x8x32xbf16, #tpu.memory_space<vmem>>, vector<1x8x8xbf16>,
    %c0_52 = arith.constant 0 : index
    %c0_53 = arith.constant 0 : index
    %c24 = arith.constant 24 : index
    %87 = vector.load %arg1[%c0_52, %c0_53, %c24] : memref<1x8x32xbf16, #tpu.memory_space<vmem>>, vector<1x8x8xbf16>
    %88 = vector.shape_cast %87 : vector<1x8x8xbf16> to vector<8x8xbf16>
    %c0_54 = arith.constant 0 : index
    %c0_55 = arith.constant 0 : index
    %c24_56 = arith.constant 24 : index
    %89 = vector.load %arg2[%c0_54, %c0_55, %c24_56] : memref<1x8x32xbf16, #tpu.memory_space<vmem>>, vector<1x8x8xbf16>
    %90 = vector.shape_cast %89 : vector<1x8x8xbf16> to vector<8x8xbf16>
    %c0_57 = arith.constant 0 : index
    %c0_58 = arith.constant 0 : index
    %c24_59 = arith.constant 24 : index
    %91 = vector.load %arg3[%c0_57, %c0_58, %c24_59] : memref<1x8x32xbf16, #tpu.memory_space<vmem>>, vector<1x8x8xbf16>
    %92 = vector.shape_cast %91 : vector<1x8x8xbf16> to vector<8x8xbf16>
    "tpu.trace_start"() <{level = 10 : i32, message = "qd,kd->qk"}> : () -> ()
    %cst_60 = arith.constant dense<0.000000e+00> : vector<8x8xf32>
    %93 = tpu.matmul %88, %90, %cst_60 {dimension_numbers = #tpu.dot_dimension_numbers<[1], [1], [0], [0], [0, 0, 1, 0], [], []>} : vector<8x8xbf16>, vector<8x8xbf16>, vector<8x8xf32> -> vector<8x8xf32>
    "tpu.trace_stop"() : () -> ()
    %cst_61 = arith.constant 0.353553385 : f32
    %94 = vector.broadcast %cst_61 : f32 to vector<8x8xf32>
    %95 = arith.mulf %93, %94 : vector<8x8xf32>
    %96 = vector.broadcast %5 : vector<1x8xf32> to vector<8x8xf32>
    %97 = arith.addf %95, %96 : vector<8x8xf32>
    %cst_62 = arith.constant dense<0xFF800000> : vector<8xf32>
    %98 = vector.multi_reduction <maximumf>, %97, %cst_62 [1] : vector<8x8xf32> to vector<8xf32>
    %99 = vector.shape_cast %98 : vector<8xf32> to vector<8x1xf32>
    %100 = vector.broadcast %99 : vector<8x1xf32> to vector<8x8xf32>
    %101 = arith.subf %97, %100 : vector<8x8xf32>
    %102 = math.exp %101 : vector<8x8xf32>
    %cst_63 = arith.constant dense<0.000000e+00> : vector<8xf32>
    %103 = vector.multi_reduction <add>, %102, %cst_63 [1] : vector<8x8xf32> to vector<8xf32>
    %104 = vector.shape_cast %103 : vector<8xf32> to vector<8x1xf32>
    %105 = tpu.reciprocal %104 {approx = true} : vector<8x1xf32> -> vector<8x1xf32>
    %106 = vector.broadcast %105 : vector<8x1xf32> to vector<8x8xf32>
    %107 = arith.mulf %102, %106 : vector<8x8xf32>
    %108 = arith.truncf %107 : vector<8x8xf32> to vector<8x8xbf16>
    "tpu.trace_start"() <{level = 10 : i32, message = "qk,kd->qd"}> : () -> ()
    %cst_64 = arith.constant dense<0.000000e+00> : vector<8x8xf32>
    %109 = tpu.matmul %108, %92, %cst_64 {dimension_numbers = #tpu.dot_dimension_numbers<[1], [0], [0], [1], [0, 0, 1, 1], [], []>} : vector<8x8xbf16>, vector<8x8xbf16>, vector<8x8xf32> -> vector<8x8xf32>
    "tpu.trace_stop"() : () -> ()
    %110 = arith.truncf %109 : vector<8x8xf32> to vector<8x8xbf16>
    %c0_65 = arith.constant 0 : index
    %c0_66 = arith.constant 0 : index
    %c24_67 = arith.constant 24 : index
    %111 = vector.load %arg5[%c0_65, %c0_66, %c24_67] : memref<1x8x32xbf16, #tpu.memory_space<vmem>>, vector<1x8x8xbf16>
    %112 = vector.shape_cast %111 : vector<1x8x8xbf16> to vector<8x8xbf16>
    %113 = vector.shape_cast %110 : vector<8x8xbf16> to vector<1x8x8xbf16>
    tpu.vector_store %arg5[%c0_65, %c0_66, %c24_67], %113 {strides = array<i32>} : memref<1x8x32xbf16, #tpu.memory_space<vmem>>, vector<1x8x8xbf16>,
    return
  }
  func.func @transform_0(%arg0: i32) -> (i32, i32, i32) {
    %c0_i32 = arith.constant 0 : i32
    %c0_i32_0 = arith.constant 0 : i32
    %c0_i32_1 = arith.constant 0 : i32
    return %arg0, %c0_i32, %c0_i32_0 : i32, i32, i32
  }
  func.func @transform_1(%arg0: i32) -> (i32, i32, i32) {
    %c0_i32 = arith.constant 0 : i32
    %c0_i32_0 = arith.constant 0 : i32
    %c0_i32_1 = arith.constant 0 : i32
    return %arg0, %c0_i32, %c0_i32_0 : i32, i32, i32
  }
  func.func @transform_2(%arg0: i32) -> (i32, i32, i32) {
    %c0_i32 = arith.constant 0 : i32
    %c0_i32_0 = arith.constant 0 : i32
    %c0_i32_1 = arith.constant 0 : i32
    return %arg0, %c0_i32, %c0_i32_0 : i32, i32, i32
  }
  func.func @transform_3(%arg0: i32) -> (i32, i32, i32) {
    %c0_i32 = arith.constant 0 : i32
    %c0_i32_0 = arith.constant 0 : i32
    %c0_i32_1 = arith.constant 0 : i32
    return %arg0, %c0_i32, %c0_i32_0 : i32, i32, i32
  }
  func.func @transform_4(%arg0: i32) -> (i32, i32, i32) {
    %c0_i32 = arith.constant 0 : i32
    %c0_i32_0 = arith.constant 0 : i32
    %c0_i32_1 = arith.constant 0 : i32
    return %arg0, %c0_i32, %c0_i32_0 : i32, i32, i32
  }
}

module attributes {stable_mosaic.version = 11 : i64} {
  func.func @_dense_kernel(%arg0: i32, %arg1: i32, %arg2: memref<16x64xbf16, #tpu.memory_space<vmem>>, %arg3: memref<64x32xbf16, #tpu.memory_space<vmem>>, %arg4: memref<1x32xf32, #tpu.memory_space<vmem>>, %arg5: memref<16x32xbf16, #tpu.memory_space<vmem>>) attributes {dimension_semantics = [#tpu.dimension_semantics<parallel>, #tpu.dimension_semantics<parallel>], iteration_bounds = array<i64: 1, 1>, scalar_prefetch = 0 : i64, scratch_operands = 0 : i64, tpu.core_type = #tpu.core_type<tc>, window_params = [{transform_indices = @transform_0, window_bounds = array<i64: 16, 64>}, {transform_indices = @transform_1, window_bounds = array<i64: 64, 32>}, {transform_indices = @transform_2, window_bounds = array<i64: 1, 32>}, {transform_indices = @transform_3, window_bounds = array<i64: 16, 32>}]} {
    %c0 = arith.constant 0 : index
    %c0_0 = arith.constant 0 : index
    %0 = vector.load %arg2[%c0, %c0_0] : memref<16x64xbf16, #tpu.memory_space<vmem>>, vector<16x64xbf16>
    %c0_1 = arith.constant 0 : index
    %c0_2 = arith.constant 0 : index
    %1 = vector.load %arg3[%c0_1, %c0_2] : memref<64x32xbf16, #tpu.memory_space<vmem>>, vector<64x32xbf16>
    %cst = arith.constant dense<0.000000e+00> : vector<16x32xf32>
    %2 = tpu.matmul %0, %1, %cst {dimension_numbers = #tpu.dot_dimension_numbers<[1], [0], [0], [1], [0, 0, 1, 1], [], []>} : vector<16x64xbf16>, vector<64x32xbf16>, vector<16x32xf32> -> vector<16x32xf32>
    %c0_3 = arith.constant 0 : index
    %c0_4 = arith.constant 0 : index
    %3 = vector.load %arg4[%c0_3, %c0_4] : memref<1x32xf32, #tpu.memory_space<vmem>>, vector<1x32xf32>
    %4 = vector.broadcast %3 : vector<1x32xf32> to vector<16x32xf32>
    %5 = arith.addf %2, %4 : vector<16x32xf32>
    %6 = arith.truncf %5 : vector<16x32xf32> to vector<16x32xbf16>
    %c0_5 = arith.constant 0 : index
    %c0_6 = arith.constant 0 : index
    %7 = vector.load %arg5[%c0_5, %c0_6] : memref<16x32xbf16, #tpu.memory_space<vmem>>, vector<16x32xbf16>
    tpu.vector_store %arg5[%c0_5, %c0_6], %6 {strides = array<i32>} : memref<16x32xbf16, #tpu.memory_space<vmem>>, vector<16x32xbf16>,
    return
  }
  func.func @transform_0(%arg0: i32, %arg1: i32) -> (i32, i32) {
    %c0_i32 = arith.constant 0 : i32
    %c0_i32_0 = arith.constant 0 : i32
    return %arg0, %c0_i32 : i32, i32
  }
  func.func @transform_1(%arg0: i32, %arg1: i32) -> (i32, i32) {
    %c0_i32 = arith.constant 0 : i32
    %c0_i32_0 = arith.constant 0 : i32
    return %c0_i32, %arg1 : i32, i32
  }
  func.func @transform_2(%arg0: i32, %arg1: i32) -> (i32, i32) {
    %c0_i32 = arith.constant 0 : i32
    %c0_i32_0 = arith.constant 0 : i32
    return %c0_i32, %arg1 : i32, i32
  }
  func.func @transform_3(%arg0: i32, %arg1: i32) -> (i32, i32) {
    %c0_i32 = arith.constant 0 : i32
    return %arg0, %arg1 : i32, i32
  }
}

module attributes {stable_mosaic.version = 11 : i64} {
  func.func @_dense_kernel(%arg0: i32, %arg1: i32, %arg2: memref<16x32xbf16, #tpu.memory_space<vmem>>, %arg3: memref<32x64xbf16, #tpu.memory_space<vmem>>, %arg4: memref<1x64xf32, #tpu.memory_space<vmem>>, %arg5: memref<16x64xbf16, #tpu.memory_space<vmem>>) attributes {dimension_semantics = [#tpu.dimension_semantics<parallel>, #tpu.dimension_semantics<parallel>], iteration_bounds = array<i64: 1, 1>, scalar_prefetch = 0 : i64, scratch_operands = 0 : i64, tpu.core_type = #tpu.core_type<tc>, window_params = [{transform_indices = @transform_0, window_bounds = array<i64: 16, 32>}, {transform_indices = @transform_1, window_bounds = array<i64: 32, 64>}, {transform_indices = @transform_2, window_bounds = array<i64: 1, 64>}, {transform_indices = @transform_3, window_bounds = array<i64: 16, 64>}]} {
    %c0 = arith.constant 0 : index
    %c0_0 = arith.constant 0 : index
    %0 = vector.load %arg2[%c0, %c0_0] : memref<16x32xbf16, #tpu.memory_space<vmem>>, vector<16x32xbf16>
    %c0_1 = arith.constant 0 : index
    %c0_2 = arith.constant 0 : index
    %1 = vector.load %arg3[%c0_1, %c0_2] : memref<32x64xbf16, #tpu.memory_space<vmem>>, vector<32x64xbf16>
    %cst = arith.constant dense<0.000000e+00> : vector<16x64xf32>
    %2 = tpu.matmul %0, %1, %cst {dimension_numbers = #tpu.dot_dimension_numbers<[1], [0], [0], [1], [0, 0, 1, 1], [], []>} : vector<16x32xbf16>, vector<32x64xbf16>, vector<16x64xf32> -> vector<16x64xf32>
    %c0_3 = arith.constant 0 : index
    %c0_4 = arith.constant 0 : index
    %3 = vector.load %arg4[%c0_3, %c0_4] : memref<1x64xf32, #tpu.memory_space<vmem>>, vector<1x64xf32>
    %4 = vector.broadcast %3 : vector<1x64xf32> to vector<16x64xf32>
    %5 = arith.addf %2, %4 : vector<16x64xf32>
    %6 = arith.truncf %5 : vector<16x64xf32> to vector<16x64xbf16>
    %c0_5 = arith.constant 0 : index
    %c0_6 = arith.constant 0 : index
    %7 = vector.load %arg5[%c0_5, %c0_6] : memref<16x64xbf16, #tpu.memory_space<vmem>>, vector<16x64xbf16>
    tpu.vector_store %arg5[%c0_5, %c0_6], %6 {strides = array<i32>} : memref<16x64xbf16, #tpu.memory_space<vmem>>, vector<16x64xbf16>,
    return
  }
  func.func @transform_0(%arg0: i32, %arg1: i32) -> (i32, i32) {
    %c0_i32 = arith.constant 0 : i32
    %c0_i32_0 = arith.constant 0 : i32
    return %arg0, %c0_i32 : i32, i32
  }
  func.func @transform_1(%arg0: i32, %arg1: i32) -> (i32, i32) {
    %c0_i32 = arith.constant 0 : i32
    %c0_i32_0 = arith.constant 0 : i32
    return %c0_i32, %arg1 : i32, i32
  }
  func.func @transform_2(%arg0: i32, %arg1: i32) -> (i32, i32) {
    %c0_i32 = arith.constant 0 : i32
    %c0_i32_0 = arith.constant 0 : i32
    return %c0_i32, %arg1 : i32, i32
  }
  func.func @transform_3(%arg0: i32, %arg1: i32) -> (i32, i32) {
    %c0_i32 = arith.constant 0 : i32
    return %arg0, %arg1 : i32, i32
  }
}

module attributes {stable_mosaic.version = 11 : i64} {
  func.func @_dense_kernel(%arg0: i32, %arg1: i32, %arg2: memref<16x32xbf16, #tpu.memory_space<vmem>>, %arg3: memref<32x128xbf16, #tpu.memory_space<vmem>>, %arg4: memref<1x128xf32, #tpu.memory_space<vmem>>, %arg5: memref<16x128xf32, #tpu.memory_space<vmem>>) attributes {dimension_semantics = [#tpu.dimension_semantics<parallel>, #tpu.dimension_semantics<parallel>], iteration_bounds = array<i64: 1, 1>, scalar_prefetch = 0 : i64, scratch_operands = 0 : i64, tpu.core_type = #tpu.core_type<tc>, window_params = [{transform_indices = @transform_0, window_bounds = array<i64: 16, 32>}, {transform_indices = @transform_1, window_bounds = array<i64: 32, 128>}, {transform_indices = @transform_2, window_bounds = array<i64: 1, 128>}, {transform_indices = @transform_3, window_bounds = array<i64: 16, 128>}]} {
    %c0 = arith.constant 0 : index
    %c0_0 = arith.constant 0 : index
    %0 = vector.load %arg2[%c0, %c0_0] : memref<16x32xbf16, #tpu.memory_space<vmem>>, vector<16x32xbf16>
    %c0_1 = arith.constant 0 : index
    %c0_2 = arith.constant 0 : index
    %1 = vector.load %arg3[%c0_1, %c0_2] : memref<32x128xbf16, #tpu.memory_space<vmem>>, vector<32x128xbf16>
    %cst = arith.constant dense<0.000000e+00> : vector<16x128xf32>
    %2 = tpu.matmul %0, %1, %cst {dimension_numbers = #tpu.dot_dimension_numbers<[1], [0], [0], [1], [0, 0, 1, 1], [], []>} : vector<16x32xbf16>, vector<32x128xbf16>, vector<16x128xf32> -> vector<16x128xf32>
    %c0_3 = arith.constant 0 : index
    %c0_4 = arith.constant 0 : index
    %3 = vector.load %arg4[%c0_3, %c0_4] : memref<1x128xf32, #tpu.memory_space<vmem>>, vector<1x128xf32>
    %4 = vector.broadcast %3 : vector<1x128xf32> to vector<16x128xf32>
    %5 = arith.addf %2, %4 : vector<16x128xf32>
    %c0_5 = arith.constant 0 : index
    %c0_6 = arith.constant 0 : index
    %6 = vector.load %arg5[%c0_5, %c0_6] : memref<16x128xf32, #tpu.memory_space<vmem>>, vector<16x128xf32>
    tpu.vector_store %arg5[%c0_5, %c0_6], %5 {strides = array<i32>} : memref<16x128xf32, #tpu.memory_space<vmem>>, vector<16x128xf32>,
    return
  }
  func.func @transform_0(%arg0: i32, %arg1: i32) -> (i32, i32) {
    %c0_i32 = arith.constant 0 : i32
    %c0_i32_0 = arith.constant 0 : i32
    return %arg0, %c0_i32 : i32, i32
  }
  func.func @transform_1(%arg0: i32, %arg1: i32) -> (i32, i32) {
    %c0_i32 = arith.constant 0 : i32
    %c0_i32_0 = arith.constant 0 : i32
    return %c0_i32, %arg1 : i32, i32
  }
  func.func @transform_2(%arg0: i32, %arg1: i32) -> (i32, i32) {
    %c0_i32 = arith.constant 0 : i32
    %c0_i32_0 = arith.constant 0 : i32
    return %c0_i32, %arg1 : i32, i32
  }
  func.func @transform_3(%arg0: i32, %arg1: i32) -> (i32, i32) {
    %c0_i32 = arith.constant 0 : i32
    return %arg0, %arg1 : i32, i32
  }
}

</mosaic_0001>

<llo_original>
// kernel: mtqe_forward.59
$region0: #{mtqe_forward.59}
  #allocation0 [shape = 'u32[]', space=smem, size = 0x4, offset = 0x4, fixed_abs, tag = 'smem constant byte address 0x4 - core index']
  #allocation1 [shape = 'u32[72,128]{1,0:T(1,128)}', space=vmem, size = 0x9000, scoped, tag = 'internal scratch']
  %s0 = inlined_call_operand.vmem [shape: bf16[16,32], index: 0, kind: input, shape index: {}]
  %s1 = inlined_call_operand.vmem [shape: bf16[32,32], index: 1, kind: input, shape index: {}]
  %s2 = inlined_call_operand.vmem [shape: f32[1,32], index: 2, kind: input, shape index: {}]
  %s3 = inlined_call_operand.vmem [shape: bf16[16,32], index: 3, kind: output, shape index: {}]
  %s4 = sld [smem:[#allocation0]]
  $region22: #{mtqe_forward.59} parent=0
    _
  %s6 = ssub.s32 1, %s4
  %s7 = scalar_select 0, %s6, %s4
  // Predicated region
  $region2: #{mtqe_forward.59} parent=0 // pred_check
    _
  $region3: #{mtqe_forward.59} parent=0 // pred_check_branch
    %9 = sbr.rel (0) target = $region5
  $region4: #{mtqe_forward.59} parent=0 // pred_region
    _
  $region5: #{mtqe_forward.59} parent=0 // pred_fallthru
    _
  // Predicated region
  $region6: #{mtqe_forward.59} parent=0 // pred_check
    _
  $region7: #{mtqe_forward.59} parent=0 // pred_check_branch
    %11 = sbr.rel (0) target = $region9
  $region8: #{mtqe_forward.59} parent=0 // pred_region
    _
  $region9: #{mtqe_forward.59} parent=0 // pred_fallthru
    _
  // Predicated region
  $region10: #{mtqe_forward.59} parent=0 // pred_check
    _
  $region11: #{mtqe_forward.59} parent=0 // pred_check_branch
    %13 = sbr.rel (0) target = $region13
  $region12: #{mtqe_forward.59} parent=0 // pred_region
    _
  $region13: #{mtqe_forward.59} parent=0 // pred_fallthru
    _
  %v15 = vld [vmem:[%s0] sm:$0xf]
  %v16 = vld [vmem:[%s0 + $0x4] sm:$0xf]
  %v17 = vld [vmem:[%s1] sm:$0xf]
  %v18 = vld [vmem:[%s1 + $0x4] sm:$0xf]
  %v19 = vld [vmem:[%s1 + $0x8] sm:$0xf]
  %v20 = vld [vmem:[%s1 + $0xc] sm:$0xf]
  %v21 = vld [vmem:[%s2] sm:$0x1]
  %v23 = vperm.slane %v21, 0
  %v27 = vunpack.c.l.b16 %v15
  %v28 = vunpack.c.l.b16 %v16
  %v29 = vpack.c.b16 %v28, %v27
  %v34 = vunpack.c.l.b16 %v17
  %v35 = vunpack.c.l.b16 %v18
  %v36 = vunpack.c.l.b16 %v19
  %v37 = vunpack.c.l.b16 %v20
  %v38 = vpack.c.b16 %v35, %v34
  %v39 = vpack.c.b16 %v37, %v36
  %vm42 = vcmask 261120
  %v44 = vsel %vm42, %v29, 0
  %46 = vmatpush.bf16.msra.mxu0 0
  %47 = vmatpush.bf16.msra.mxu0 0
  %48 = vmatpush.bf16.msra.mxu0 0
  %49 = vmatpush.bf16.msra.mxu0 0
  %50 = vmatpush.bf16.msra.mxu0 0
  %51 = vmatpush.bf16.msra.mxu0 0
  %52 = vmatpush.bf16.msra.mxu0 %v39
  %53 = vmatpush.bf16.msra.mxu0 %v38
  %54 = vmatmul.bf16.gmra.mxu0 %v44
  %v55 = vpop.f32.mrf.mxu0
  %v56 = vadd.f32 %v23, %v55
  %v57 = vpop.f32.mrf.mxu0
  %v58 = vadd.f32 %v23, %v57
  %59 = vdwg.mxu0
  %v60 = vpack.c.bf16 %v56, %v56
  %v61 = vpack.c.bf16 %v58, %v58
  %vm62 = vcmask 257024
  %63 = vst.msk [vmem:[%s3] sm:$0xf] %vm62, %v60
  %64 = vst.msk [vmem:[%s3 + $0x4] sm:$0xf] %vm62, %v61
  // Predicated region
  $region14: #{mtqe_forward.59} parent=0 // pred_check
    _
  $region15: #{mtqe_forward.59} parent=0 // pred_check_branch
    %66 = sbr.rel (0) target = $region17
  $region16: #{mtqe_forward.59} parent=0 // pred_region
    _
  $region17: #{mtqe_forward.59} parent=0 // pred_fallthru
    _
  // Predicated region
  $region18: #{mtqe_forward.59} parent=0 // pred_check
    _
  $region19: #{mtqe_forward.59} parent=0 // pred_check_branch
    %68 = sbr.rel (0) target = $region21
  $region20: #{mtqe_forward.59} parent=0 // pred_region
    _
  $region21: #{mtqe_forward.59} parent=0 // pred_fallthru
    _

// kernel: mtqe_forward.57
$region0: #{mtqe_forward.57}
  #allocation0 [shape = 'u32[]', space=smem, size = 0x4, offset = 0x4, fixed_abs, tag = 'smem constant byte address 0x4 - core index']
  #allocation1 [shape = 'u32[72,128]{1,0:T(1,128)}', space=vmem, size = 0x9000, scoped, tag = 'internal scratch']
  %s0 = inlined_call_operand.vmem [shape: bf16[16,32], index: 0, kind: input, shape index: {}]
  %s1 = inlined_call_operand.vmem [shape: bf16[32,96], index: 1, kind: input, shape index: {}]
  %s2 = inlined_call_operand.vmem [shape: f32[1,96], index: 2, kind: input, shape index: {}]
  %s3 = inlined_call_operand.vmem [shape: bf16[16,96], index: 3, kind: output, shape index: {}]
  %s4 = sld [smem:[#allocation0]]
  $region22: #{mtqe_forward.57} parent=0
    _
  %s6 = ssub.s32 1, %s4
  %s7 = scalar_select 0, %s6, %s4
  // Predicated region
  $region2: #{mtqe_forward.57} parent=0 // pred_check
    _
  $region3: #{mtqe_forward.57} parent=0 // pred_check_branch
    %9 = sbr.rel (0) target = $region5
  $region4: #{mtqe_forward.57} parent=0 // pred_region
    _
  $region5: #{mtqe_forward.57} parent=0 // pred_fallthru
    _
  // Predicated region
  $region6: #{mtqe_forward.57} parent=0 // pred_check
    _
  $region7: #{mtqe_forward.57} parent=0 // pred_check_branch
    %11 = sbr.rel (0) target = $region9
  $region8: #{mtqe_forward.57} parent=0 // pred_region
    _
  $region9: #{mtqe_forward.57} parent=0 // pred_fallthru
    _
  // Predicated region
  $region10: #{mtqe_forward.57} parent=0 // pred_check
    _
  $region11: #{mtqe_forward.57} parent=0 // pred_check_branch
    %13 = sbr.rel (0) target = $region13
  $region12: #{mtqe_forward.57} parent=0 // pred_region
    _
  $region13: #{mtqe_forward.57} parent=0 // pred_fallthru
    _
  %v15 = vld [vmem:[%s0] sm:$0xf]
  %v16 = vld [vmem:[%s0 + $0x4] sm:$0xf]
  %v17 = vld [vmem:[%s1] sm:$0xf]
  %v18 = vld [vmem:[%s1 + $0x4] sm:$0xf]
  %v19 = vld [vmem:[%s1 + $0x8] sm:$0xf]
  %v20 = vld [vmem:[%s1 + $0xc] sm:$0xf]
  %v21 = vld [vmem:[%s2] sm:$0x1]
  %v23 = vperm.slane %v21, 0
  %v27 = vunpack.c.l.b16 %v15
  %v28 = vunpack.c.l.b16 %v16
  %v29 = vpack.c.b16 %v28, %v27
  %v34 = vunpack.c.l.b16 %v17
  %v35 = vunpack.c.l.b16 %v18
  %v36 = vunpack.c.l.b16 %v19
  %v37 = vunpack.c.l.b16 %v20
  %v38 = vpack.c.b16 %v35, %v34
  %v39 = vpack.c.b16 %v37, %v36
  %vm42 = vcmask 261120
  %v44 = vsel %vm42, %v29, 0
  %46 = vmatpush.bf16.msra.mxu0 0
  %47 = vmatpush.bf16.msra.mxu0 0
  %48 = vmatpush.bf16.msra.mxu0 0
  %49 = vmatpush.bf16.msra.mxu0 0
  %50 = vmatpush.bf16.msra.mxu0 0
  %51 = vmatpush.bf16.msra.mxu0 0
  %52 = vmatpush.bf16.msra.mxu0 %v39
  %53 = vmatpush.bf16.msra.mxu0 %v38
  %54 = vmatmul.bf16.gmra.mxu0 %v44
  %v55 = vpop.f32.mrf.mxu0
  %v56 = vadd.f32 %v23, %v55
  %v57 = vpop.f32.mrf.mxu0
  %v58 = vadd.f32 %v23, %v57
  %59 = vdwg.mxu0
  %v60 = vpack.c.bf16 %v56, %v56
  %v61 = vpack.c.bf16 %v58, %v58
  %vm62 = vcmask 781312
  %63 = vst.msk [vmem:[%s3] sm:$0xf] %vm62, %v60
  %64 = vst.msk [vmem:[%s3 + $0x4] sm:$0xf] %vm62, %v61
  // Predicated region
  $region14: #{mtqe_forward.57} parent=0 // pred_check
    _
  $region15: #{mtqe_forward.57} parent=0 // pred_check_branch
    %66 = sbr.rel (0) target = $region17
  $region16: #{mtqe_forward.57} parent=0 // pred_region
    _
  $region17: #{mtqe_forward.57} parent=0 // pred_fallthru
    _
  // Predicated region
  $region18: #{mtqe_forward.57} parent=0 // pred_check
    _
  $region19: #{mtqe_forward.57} parent=0 // pred_check_branch
    %68 = sbr.rel (0) target = $region21
  $region20: #{mtqe_forward.57} parent=0 // pred_region
    _
  $region21: #{mtqe_forward.57} parent=0 // pred_fallthru
    _

// kernel: mtqe_forward.56
$region0: #{mtqe_forward.56}
  #allocation0 [shape = 'u32[]', space=smem, size = 0x4, offset = 0x4, fixed_abs, tag = 'smem constant byte address 0x4 - core index']
  #allocation1 [shape = 'u32[72,128]{1,0:T(1,128)}', space=vmem, size = 0x9000, scoped, tag = 'internal scratch']
  %s0 = inlined_call_operand.vmem [shape: f32[16,32], index: 0, kind: input, shape index: {}]
  %s1 = inlined_call_operand.vmem [shape: f32[1,32], index: 1, kind: input, shape index: {}]
  %s2 = inlined_call_operand.vmem [shape: f32[1,32], index: 2, kind: input, shape index: {}]
  %s3 = inlined_call_operand.vmem [shape: bf16[16,32], index: 3, kind: output, shape index: {}]
  %s4 = sld [smem:[#allocation0]]
  $region22: #{mtqe_forward.56} parent=0
    _
  %s6 = ssub.s32 1, %s4
  %s7 = scalar_select 0, %s6, %s4
  // Predicated region
  $region2: #{mtqe_forward.56} parent=0 // pred_check
    _
  $region3: #{mtqe_forward.56} parent=0 // pred_check_branch
    %9 = sbr.rel (0) target = $region5
  $region4: #{mtqe_forward.56} parent=0 // pred_region
    _
  $region5: #{mtqe_forward.56} parent=0 // pred_fallthru
    _
  // Predicated region
  $region6: #{mtqe_forward.56} parent=0 // pred_check
    _
  $region7: #{mtqe_forward.56} parent=0 // pred_check_branch
    %11 = sbr.rel (0) target = $region9
  $region8: #{mtqe_forward.56} parent=0 // pred_region
    _
  $region9: #{mtqe_forward.56} parent=0 // pred_fallthru
    _
  // Predicated region
  $region10: #{mtqe_forward.56} parent=0 // pred_check
    _
  $region11: #{mtqe_forward.56} parent=0 // pred_check_branch
    %13 = sbr.rel (0) target = $region13
  $region12: #{mtqe_forward.56} parent=0 // pred_region
    _
  $region13: #{mtqe_forward.56} parent=0 // pred_fallthru
    _
  %v14 = vld [vmem:[%s0] sm:$0xff]
  %v15 = vld [vmem:[%s0 + $0x8] sm:$0xff]
  %vm16 = vcmask 261120
  %v17 = vsel %vm16, %v14, 0.0
  %18 = vadd.xlane.f32.xlu0 %v17
  %v19 = vpop.xlane.xlu0 %18
  %v20 = vsel %vm16, %v15, 0.0
  %21 = vadd.xlane.f32.xlu0 %v20
  %v22 = vpop.xlane.xlu0 %21
  %v23 = vrcp.pop 32.0
  %v24 = vmul.f32 32.0, %v23
  %v25 = vsub.f32 1.0, %v24
  %v26 = vmul.f32 %v23, %v25
  %v27 = vadd.f32 %v23, %v26
  %vm28 = vweird.f32 %v23
  %v29 = vsel %vm28, %v23, %v27
  %v30 = vmul.f32 %v19, %v29
  %v31 = vmul.f32 %v22, %v29
  %v32 = vsub.f32 %v14, %v30
  %v33 = vsub.f32 %v15, %v31
  %v34 = vmul.f32 %v32, %v32
  %v35 = vmul.f32 %v33, %v33
  %v36 = vsel %vm16, %v34, 0.0
  %37 = vadd.xlane.f32.xlu0 %v36
  %v38 = vpop.xlane.xlu0 %37
  %v39 = vsel %vm16, %v35, 0.0
  %40 = vadd.xlane.f32.xlu0 %v39
  %v41 = vpop.xlane.xlu0 %40
  %v42 = vmul.f32 %v38, %v29
  %v43 = vmul.f32 %v41, %v29
  %v44 = vadd.f32 %v42, 1e-12
  %v45 = vadd.f32 %v43, 1e-12
  %v46 = vrsqrt.pop %v44
  %v47 = vmul.f32 %v46, %v44
  %v48 = vmul.f32 %v47, %v46
  %v49 = vmul.f32 0.5, %v48
  %v50 = vsub.f32 1.5, %v49
  %v51 = vmul.f32 %v46, %v50
  %vm52 = vweird.f32 %v44
  %vm53 = vweird.f32 %v46
  %vm54 = vmor %vm52, %vm53
  %v55 = vsel %vm54, %v46, %v51
  %v56 = vrsqrt.pop %v45
  %v57 = vmul.f32 %v56, %v45
  %v58 = vmul.f32 %v57, %v56
  %v59 = vmul.f32 0.5, %v58
  %v60 = vsub.f32 1.5, %v59
  %v61 = vmul.f32 %v56, %v60
  %vm62 = vweird.f32 %v45
  %vm63 = vweird.f32 %v56
  %vm64 = vmor %vm62, %vm63
  %v65 = vsel %vm64, %v56, %v61
  %v66 = vmul.f32 %v32, %v55
  %v67 = vmul.f32 %v33, %v65
  %v68 = vld [vmem:[%s1] sm:$0x1]
  %v70 = vperm.slane %v68, 0
  %v72 = vmul.f32 %v66, %v70
  %v73 = vmul.f32 %v67, %v70
  %v74 = vld [vmem:[%s2] sm:$0x1]
  %v76 = vperm.slane %v74, 0
  %v78 = vadd.f32 %v72, %v76
  %v79 = vadd.f32 %v73, %v76
  %v80 = vpack.c.bf16 %v78, %v78
  %v81 = vpack.c.bf16 %v79, %v79
  %vm82 = vcmask 257024
  %83 = vst.msk [vmem:[%s3] sm:$0xf] %vm82, %v80
  %84 = vst.msk [vmem:[%s3 + $0x4] sm:$0xf] %vm82, %v81
  // Predicated region
  $region14: #{mtqe_forward.56} parent=0 // pred_check
    _
  $region15: #{mtqe_forward.56} parent=0 // pred_check_branch
    %86 = sbr.rel (0) target = $region17
  $region16: #{mtqe_forward.56} parent=0 // pred_region
    _
  $region17: #{mtqe_forward.56} parent=0 // pred_fallthru
    _
  // Predicated region
  $region18: #{mtqe_forward.56} parent=0 // pred_check
    _
  $region19: #{mtqe_forward.56} parent=0 // pred_check_branch
    %88 = sbr.rel (0) target = $region21
  $region20: #{mtqe_forward.56} parent=0 // pred_region
    _
  $region21: #{mtqe_forward.56} parent=0 // pred_fallthru
    _

// kernel: mtqe_forward.58
$region0: #{mtqe_forward.58}
  #allocation0 [shape = 'u32[]', space=smem, size = 0x4, offset = 0x4, fixed_abs, tag = 'smem constant byte address 0x4 - core index']
  #allocation1 [shape = 'u32[72,128]{1,0:T(1,128)}', space=vmem, size = 0x9000, scoped, tag = 'internal scratch']
  %s0 = inlined_call_operand.vmem [shape: bf16[2,8,32], index: 0, kind: input, shape index: {}]
  %s1 = inlined_call_operand.vmem [shape: bf16[2,8,32], index: 1, kind: input, shape index: {}]
  %s2 = inlined_call_operand.vmem [shape: bf16[2,8,32], index: 2, kind: input, shape index: {}]
  %s3 = inlined_call_operand.vmem [shape: f32[2,1,8], index: 3, kind: input, shape index: {}]
  %s4 = inlined_call_operand.vmem [shape: bf16[2,8,32], index: 4, kind: output, shape index: {}]
  %s5 = sld [smem:[#allocation0]]
  $region49: #{mtqe_forward.58} parent=0
    _
  %s7 = ssub.s32 1, %s5
  %s8 = scalar_select 0, %s7, %s5
  loop: start=0, step=1, limit=4
  $region2: #{mtqe_forward.58} parent=0 // loop_pre_header
    _
  $region3: #{mtqe_forward.58} parent=0 // loop_header
    %s10 = sphi 0, %s14
    %p11 = scmp.ge.s32.totalorder %s10, 4
    %s20 = sphi 0, %s22
    %s23 = sphi 0, %s20
    %s24 = sphi 0, %s23
    %s40 = sphi 0, %s24
    %s46 = sphi 0, %s48
    %s49 = sphi 0, %s46
    %s50 = sphi 0, %s49
    %s66 = sphi 0, %s50
    %s72 = sphi 0, %s74
    %s75 = sphi 0, %s72
    %s76 = sphi 0, %s75
    %s92 = sphi 0, %s76
    %s98 = sphi 0, %s100
    %s101 = sphi 0, %s98
    %s102 = sphi 0, %s101
    %s118 = sphi 0, %s102
    %s124 = sphi 0, %s126
    %s127 = sphi 0, %s124
    %s128 = sphi 0, %s127
    %s144 = sphi 0, %s128
  $region4: #{mtqe_forward.58} parent=0 // loop_header_branch
    %13 = sbr.rel (%p11) target = $region8
  $region5: #{mtqe_forward.58} parent=0 // loop_body
    %s15 = ssub.s32 %s10, 1
    %s16 = ssub.s32 %s10, 2
    %s17 = sadd.s32 %s10, 1
    %s18 = ssub.s32 %s10, %s17
    %p19 = scmp.eq.s32.totalorder %s18, 0
    %s21 = sadd.s32 %s20, 1
    %s22 = scalar_select %p19, %s20, %s21
    %p25 = pneg %p19
    %p26 = scmp.eq.s32.totalorder %s10, 1
    %p27 = por %p25, %p26
    %p28 = scmp.ne.s32.totalorder %s20, %s23
    %p29 = scmp.eq.s32.totalorder %s10, 0
    %p30 = por %p28, %p29
    %p31 = scmp.ne.s32.totalorder %s20, %s23
    %p32 = scmp.eq.s32.totalorder %s15, 1
    %p33 = por %p31, %p32
    %p34 = scmp.ne.s32.totalorder %s23, %s24
    %p35 = scmp.eq.s32.totalorder %s15, 0
    %p36 = por %p34, %p35
    %p37 = scmp.ne.s32.totalorder %s23, %s24
    %p38 = scmp.eq.s32.totalorder %s16, 1
    %p39 = por %p37, %p38
    %p41 = scmp.ne.s32.totalorder %s24, %s40
    %p42 = scmp.eq.s32.totalorder %s16, 0
    %p43 = por %p41, %p42
    %s44 = ssub.s32 %s10, %s17
    %p45 = scmp.eq.s32.totalorder %s44, 0
    %s47 = sadd.s32 %s46, 1
    %s48 = scalar_select %p45, %s46, %s47
    %p51 = pneg %p45
    %p52 = scmp.eq.s32.totalorder %s10, 1
    %p53 = por %p51, %p52
    %p54 = scmp.ne.s32.totalorder %s46, %s49
    %p55 = scmp.eq.s32.totalorder %s10, 0
    %p56 = por %p54, %p55
    %p57 = scmp.ne.s32.totalorder %s46, %s49
    %p58 = scmp.eq.s32.totalorder %s15, 1
    %p59 = por %p57, %p58
    %p60 = scmp.ne.s32.totalorder %s49, %s50
    %p61 = scmp.eq.s32.totalorder %s15, 0
    %p62 = por %p60, %p61
    %p63 = scmp.ne.s32.totalorder %s49, %s50
    %p64 = scmp.eq.s32.totalorder %s16, 1
    %p65 = por %p63, %p64
    %p67 = scmp.ne.s32.totalorder %s50, %s66
    %p68 = scmp.eq.s32.totalorder %s16, 0
    %p69 = por %p67, %p68
    %s70 = ssub.s32 %s10, %s17
    %p71 = scmp.eq.s32.totalorder %s70, 0
    %s73 = sadd.s32 %s72, 1
    %s74 = scalar_select %p71, %s72, %s73
    %p77 = pneg %p71
    %p78 = scmp.eq.s32.totalorder %s10, 1
    %p79 = por %p77, %p78
    %p80 = scmp.ne.s32.totalorder %s72, %s75
    %p81 = scmp.eq.s32.totalorder %s10, 0
    %p82 = por %p80, %p81
    %p83 = scmp.ne.s32.totalorder %s72, %s75
    %p84 = scmp.eq.s32.totalorder %s15, 1
    %p85 = por %p83, %p84
    %p86 = scmp.ne.s32.totalorder %s75, %s76
    %p87 = scmp.eq.s32.totalorder %s15, 0
    %p88 = por %p86, %p87
    %p89 = scmp.ne.s32.totalorder %s75, %s76
    %p90 = scmp.eq.s32.totalorder %s16, 1
    %p91 = por %p89, %p90
    %p93 = scmp.ne.s32.totalorder %s76, %s92
    %p94 = scmp.eq.s32.totalorder %s16, 0
    %p95 = por %p93, %p94
    %s96 = ssub.s32 %s10, %s17
    %p97 = scmp.eq.s32.totalorder %s96, 0
    %s99 = sadd.s32 %s98, 1
    %s100 = scalar_select %p97, %s98, %s99
    %p103 = pneg %p97
    %p104 = scmp.eq.s32.totalorder %s10, 1
    %p105 = por %p103, %p104
    %p106 = scmp.ne.s32.totalorder %s98, %s101
    %p107 = scmp.eq.s32.totalorder %s10, 0
    %p108 = por %p106, %p107
    %p109 = scmp.ne.s32.totalorder %s98, %s101
    %p110 = scmp.eq.s32.totalorder %s15, 1
    %p111 = por %p109, %p110
    %p112 = scmp.ne.s32.totalorder %s101, %s102
    %p113 = scmp.eq.s32.totalorder %s15, 0
    %p114 = por %p112, %p113
    %p115 = scmp.ne.s32.totalorder %s101, %s102
    %p116 = scmp.eq.s32.totalorder %s16, 1
    %p117 = por %p115, %p116
    %p119 = scmp.ne.s32.totalorder %s102, %s118
    %p120 = scmp.eq.s32.totalorder %s16, 0
    %p121 = por %p119, %p120
    %s122 = ssub.s32 %s10, %s17
    %p123 = scmp.eq.s32.totalorder %s122, 0
    %s125 = sadd.s32 %s124, 1
    %s126 = scalar_select %p123, %s124, %s125
    %p129 = pneg %p123
    %p130 = scmp.eq.s32.totalorder %s10, 1
    %p131 = por %p129, %p130
    %p132 = scmp.ne.s32.totalorder %s124, %s127
    %p133 = scmp.eq.s32.totalorder %s10, 0
    %p134 = por %p132, %p133
    %p135 = scmp.ne.s32.totalorder %s124, %s127
    %p136 = scmp.eq.s32.totalorder %s15, 1
    %p137 = por %p135, %p136
    %p138 = scmp.ne.s32.totalorder %s127, %s128
    %p139 = scmp.eq.s32.totalorder %s15, 0
    %p140 = por %p138, %p139
    %p141 = scmp.ne.s32.totalorder %s127, %s128
    %p142 = scmp.eq.s32.totalorder %s16, 1
    %p143 = por %p141, %p142
    %p145 = scmp.ne.s32.totalorder %s128, %s144
    %p146 = scmp.eq.s32.totalorder %s16, 0
    %p147 = por %p145, %p146
    %p148 = scmp.le.s32.totalorder 1, %s10
    %p149 = scmp.lt.s32.totalorder %s10, 3
    %p150 = pnand %p148, %p149
    %p151 = pneg %p150
    // Predicated region
    $region9: #{mtqe_forward.58} parent=5 // pred_check
      _
    $region10: #{mtqe_forward.58} parent=5 // pred_check_branch
      %153 = sbr.rel (%p150) target = $region12
    $region11: #{mtqe_forward.58} parent=5 // pred_region
      %s154 = ssub.s32 %s10, 1
    $region12: #{mtqe_forward.58} parent=5 // pred_fallthru
      _
    %p155 = scmp.lt.s32.totalorder %s10, 2
    // Predicated region
    $region13: #{mtqe_forward.58} parent=5 // pred_check
      %p156 = pneg %p155
    $region14: #{mtqe_forward.58} parent=5 // pred_check_branch
      %158 = sbr.rel (%p156) target = $region16
    $region15: #{mtqe_forward.58} parent=5 // pred_region
      // Predicated region
      $region17: #{mtqe_forward.58} parent=15 // pred_check
        %p159 = pneg %p30
      $region18: #{mtqe_forward.58} parent=15 // pred_check_branch
        %161 = sbr.rel (%p159) target = $region20
      $region19: #{mtqe_forward.58} parent=15 // pred_region
        %p162 = scmp.lt.s32.totalorder %s10, 1
        %s163 = scalar_select %p162, %s10, 1
        %s164 = smul.addr %s163, 4
        %s165 = scalar_lea.vmem %s0, %s164
      $region20: #{mtqe_forward.58} parent=15 // pred_fallthru
        _
      // Predicated region
      $region21: #{mtqe_forward.58} parent=15 // pred_check
        %p166 = pneg %p56
      $region22: #{mtqe_forward.58} parent=15 // pred_check_branch
        %168 = sbr.rel (%p166) target = $region24
      $region23: #{mtqe_forward.58} parent=15 // pred_region
        %p169 = scmp.lt.s32.totalorder %s10, 1
        %s170 = scalar_select %p169, %s10, 1
        %s171 = smul.addr %s170, 4
        %s172 = scalar_lea.vmem %s1, %s171
      $region24: #{mtqe_forward.58} parent=15 // pred_fallthru
        _
      // Predicated region
      $region25: #{mtqe_forward.58} parent=15 // pred_check
        %p173 = pneg %p82
      $region26: #{mtqe_forward.58} parent=15 // pred_check_branch
        %175 = sbr.rel (%p173) target = $region28
      $region27: #{mtqe_forward.58} parent=15 // pred_region
        %p176 = scmp.lt.s32.totalorder %s10, 1
        %s177 = scalar_select %p176, %s10, 1
        %s178 = smul.addr %s177, 4
        %s179 = scalar_lea.vmem %s2, %s178
      $region28: #{mtqe_forward.58} parent=15 // pred_fallthru
        _
      // Predicated region
      $region29: #{mtqe_forward.58} parent=15 // pred_check
        %p180 = pneg %p108
      $region30: #{mtqe_forward.58} parent=15 // pred_check_branch
        %182 = sbr.rel (%p180) target = $region32
      $region31: #{mtqe_forward.58} parent=15 // pred_region
        %p183 = scmp.lt.s32.totalorder %s10, 1
        %s184 = scalar_select %p183, %s10, 1
        %s185 = scalar_lea.vmem %s3, %s184
      $region32: #{mtqe_forward.58} parent=15 // pred_fallthru
        _
    $region16: #{mtqe_forward.58} parent=5 // pred_fallthru
      _
    %p186 = scmp.le.s32.totalorder 1, %s10
    %p187 = scmp.lt.s32.totalorder %s10, 3
    %p188 = pnand %p186, %p187
    %p189 = pneg %p188
    // Predicated region
    $region33: #{mtqe_forward.58} parent=5 // pred_check
      _
    $region34: #{mtqe_forward.58} parent=5 // pred_check_branch
      %191 = sbr.rel (%p188) target = $region36
    $region35: #{mtqe_forward.58} parent=5 // pred_region
      %s192 = ssub.s32 %s10, 1
      %p193 = scmp.lt.s32.totalorder %s15, 1
      %s194 = scalar_select %p193, %s15, 1
      %s195 = smul.addr %s194, 4
      %s196 = scalar_lea.vmem %s0, %s195
      %p197 = pneg %p36
      %p198 = pneg %p33
      %p199 = scmp.lt.s32.totalorder %s15, 1
      %s200 = scalar_select %p199, %s15, 1
      %s201 = smul.addr %s200, 4
      %s202 = scalar_lea.vmem %s1, %s201
      %p203 = pneg %p62
      %p204 = pneg %p59
      %p205 = scmp.lt.s32.totalorder %s15, 1
      %s206 = scalar_select %p205, %s15, 1
      %s207 = smul.addr %s206, 4
      %s208 = scalar_lea.vmem %s2, %s207
      %p209 = pneg %p88
      %p210 = pneg %p85
      %p211 = scmp.lt.s32.totalorder %s15, 1
      %s212 = scalar_select %p211, %s15, 1
      %s213 = scalar_lea.vmem %s3, %s212
      %p214 = pneg %p114
      %p215 = pneg %p111
      %p216 = pneg %p140
      %p217 = pneg %p137
      %p218 = scmp.lt.s32.totalorder %s15, 1
      %s219 = scalar_select %p218, %s15, 1
      %s220 = smul.addr %s219, 4
      %s221 = scalar_lea.vmem %s4, %s220
      %p222 = scmp.lt.s32.totalorder %s15, 1
      %s223 = scalar_select %p222, %s15, 1
      %s224 = smul.addr %s223, 4
      %s225 = scalar_lea.vmem %s0, %s224
      %p226 = scmp.lt.s32.totalorder %s15, 1
      %s227 = scalar_select %p226, %s15, 1
      %s228 = smul.addr %s227, 4
      %s229 = scalar_lea.vmem %s1, %s228
      %p230 = scmp.lt.s32.totalorder %s15, 1
      %s231 = scalar_select %p230, %s15, 1
      %s232 = smul.addr %s231, 4
      %s233 = scalar_lea.vmem %s2, %s232
      %p234 = scmp.lt.s32.totalorder %s15, 1
      %s235 = scalar_select %p234, %s15, 1
      %s236 = scalar_lea.vmem %s3, %s235
      %p237 = scmp.lt.s32.totalorder %s15, 1
      %s238 = scalar_select %p237, %s15, 1
      %s239 = smul.addr %s238, 4
      %s240 = scalar_lea.vmem %s4, %s239
      %v242 = vld [vmem:[%s236] sm:$0x1]
      %v243 = vsub.f32 1.0, %v242
      %v244 = vmul.f32 %v243, -1e+09
      %v245 = vlaneseq
      %v246 = vshrl.u32 %v245, 7
      %v247 = vlaneseq
      %v248 = vand.u32 %v247, 127
      %vm249 = vcmp.gt.s32.totalorder %v248, %v246
      %v250 = vsel %vm249, -1e+09, 0.0
      %v252 = vperm.slane %v244, 0
      %v254 = vadd.f32 %v252, %v250
      %v255 = vld [vmem:[%s225] sm:$0xf]
      %v256 = vld [vmem:[%s229] sm:$0xf]
      %v257 = vld [vmem:[%s233] sm:$0xf]
      %vm258 = vcmask 64512
      %v260 = vsel %vm258, %v255, 0
      %v263 = vsel %vm258, %v256, 0
      %265 = vmatpush.bf16.xpose.msra.mxu0 0
      %266 = vmatpush.bf16.xpose.msra.mxu0 0
      %267 = vmatpush.bf16.xpose.msra.mxu0 0
      %268 = vmatpush.bf16.xpose.msra.mxu0 0
      %269 = vmatpush.bf16.xpose.msra.mxu0 0
      %270 = vmatpush.bf16.xpose.msra.mxu0 0
      %271 = vmatpush.bf16.xpose.msra.mxu0 0
      %272 = vmatpush.bf16.xpose.msra.mxu0 %v263
      %273 = vmatmul.bf16.gmra.mxu0 %v260
      %v274 = vpop.f32.mrf.mxu0
      %v275 = vadd.f32 0.0, %v274
      %v276 = vpop.f32.mrf.mxu0
      %277 = vdwg.mxu0
      %v278 = vmul.f32 %v275, 0.35355338
      %v279 = vadd.f32 %v278, %v254
      %v280 = vsel %vm258, %v279, -inf
      %281 = vmax.xlane.f32.xlu0 %v280
      %v282 = vpop.xlane.xlu0 %281
      %v283 = vsub.f32 %v279, %v282
      %v284 = vmul.f32 %v283, 1.442695
      %v285 = vpow.pop %v284
      %v286 = vsel %vm258, %v285, 0.0
      %287 = vadd.xlane.f32.xlu0 %v286
      %v288 = vpop.xlane.xlu0 %287
      %v289 = vrcp.pop %v288
      %v290 = vmul.f32 %v285, %v289
      %v291 = vpack.c.bf16 %v290, %v290
      %v293 = vsel %vm258, %v291, 0
      %vm295 = vcmask 1043456
      %v297 = vsel %vm295, %v257, 0
      %299 = vmatpush.bf16.msra.mxu0 0
      %300 = vmatpush.bf16.msra.mxu0 0
      %301 = vmatpush.bf16.msra.mxu0 0
      %302 = vmatpush.bf16.msra.mxu0 0
      %303 = vmatpush.bf16.msra.mxu0 0
      %304 = vmatpush.bf16.msra.mxu0 0
      %305 = vmatpush.bf16.msra.mxu0 0
      %306 = vmatpush.bf16.msra.mxu0 %v297
      %307 = vmatmul.bf16.gmra.mxu0 %v293
      %v308 = vpop.f32.mrf.mxu0
      %v309 = vadd.f32 0.0, %v308
      %v310 = vpop.f32.mrf.mxu0
      %311 = vdwg.mxu0
      %v312 = vpack.c.bf16 %v309, %v309
      %vm313 = vcmask 60416
      %314 = vst.msk [vmem:[%s240] sm:$0xf] %vm313, %v312
      %v315 = vld [vmem:[%s225] sm:$0xf]
      %v316 = vld [vmem:[%s229] sm:$0xf]
      %v317 = vld [vmem:[%s233] sm:$0xf]
      %v319 = vunpack.c.l.b16 %v315
      %v320 = vpack.c.b16 %v319, %v319
      %321 = vrot.lane.b32.xlu0 %v320, 120
      %v322 = vpop.permute.xlu0 %321
      %v324 = vunpack.c.l.b16 %v316
      %v325 = vpack.c.b16 %v324, %v324
      %326 = vrot.lane.b32.xlu0 %v325, 120
      %v327 = vpop.permute.xlu0 %326
      %v329 = vsel %vm258, %v322, 0
      %v332 = vsel %vm258, %v327, 0
      %334 = vmatpush.bf16.xpose.msra.mxu0 0
      %335 = vmatpush.bf16.xpose.msra.mxu0 0
      %336 = vmatpush.bf16.xpose.msra.mxu0 0
      %337 = vmatpush.bf16.xpose.msra.mxu0 0
      %338 = vmatpush.bf16.xpose.msra.mxu0 0
      %339 = vmatpush.bf16.xpose.msra.mxu0 0
      %340 = vmatpush.bf16.xpose.msra.mxu0 0
      %341 = vmatpush.bf16.xpose.msra.mxu0 %v332
      %342 = vmatmul.bf16.gmra.mxu0 %v329
      %v343 = vpop.f32.mrf.mxu0
      %v344 = vadd.f32 0.0, %v343
      %v345 = vpop.f32.mrf.mxu0
      %346 = vdwg.mxu0
      %v347 = vmul.f32 %v344, 0.35355338
      %v348 = vadd.f32 %v347, %v254
      %v349 = vsel %vm258, %v348, -inf
      %350 = vmax.xlane.f32.xlu0 %v349
      %v351 = vpop.xlane.xlu0 %350
      %v352 = vsub.f32 %v348, %v351
      %v353 = vmul.f32 %v352, 1.442695
      %v354 = vpow.pop %v353
      %v355 = vsel %vm258, %v354, 0.0
      %356 = vadd.xlane.f32.xlu0 %v355
      %v357 = vpop.xlane.xlu0 %356
      %v358 = vrcp.pop %v357
      %v359 = vmul.f32 %v354, %v358
      %v360 = vpack.c.bf16 %v359, %v359
      %v362 = vunpack.c.l.b16 %v317
      %v363 = vpack.c.b16 %v362, %v362
      %364 = vrot.lane.b32.xlu0 %v363, 120
      %v365 = vpop.permute.xlu0 %364
      %v367 = vsel %vm258, %v360, 0
      %v370 = vsel %vm295, %v365, 0
      %372 = vmatpush.bf16.msra.mxu0 0
      %373 = vmatpush.bf16.msra.mxu0 0
      %374 = vmatpush.bf16.msra.mxu0 0
      %375 = vmatpush.bf16.msra.mxu0 0
      %376 = vmatpush.bf16.msra.mxu0 0
      %377 = vmatpush.bf16.msra.mxu0 0
      %378 = vmatpush.bf16.msra.mxu0 0
      %379 = vmatpush.bf16.msra.mxu0 %v370
      %380 = vmatmul.bf16.gmra.mxu0 %v367
      %v381 = vpop.f32.mrf.mxu0
      %v382 = vadd.f32 0.0, %v381
      %v383 = vpop.f32.mrf.mxu0
      %384 = vdwg.mxu0
      %v385 = vpack.c.bf16 %v382, %v382
      %387 = vrot.lane.b32.xlu0 %v385, 8
      %v388 = vpop.permute.xlu0 %387
      %vm390 = vcmask 126016
      %391 = vst.msk [vmem:[%s240] sm:$0xf] %vm390, %v388
      %v392 = vld [vmem:[%s225] sm:$0xf]
      %v393 = vld [vmem:[%s229] sm:$0xf]
      %v394 = vld [vmem:[%s233] sm:$0xf]
      %v396 = vunpack.c.l.b16 %v392
      %v397 = vpack.c.b16 %v396, %v396
      %398 = vrot.lane.b32.xlu0 %v397, 112
      %v399 = vpop.permute.xlu0 %398
      %v401 = vunpack.c.l.b16 %v393
      %v402 = vpack.c.b16 %v401, %v401
      %403 = vrot.lane.b32.xlu0 %v402, 112
      %v404 = vpop.permute.xlu0 %403
      %v406 = vsel %vm258, %v399, 0
      %v409 = vsel %vm258, %v404, 0
      %411 = vmatpush.bf16.xpose.msra.mxu0 0
      %412 = vmatpush.bf16.xpose.msra.mxu0 0
      %413 = vmatpush.bf16.xpose.msra.mxu0 0
      %414 = vmatpush.bf16.xpose.msra.mxu0 0
      %415 = vmatpush.bf16.xpose.msra.mxu0 0
      %416 = vmatpush.bf16.xpose.msra.mxu0 0
      %417 = vmatpush.bf16.xpose.msra.mxu0 0
      %418 = vmatpush.bf16.xpose.msra.mxu0 %v409
      %419 = vmatmul.bf16.gmra.mxu0 %v406
      %v420 = vpop.f32.mrf.mxu0
      %v421 = vadd.f32 0.0, %v420
      %v422 = vpop.f32.mrf.mxu0
      %423 = vdwg.mxu0
      %v424 = vmul.f32 %v421, 0.35355338
      %v425 = vadd.f32 %v424, %v254
      %v426 = vsel %vm258, %v425, -inf
      %427 = vmax.xlane.f32.xlu0 %v426
      %v428 = vpop.xlane.xlu0 %427
      %v429 = vsub.f32 %v425, %v428
      %v430 = vmul.f32 %v429, 1.442695
      %v431 = vpow.pop %v430
      %v432 = vsel %vm258, %v431, 0.0
      %433 = vadd.xlane.f32.xlu0 %v432
      %v434 = vpop.xlane.xlu0 %433
      %v435 = vrcp.pop %v434
      %v436 = vmul.f32 %v431, %v435
      %v437 = vpack.c.bf16 %v436, %v436
      %v439 = vunpack.c.l.b16 %v394
      %v440 = vpack.c.b16 %v439, %v439
      %441 = vrot.lane.b32.xlu0 %v440, 112
      %v442 = vpop.permute.xlu0 %441
      %v444 = vsel %vm258, %v437, 0
      %v447 = vsel %vm295, %v442, 0
      %449 = vmatpush.bf16.msra.mxu0 0
      %450 = vmatpush.bf16.msra.mxu0 0
      %451 = vmatpush.bf16.msra.mxu0 0
      %452 = vmatpush.bf16.msra.mxu0 0
      %453 = vmatpush.bf16.msra.mxu0 0
      %454 = vmatpush.bf16.msra.mxu0 0
      %455 = vmatpush.bf16.msra.mxu0 0
      %456 = vmatpush.bf16.msra.mxu0 %v447
      %457 = vmatmul.bf16.gmra.mxu0 %v444
      %v458 = vpop.f32.mrf.mxu0
      %v459 = vadd.f32 0.0, %v458
      %v460 = vpop.f32.mrf.mxu0
      %461 = vdwg.mxu0
      %v462 = vpack.c.bf16 %v459, %v459
      %464 = vrot.lane.b32.xlu0 %v462, 16
      %v465 = vpop.permute.xlu0 %464
      %vm467 = vcmask 191616
      %468 = vst.msk [vmem:[%s240] sm:$0xf] %vm467, %v465
      %v469 = vld [vmem:[%s225] sm:$0xf]
      %v470 = vld [vmem:[%s229] sm:$0xf]
      %v471 = vld [vmem:[%s233] sm:$0xf]
      %v473 = vunpack.c.l.b16 %v469
      %v474 = vpack.c.b16 %v473, %v473
      %475 = vrot.lane.b32.xlu0 %v474, 104
      %v476 = vpop.permute.xlu0 %475
      %v478 = vunpack.c.l.b16 %v470
      %v479 = vpack.c.b16 %v478, %v478
      %480 = vrot.lane.b32.xlu0 %v479, 104
      %v481 = vpop.permute.xlu0 %480
      %v483 = vsel %vm258, %v476, 0
      %v486 = vsel %vm258, %v481, 0
      %488 = vmatpush.bf16.xpose.msra.mxu0 0
      %489 = vmatpush.bf16.xpose.msra.mxu0 0
      %490 = vmatpush.bf16.xpose.msra.mxu0 0
      %491 = vmatpush.bf16.xpose.msra.mxu0 0
      %492 = vmatpush.bf16.xpose.msra.mxu0 0
      %493 = vmatpush.bf16.xpose.msra.mxu0 0
      %494 = vmatpush.bf16.xpose.msra.mxu0 0
      %495 = vmatpush.bf16.xpose.msra.mxu0 %v486
      %496 = vmatmul.bf16.gmra.mxu0 %v483
      %v497 = vpop.f32.mrf.mxu0
      %v498 = vadd.f32 0.0, %v497
      %v499 = vpop.f32.mrf.mxu0
      %500 = vdwg.mxu0
      %v501 = vmul.f32 %v498, 0.35355338
      %v502 = vadd.f32 %v501, %v254
      %v503 = vsel %vm258, %v502, -inf
      %504 = vmax.xlane.f32.xlu0 %v503
      %v505 = vpop.xlane.xlu0 %504
      %v506 = vsub.f32 %v502, %v505
      %v507 = vmul.f32 %v506, 1.442695
      %v508 = vpow.pop %v507
      %v509 = vsel %vm258, %v508, 0.0
      %510 = vadd.xlane.f32.xlu0 %v509
      %v511 = vpop.xlane.xlu0 %510
      %v512 = vrcp.pop %v511
      %v513 = vmul.f32 %v508, %v512
      %v514 = vpack.c.bf16 %v513, %v513
      %v516 = vunpack.c.l.b16 %v471
      %v517 = vpack.c.b16 %v516, %v516
      %518 = vrot.lane.b32.xlu0 %v517, 104
      %v519 = vpop.permute.xlu0 %518
      %v521 = vsel %vm258, %v514, 0
      %v524 = vsel %vm295, %v519, 0
      %526 = vmatpush.bf16.msra.mxu0 0
      %527 = vmatpush.bf16.msra.mxu0 0
      %528 = vmatpush.bf16.msra.mxu0 0
      %529 = vmatpush.bf16.msra.mxu0 0
      %530 = vmatpush.bf16.msra.mxu0 0
      %531 = vmatpush.bf16.msra.mxu0 0
      %532 = vmatpush.bf16.msra.mxu0 0
      %533 = vmatpush.bf16.msra.mxu0 %v524
      %534 = vmatmul.bf16.gmra.mxu0 %v521
      %v535 = vpop.f32.mrf.mxu0
      %v536 = vadd.f32 0.0, %v535
      %v537 = vpop.f32.mrf.mxu0
      %538 = vdwg.mxu0
      %v539 = vpack.c.bf16 %v536, %v536
      %541 = vrot.lane.b32.xlu0 %v539, 24
      %v542 = vpop.permute.xlu0 %541
      %vm544 = vcmask 257216
      %545 = vst.msk [vmem:[%s240] sm:$0xf] %vm544, %v542
      %p546 = scmp.lt.s32.totalorder %s15, 1
      %s547 = scalar_select %p546, %s15, 1
      %s548 = smul.addr %s547, 4
      %s549 = scalar_lea.vmem %s4, %s548
      // Predicated region
      $region37: #{mtqe_forward.58} parent=35 // pred_check
        %p550 = pneg %p137
      $region38: #{mtqe_forward.58} parent=35 // pred_check_branch
        %552 = sbr.rel (%p550) target = $region40
      $region39: #{mtqe_forward.58} parent=35 // pred_region
        _
      $region40: #{mtqe_forward.58} parent=35 // pred_fallthru
        _
    $region36: #{mtqe_forward.58} parent=5 // pred_fallthru
      _
    %p553 = scmp.le.s32.totalorder 2, %s10
    // Predicated region
    $region41: #{mtqe_forward.58} parent=5 // pred_check
      %p554 = pneg %p553
    $region42: #{mtqe_forward.58} parent=5 // pred_check_branch
      %556 = sbr.rel (%p554) target = $region44
    $region43: #{mtqe_forward.58} parent=5 // pred_region
      %s557 = ssub.s32 %s10, 2
      // Predicated region
      $region45: #{mtqe_forward.58} parent=43 // pred_check
        %p558 = pneg %p143
      $region46: #{mtqe_forward.58} parent=43 // pred_check_branch
        %560 = sbr.rel (%p558) target = $region48
      $region47: #{mtqe_forward.58} parent=43 // pred_region
        %p561 = scmp.lt.s32.totalorder %s16, 1
        %s562 = scalar_select %p561, %s16, 1
        %s563 = smul.addr %s562, 4
        %s564 = scalar_lea.vmem %s4, %s563
      $region48: #{mtqe_forward.58} parent=43 // pred_fallthru
        _
    $region44: #{mtqe_forward.58} parent=5 // pred_fallthru
      _
  $region6: #{mtqe_forward.58} parent=0 // loop_footer
    %s14 = sadd.s32 1, %s10
  $region7: #{mtqe_forward.58} parent=0 // loop_footer_branch
    %9 = sbr.rel target = $region3
  $region8: #{mtqe_forward.58} parent=0 // loop_exit
    _

// kernel: mtqe_forward.46
$region0: #{mtqe_forward.46}
  #allocation0 [shape = 'u32[]', space=smem, size = 0x4, offset = 0x4, fixed_abs, tag = 'smem constant byte address 0x4 - core index']
  #allocation1 [shape = 'u32[72,128]{1,0:T(1,128)}', space=vmem, size = 0x9000, scoped, tag = 'internal scratch']
  %s0 = inlined_call_operand.vmem [shape: bf16[16,32], index: 0, kind: input, shape index: {}]
  %s1 = inlined_call_operand.vmem [shape: bf16[32,64], index: 1, kind: input, shape index: {}]
  %s2 = inlined_call_operand.vmem [shape: f32[1,64], index: 2, kind: input, shape index: {}]
  %s3 = inlined_call_operand.vmem [shape: bf16[16,64], index: 3, kind: output, shape index: {}]
  %s4 = sld [smem:[#allocation0]]
  $region22: #{mtqe_forward.46} parent=0
    _
  %s6 = ssub.s32 1, %s4
  %s7 = scalar_select 0, %s6, %s4
  // Predicated region
  $region2: #{mtqe_forward.46} parent=0 // pred_check
    _
  $region3: #{mtqe_forward.46} parent=0 // pred_check_branch
    %9 = sbr.rel (0) target = $region5
  $region4: #{mtqe_forward.46} parent=0 // pred_region
    _
  $region5: #{mtqe_forward.46} parent=0 // pred_fallthru
    _
  // Predicated region
  $region6: #{mtqe_forward.46} parent=0 // pred_check
    _
  $region7: #{mtqe_forward.46} parent=0 // pred_check_branch
    %11 = sbr.rel (0) target = $region9
  $region8: #{mtqe_forward.46} parent=0 // pred_region
    _
  $region9: #{mtqe_forward.46} parent=0 // pred_fallthru
    _
  // Predicated region
  $region10: #{mtqe_forward.46} parent=0 // pred_check
    _
  $region11: #{mtqe_forward.46} parent=0 // pred_check_branch
    %13 = sbr.rel (0) target = $region13
  $region12: #{mtqe_forward.46} parent=0 // pred_region
    _
  $region13: #{mtqe_forward.46} parent=0 // pred_fallthru
    _
  %v15 = vld [vmem:[%s0] sm:$0xf]
  %v16 = vld [vmem:[%s0 + $0x4] sm:$0xf]
  %v17 = vld [vmem:[%s1] sm:$0xf]
  %v18 = vld [vmem:[%s1 + $0x4] sm:$0xf]
  %v19 = vld [vmem:[%s1 + $0x8] sm:$0xf]
  %v20 = vld [vmem:[%s1 + $0xc] sm:$0xf]
  %v21 = vld [vmem:[%s2] sm:$0x1]
  %v23 = vperm.slane %v21, 0
  %v27 = vunpack.c.l.b16 %v15
  %v28 = vunpack.c.l.b16 %v16
  %v29 = vpack.c.b16 %v28, %v27
  %v34 = vunpack.c.l.b16 %v17
  %v35 = vunpack.c.l.b16 %v18
  %v36 = vunpack.c.l.b16 %v19
  %v37 = vunpack.c.l.b16 %v20
  %v38 = vpack.c.b16 %v35, %v34
  %v39 = vpack.c.b16 %v37, %v36
  %vm42 = vcmask 261120
  %v44 = vsel %vm42, %v29, 0
  %46 = vmatpush.bf16.msra.mxu0 0
  %47 = vmatpush.bf16.msra.mxu0 0
  %48 = vmatpush.bf16.msra.mxu0 0
  %49 = vmatpush.bf16.msra.mxu0 0
  %50 = vmatpush.bf16.msra.mxu0 0
  %51 = vmatpush.bf16.msra.mxu0 0
  %52 = vmatpush.bf16.msra.mxu0 %v39
  %53 = vmatpush.bf16.msra.mxu0 %v38
  %54 = vmatmul.bf16.gmra.mxu0 %v44
  %v55 = vpop.f32.mrf.mxu0
  %v56 = vadd.f32 %v23, %v55
  %v57 = vpop.f32.mrf.mxu0
  %v58 = vadd.f32 %v23, %v57
  %59 = vdwg.mxu0
  %v60 = vmul.f32 %v56, 0.5
  %v61 = vmul.f32 %v58, 0.5
  %v62 = vmul.f32 %v56, 0.044715
  %v63 = vmul.f32 %v58, 0.044715
  %v64 = vmul.f32 %v62, %v56
  %v65 = vmul.f32 %v63, %v58
  %v66 = vmul.f32 %v64, %v56
  %v67 = vmul.f32 %v65, %v58
  %v68 = vadd.f32 %v56, %v66
  %v69 = vadd.f32 %v58, %v67
  %v70 = vmul.f32 %v68, 0.7978846
  %v71 = vmul.f32 %v69, 0.7978846
  %v72 = vtanh.pop %v70
  %v73 = vtanh.pop %v71
  %v74 = vadd.f32 %v72, 1.0
  %v75 = vadd.f32 %v73, 1.0
  %v76 = vmul.f32 %v60, %v74
  %v77 = vmul.f32 %v61, %v75
  %v78 = vpack.c.bf16 %v76, %v76
  %v79 = vpack.c.bf16 %v77, %v77
  %vm80 = vcmask 519168
  %81 = vst.msk [vmem:[%s3] sm:$0xf] %vm80, %v78
  %82 = vst.msk [vmem:[%s3 + $0x4] sm:$0xf] %vm80, %v79
  // Predicated region
  $region14: #{mtqe_forward.46} parent=0 // pred_check
    _
  $region15: #{mtqe_forward.46} parent=0 // pred_check_branch
    %84 = sbr.rel (0) target = $region17
  $region16: #{mtqe_forward.46} parent=0 // pred_region
    _
  $region17: #{mtqe_forward.46} parent=0 // pred_fallthru
    _
  // Predicated region
  $region18: #{mtqe_forward.46} parent=0 // pred_check
    _
  $region19: #{mtqe_forward.46} parent=0 // pred_check_branch
    %86 = sbr.rel (0) target = $region21
  $region20: #{mtqe_forward.46} parent=0 // pred_region
    _
  $region21: #{mtqe_forward.46} parent=0 // pred_fallthru
    _

// kernel: mtqe_forward.60
$region0: #{mtqe_forward.60}
  #allocation0 [shape = 'u32[]', space=smem, size = 0x4, offset = 0x4, fixed_abs, tag = 'smem constant byte address 0x4 - core index']
  #allocation1 [shape = 'u32[72,128]{1,0:T(1,128)}', space=vmem, size = 0x9000, scoped, tag = 'internal scratch']
  %s0 = inlined_call_operand.vmem [shape: bf16[16,32], index: 0, kind: input, shape index: {}]
  %s1 = inlined_call_operand.vmem [shape: bf16[16,32], index: 1, kind: input, shape index: {}]
  %s2 = inlined_call_operand.vmem [shape: f32[1,32], index: 2, kind: input, shape index: {}]
  %s3 = inlined_call_operand.vmem [shape: f32[1,32], index: 3, kind: input, shape index: {}]
  %s4 = inlined_call_operand.vmem [shape: bf16[16,32], index: 4, kind: output, shape index: {}]
  %s5 = sld [smem:[#allocation0]]
  $region26: #{mtqe_forward.60} parent=0
    _
  %s7 = ssub.s32 1, %s5
  %s8 = scalar_select 0, %s7, %s5
  // Predicated region
  $region2: #{mtqe_forward.60} parent=0 // pred_check
    _
  $region3: #{mtqe_forward.60} parent=0 // pred_check_branch
    %10 = sbr.rel (0) target = $region5
  $region4: #{mtqe_forward.60} parent=0 // pred_region
    _
  $region5: #{mtqe_forward.60} parent=0 // pred_fallthru
    _
  // Predicated region
  $region6: #{mtqe_forward.60} parent=0 // pred_check
    _
  $region7: #{mtqe_forward.60} parent=0 // pred_check_branch
    %12 = sbr.rel (0) target = $region9
  $region8: #{mtqe_forward.60} parent=0 // pred_region
    _
  $region9: #{mtqe_forward.60} parent=0 // pred_fallthru
    _
  // Predicated region
  $region10: #{mtqe_forward.60} parent=0 // pred_check
    _
  $region11: #{mtqe_forward.60} parent=0 // pred_check_branch
    %14 = sbr.rel (0) target = $region13
  $region12: #{mtqe_forward.60} parent=0 // pred_region
    _
  $region13: #{mtqe_forward.60} parent=0 // pred_fallthru
    _
  // Predicated region
  $region14: #{mtqe_forward.60} parent=0 // pred_check
    _
  $region15: #{mtqe_forward.60} parent=0 // pred_check_branch
    %16 = sbr.rel (0) target = $region17
  $region16: #{mtqe_forward.60} parent=0 // pred_region
    _
  $region17: #{mtqe_forward.60} parent=0 // pred_fallthru
    _
  %v17 = vld [vmem:[%s0] sm:$0xf]
  %v18 = vld [vmem:[%s0 + $0x4] sm:$0xf]
  %v19 = vunpack.c.l.bf16 %v17
  %v20 = vunpack.c.l.bf16 %v18
  %v21 = vld [vmem:[%s1] sm:$0xf]
  %v22 = vld [vmem:[%s1 + $0x4] sm:$0xf]
  %v23 = vunpack.c.l.bf16 %v21
  %v24 = vunpack.c.l.bf16 %v22
  %v25 = vadd.f32 %v19, %v23
  %v26 = vadd.f32 %v20, %v24
  %vm27 = vcmask 261120
  %v28 = vsel %vm27, %v25, 0.0
  %29 = vadd.xlane.f32.xlu0 %v28
  %v30 = vpop.xlane.xlu0 %29
  %v31 = vsel %vm27, %v26, 0.0
  %32 = vadd.xlane.f32.xlu0 %v31
  %v33 = vpop.xlane.xlu0 %32
  %v34 = vrcp.pop 32.0
  %v35 = vmul.f32 32.0, %v34
  %v36 = vsub.f32 1.0, %v35
  %v37 = vmul.f32 %v34, %v36
  %v38 = vadd.f32 %v34, %v37
  %vm39 = vweird.f32 %v34
  %v40 = vsel %vm39, %v34, %v38
  %v41 = vmul.f32 %v30, %v40
  %v42 = vmul.f32 %v33, %v40
  %v43 = vsub.f32 %v25, %v41
  %v44 = vsub.f32 %v26, %v42
  %v45 = vmul.f32 %v43, %v43
  %v46 = vmul.f32 %v44, %v44
  %v47 = vsel %vm27, %v45, 0.0
  %48 = vadd.xlane.f32.xlu0 %v47
  %v49 = vpop.xlane.xlu0 %48
  %v50 = vsel %vm27, %v46, 0.0
  %51 = vadd.xlane.f32.xlu0 %v50
  %v52 = vpop.xlane.xlu0 %51
  %v53 = vmul.f32 %v49, %v40
  %v54 = vmul.f32 %v52, %v40
  %v55 = vadd.f32 %v53, 1e-12
  %v56 = vadd.f32 %v54, 1e-12
  %v57 = vrsqrt.pop %v55
  %v58 = vmul.f32 %v57, %v55
  %v59 = vmul.f32 %v58, %v57
  %v60 = vmul.f32 0.5, %v59
  %v61 = vsub.f32 1.5, %v60
  %v62 = vmul.f32 %v57, %v61
  %vm63 = vweird.f32 %v55
  %vm64 = vweird.f32 %v57
  %vm65 = vmor %vm63, %vm64
  %v66 = vsel %vm65, %v57, %v62
  %v67 = vrsqrt.pop %v56
  %v68 = vmul.f32 %v67, %v56
  %v69 = vmul.f32 %v68, %v67
  %v70 = vmul.f32 0.5, %v69
  %v71 = vsub.f32 1.5, %v70
  %v72 = vmul.f32 %v67, %v71
  %vm73 = vweird.f32 %v56
  %vm74 = vweird.f32 %v67
  %vm75 = vmor %vm73, %vm74
  %v76 = vsel %vm75, %v67, %v72
  %v77 = vmul.f32 %v43, %v66
  %v78 = vmul.f32 %v44, %v76
  %v79 = vld [vmem:[%s2] sm:$0x1]
  %v81 = vperm.slane %v79, 0
  %v83 = vmul.f32 %v77, %v81
  %v84 = vmul.f32 %v78, %v81
  %v85 = vld [vmem:[%s3] sm:$0x1]
  %v87 = vperm.slane %v85, 0
  %v89 = vadd.f32 %v83, %v87
  %v90 = vadd.f32 %v84, %v87
  %v91 = vpack.c.bf16 %v89, %v89
  %v92 = vpack.c.bf16 %v90, %v90
  %vm93 = vcmask 257024
  %94 = vst.msk [vmem:[%s4] sm:$0xf] %vm93, %v91
  %95 = vst.msk [vmem:[%s4 + $0x4] sm:$0xf] %vm93, %v92
  // Predicated region
  $region18: #{mtqe_forward.60} parent=0 // pred_check
    _
  $region19: #{mtqe_forward.60} parent=0 // pred_check_branch
    %97 = sbr.rel (0) target = $region21
  $region20: #{mtqe_forward.60} parent=0 // pred_region
    _
  $region21: #{mtqe_forward.60} parent=0 // pred_fallthru
    _
  // Predicated region
  $region22: #{mtqe_forward.60} parent=0 // pred_check
    _
  $region23: #{mtqe_forward.60} parent=0 // pred_check_branch
    %99 = sbr.rel (0) target = $region25
  $region24: #{mtqe_forward.60} parent=0 // pred_region
    _
  $region25: #{mtqe_forward.60} parent=0 // pred_fallthru
    _

// kernel: mtqe_forward.43
$region0: #{mtqe_forward.43}
  #allocation0 [shape = 'u32[]', space=smem, size = 0x4, offset = 0x4, fixed_abs, tag = 'smem constant byte address 0x4 - core index']
  #allocation1 [shape = 'u32[72,128]{1,0:T(1,128)}', space=vmem, size = 0x9000, scoped, tag = 'internal scratch']
  %s0 = inlined_call_operand.vmem [shape: bf16[2,8,32], index: 0, kind: input, shape index: {}]
  %s1 = inlined_call_operand.vmem [shape: bf16[2,8,32], index: 1, kind: input, shape index: {}]
  %s2 = inlined_call_operand.vmem [shape: bf16[2,8,32], index: 2, kind: input, shape index: {}]
  %s3 = inlined_call_operand.vmem [shape: f32[2,1,8], index: 3, kind: input, shape index: {}]
  %s4 = inlined_call_operand.vmem [shape: bf16[2,8,32], index: 4, kind: output, shape index: {}]
  %s5 = sld [smem:[#allocation0]]
  $region49: #{mtqe_forward.43} parent=0
    _
  %s7 = ssub.s32 1, %s5
  %s8 = scalar_select 0, %s7, %s5
  loop: start=0, step=1, limit=4
  $region2: #{mtqe_forward.43} parent=0 // loop_pre_header
    _
  $region3: #{mtqe_forward.43} parent=0 // loop_header
    %s10 = sphi 0, %s14
    %p11 = scmp.ge.s32.totalorder %s10, 4
    %s20 = sphi 0, %s22
    %s23 = sphi 0, %s20
    %s24 = sphi 0, %s23
    %s40 = sphi 0, %s24
    %s46 = sphi 0, %s48
    %s49 = sphi 0, %s46
    %s50 = sphi 0, %s49
    %s66 = sphi 0, %s50
    %s72 = sphi 0, %s74
    %s75 = sphi 0, %s72
    %s76 = sphi 0, %s75
    %s92 = sphi 0, %s76
    %s98 = sphi 0, %s100
    %s101 = sphi 0, %s98
    %s102 = sphi 0, %s101
    %s118 = sphi 0, %s102
    %s124 = sphi 0, %s126
    %s127 = sphi 0, %s124
    %s128 = sphi 0, %s127
    %s144 = sphi 0, %s128
  $region4: #{mtqe_forward.43} parent=0 // loop_header_branch
    %13 = sbr.rel (%p11) target = $region8
  $region5: #{mtqe_forward.43} parent=0 // loop_body
    %s15 = ssub.s32 %s10, 1
    %s16 = ssub.s32 %s10, 2
    %s17 = sadd.s32 %s10, 1
    %s18 = ssub.s32 %s10, %s17
    %p19 = scmp.eq.s32.totalorder %s18, 0
    %s21 = sadd.s32 %s20, 1
    %s22 = scalar_select %p19, %s20, %s21
    %p25 = pneg %p19
    %p26 = scmp.eq.s32.totalorder %s10, 1
    %p27 = por %p25, %p26
    %p28 = scmp.ne.s32.totalorder %s20, %s23
    %p29 = scmp.eq.s32.totalorder %s10, 0
    %p30 = por %p28, %p29
    %p31 = scmp.ne.s32.totalorder %s20, %s23
    %p32 = scmp.eq.s32.totalorder %s15, 1
    %p33 = por %p31, %p32
    %p34 = scmp.ne.s32.totalorder %s23, %s24
    %p35 = scmp.eq.s32.totalorder %s15, 0
    %p36 = por %p34, %p35
    %p37 = scmp.ne.s32.totalorder %s23, %s24
    %p38 = scmp.eq.s32.totalorder %s16, 1
    %p39 = por %p37, %p38
    %p41 = scmp.ne.s32.totalorder %s24, %s40
    %p42 = scmp.eq.s32.totalorder %s16, 0
    %p43 = por %p41, %p42
    %s44 = ssub.s32 %s10, %s17
    %p45 = scmp.eq.s32.totalorder %s44, 0
    %s47 = sadd.s32 %s46, 1
    %s48 = scalar_select %p45, %s46, %s47
    %p51 = pneg %p45
    %p52 = scmp.eq.s32.totalorder %s10, 1
    %p53 = por %p51, %p52
    %p54 = scmp.ne.s32.totalorder %s46, %s49
    %p55 = scmp.eq.s32.totalorder %s10, 0
    %p56 = por %p54, %p55
    %p57 = scmp.ne.s32.totalorder %s46, %s49
    %p58 = scmp.eq.s32.totalorder %s15, 1
    %p59 = por %p57, %p58
    %p60 = scmp.ne.s32.totalorder %s49, %s50
    %p61 = scmp.eq.s32.totalorder %s15, 0
    %p62 = por %p60, %p61
    %p63 = scmp.ne.s32.totalorder %s49, %s50
    %p64 = scmp.eq.s32.totalorder %s16, 1
    %p65 = por %p63, %p64
    %p67 = scmp.ne.s32.totalorder %s50, %s66
    %p68 = scmp.eq.s32.totalorder %s16, 0
    %p69 = por %p67, %p68
    %s70 = ssub.s32 %s10, %s17
    %p71 = scmp.eq.s32.totalorder %s70, 0
    %s73 = sadd.s32 %s72, 1
    %s74 = scalar_select %p71, %s72, %s73
    %p77 = pneg %p71
    %p78 = scmp.eq.s32.totalorder %s10, 1
    %p79 = por %p77, %p78
    %p80 = scmp.ne.s32.totalorder %s72, %s75
    %p81 = scmp.eq.s32.totalorder %s10, 0
    %p82 = por %p80, %p81
    %p83 = scmp.ne.s32.totalorder %s72, %s75
    %p84 = scmp.eq.s32.totalorder %s15, 1
    %p85 = por %p83, %p84
    %p86 = scmp.ne.s32.totalorder %s75, %s76
    %p87 = scmp.eq.s32.totalorder %s15, 0
    %p88 = por %p86, %p87
    %p89 = scmp.ne.s32.totalorder %s75, %s76
    %p90 = scmp.eq.s32.totalorder %s16, 1
    %p91 = por %p89, %p90
    %p93 = scmp.ne.s32.totalorder %s76, %s92
    %p94 = scmp.eq.s32.totalorder %s16, 0
    %p95 = por %p93, %p94
    %s96 = ssub.s32 %s10, %s17
    %p97 = scmp.eq.s32.totalorder %s96, 0
    %s99 = sadd.s32 %s98, 1
    %s100 = scalar_select %p97, %s98, %s99
    %p103 = pneg %p97
    %p104 = scmp.eq.s32.totalorder %s10, 1
    %p105 = por %p103, %p104
    %p106 = scmp.ne.s32.totalorder %s98, %s101
    %p107 = scmp.eq.s32.totalorder %s10, 0
    %p108 = por %p106, %p107
    %p109 = scmp.ne.s32.totalorder %s98, %s101
    %p110 = scmp.eq.s32.totalorder %s15, 1
    %p111 = por %p109, %p110
    %p112 = scmp.ne.s32.totalorder %s101, %s102
    %p113 = scmp.eq.s32.totalorder %s15, 0
    %p114 = por %p112, %p113
    %p115 = scmp.ne.s32.totalorder %s101, %s102
    %p116 = scmp.eq.s32.totalorder %s16, 1
    %p117 = por %p115, %p116
    %p119 = scmp.ne.s32.totalorder %s102, %s118
    %p120 = scmp.eq.s32.totalorder %s16, 0
    %p121 = por %p119, %p120
    %s122 = ssub.s32 %s10, %s17
    %p123 = scmp.eq.s32.totalorder %s122, 0
    %s125 = sadd.s32 %s124, 1
    %s126 = scalar_select %p123, %s124, %s125
    %p129 = pneg %p123
    %p130 = scmp.eq.s32.totalorder %s10, 1
    %p131 = por %p129, %p130
    %p132 = scmp.ne.s32.totalorder %s124, %s127
    %p133 = scmp.eq.s32.totalorder %s10, 0
    %p134 = por %p132, %p133
    %p135 = scmp.ne.s32.totalorder %s124, %s127
    %p136 = scmp.eq.s32.totalorder %s15, 1
    %p137 = por %p135, %p136
    %p138 = scmp.ne.s32.totalorder %s127, %s128
    %p139 = scmp.eq.s32.totalorder %s15, 0
    %p140 = por %p138, %p139
    %p141 = scmp.ne.s32.totalorder %s127, %s128
    %p142 = scmp.eq.s32.totalorder %s16, 1
    %p143 = por %p141, %p142
    %p145 = scmp.ne.s32.totalorder %s128, %s144
    %p146 = scmp.eq.s32.totalorder %s16, 0
    %p147 = por %p145, %p146
    %p148 = scmp.le.s32.totalorder 1, %s10
    %p149 = scmp.lt.s32.totalorder %s10, 3
    %p150 = pnand %p148, %p149
    %p151 = pneg %p150
    // Predicated region
    $region9: #{mtqe_forward.43} parent=5 // pred_check
      _
    $region10: #{mtqe_forward.43} parent=5 // pred_check_branch
      %153 = sbr.rel (%p150) target = $region12
    $region11: #{mtqe_forward.43} parent=5 // pred_region
      %s154 = ssub.s32 %s10, 1
    $region12: #{mtqe_forward.43} parent=5 // pred_fallthru
      _
    %p155 = scmp.lt.s32.totalorder %s10, 2
    // Predicated region
    $region13: #{mtqe_forward.43} parent=5 // pred_check
      %p156 = pneg %p155
    $region14: #{mtqe_forward.43} parent=5 // pred_check_branch
      %158 = sbr.rel (%p156) target = $region16
    $region15: #{mtqe_forward.43} parent=5 // pred_region
      // Predicated region
      $region17: #{mtqe_forward.43} parent=15 // pred_check
        %p159 = pneg %p30
      $region18: #{mtqe_forward.43} parent=15 // pred_check_branch
        %161 = sbr.rel (%p159) target = $region20
      $region19: #{mtqe_forward.43} parent=15 // pred_region
        %p162 = scmp.lt.s32.totalorder %s10, 1
        %s163 = scalar_select %p162, %s10, 1
        %s164 = smul.addr %s163, 4
        %s165 = scalar_lea.vmem %s0, %s164
      $region20: #{mtqe_forward.43} parent=15 // pred_fallthru
        _
      // Predicated region
      $region21: #{mtqe_forward.43} parent=15 // pred_check
        %p166 = pneg %p56
      $region22: #{mtqe_forward.43} parent=15 // pred_check_branch
        %168 = sbr.rel (%p166) target = $region24
      $region23: #{mtqe_forward.43} parent=15 // pred_region
        %p169 = scmp.lt.s32.totalorder %s10, 1
        %s170 = scalar_select %p169, %s10, 1
        %s171 = smul.addr %s170, 4
        %s172 = scalar_lea.vmem %s1, %s171
      $region24: #{mtqe_forward.43} parent=15 // pred_fallthru
        _
      // Predicated region
      $region25: #{mtqe_forward.43} parent=15 // pred_check
        %p173 = pneg %p82
      $region26: #{mtqe_forward.43} parent=15 // pred_check_branch
        %175 = sbr.rel (%p173) target = $region28
      $region27: #{mtqe_forward.43} parent=15 // pred_region
        %p176 = scmp.lt.s32.totalorder %s10, 1
        %s177 = scalar_select %p176, %s10, 1
        %s178 = smul.addr %s177, 4
        %s179 = scalar_lea.vmem %s2, %s178
      $region28: #{mtqe_forward.43} parent=15 // pred_fallthru
        _
      // Predicated region
      $region29: #{mtqe_forward.43} parent=15 // pred_check
        %p180 = pneg %p108
      $region30: #{mtqe_forward.43} parent=15 // pred_check_branch
        %182 = sbr.rel (%p180) target = $region32
      $region31: #{mtqe_forward.43} parent=15 // pred_region
        %p183 = scmp.lt.s32.totalorder %s10, 1
        %s184 = scalar_select %p183, %s10, 1
        %s185 = scalar_lea.vmem %s3, %s184
      $region32: #{mtqe_forward.43} parent=15 // pred_fallthru
        _
    $region16: #{mtqe_forward.43} parent=5 // pred_fallthru
      _
    %p186 = scmp.le.s32.totalorder 1, %s10
    %p187 = scmp.lt.s32.totalorder %s10, 3
    %p188 = pnand %p186, %p187
    %p189 = pneg %p188
    // Predicated region
    $region33: #{mtqe_forward.43} parent=5 // pred_check
      _
    $region34: #{mtqe_forward.43} parent=5 // pred_check_branch
      %191 = sbr.rel (%p188) target = $region36
    $region35: #{mtqe_forward.43} parent=5 // pred_region
      %s192 = ssub.s32 %s10, 1
      %p193 = scmp.lt.s32.totalorder %s15, 1
      %s194 = scalar_select %p193, %s15, 1
      %s195 = smul.addr %s194, 4
      %s196 = scalar_lea.vmem %s0, %s195
      %p197 = pneg %p36
      %p198 = pneg %p33
      %p199 = scmp.lt.s32.totalorder %s15, 1
      %s200 = scalar_select %p199, %s15, 1
      %s201 = smul.addr %s200, 4
      %s202 = scalar_lea.vmem %s1, %s201
      %p203 = pneg %p62
      %p204 = pneg %p59
      %p205 = scmp.lt.s32.totalorder %s15, 1
      %s206 = scalar_select %p205, %s15, 1
      %s207 = smul.addr %s206, 4
      %s208 = scalar_lea.vmem %s2, %s207
      %p209 = pneg %p88
      %p210 = pneg %p85
      %p211 = scmp.lt.s32.totalorder %s15, 1
      %s212 = scalar_select %p211, %s15, 1
      %s213 = scalar_lea.vmem %s3, %s212
      %p214 = pneg %p114
      %p215 = pneg %p111
      %p216 = pneg %p140
      %p217 = pneg %p137
      %p218 = scmp.lt.s32.totalorder %s15, 1
      %s219 = scalar_select %p218, %s15, 1
      %s220 = smul.addr %s219, 4
      %s221 = scalar_lea.vmem %s4, %s220
      %p222 = scmp.lt.s32.totalorder %s15, 1
      %s223 = scalar_select %p222, %s15, 1
      %s224 = smul.addr %s223, 4
      %s225 = scalar_lea.vmem %s0, %s224
      %p226 = scmp.lt.s32.totalorder %s15, 1
      %s227 = scalar_select %p226, %s15, 1
      %s228 = smul.addr %s227, 4
      %s229 = scalar_lea.vmem %s1, %s228
      %p230 = scmp.lt.s32.totalorder %s15, 1
      %s231 = scalar_select %p230, %s15, 1
      %s232 = smul.addr %s231, 4
      %s233 = scalar_lea.vmem %s2, %s232
      %p234 = scmp.lt.s32.totalorder %s15, 1
      %s235 = scalar_select %p234, %s15, 1
      %s236 = scalar_lea.vmem %s3, %s235
      %p237 = scmp.lt.s32.totalorder %s15, 1
      %s238 = scalar_select %p237, %s15, 1
      %s239 = smul.addr %s238, 4
      %s240 = scalar_lea.vmem %s4, %s239
      %v242 = vld [vmem:[%s236] sm:$0x1]
      %v243 = vsub.f32 1.0, %v242
      %v244 = vmul.f32 %v243, -1e+09
      %v245 = vld [vmem:[%s225] sm:$0xf]
      %v246 = vld [vmem:[%s229] sm:$0xf]
      %v247 = vld [vmem:[%s233] sm:$0xf]
      %vm248 = vcmask 64512
      %v250 = vsel %vm248, %v245, 0
      %v253 = vsel %vm248, %v246, 0
      %255 = vmatpush.bf16.xpose.msra.mxu0 0
      %256 = vmatpush.bf16.xpose.msra.mxu0 0
      %257 = vmatpush.bf16.xpose.msra.mxu0 0
      %258 = vmatpush.bf16.xpose.msra.mxu0 0
      %259 = vmatpush.bf16.xpose.msra.mxu0 0
      %260 = vmatpush.bf16.xpose.msra.mxu0 0
      %261 = vmatpush.bf16.xpose.msra.mxu0 0
      %262 = vmatpush.bf16.xpose.msra.mxu0 %v253
      %263 = vmatmul.bf16.gmra.mxu0 %v250
      %v264 = vpop.f32.mrf.mxu0
      %v265 = vadd.f32 0.0, %v264
      %v266 = vpop.f32.mrf.mxu0
      %267 = vdwg.mxu0
      %v268 = vmul.f32 %v265, 0.35355338
      %v270 = vperm.slane %v244, 0
      %v272 = vadd.f32 %v268, %v270
      %v273 = vsel %vm248, %v272, -inf
      %274 = vmax.xlane.f32.xlu0 %v273
      %v275 = vpop.xlane.xlu0 %274
      %v276 = vsub.f32 %v272, %v275
      %v277 = vmul.f32 %v276, 1.442695
      %v278 = vpow.pop %v277
      %v279 = vsel %vm248, %v278, 0.0
      %280 = vadd.xlane.f32.xlu0 %v279
      %v281 = vpop.xlane.xlu0 %280
      %v282 = vrcp.pop %v281
      %v283 = vmul.f32 %v278, %v282
      %v284 = vpack.c.bf16 %v283, %v283
      %v286 = vsel %vm248, %v284, 0
      %vm288 = vcmask 1043456
      %v290 = vsel %vm288, %v247, 0
      %292 = vmatpush.bf16.msra.mxu0 0
      %293 = vmatpush.bf16.msra.mxu0 0
      %294 = vmatpush.bf16.msra.mxu0 0
      %295 = vmatpush.bf16.msra.mxu0 0
      %296 = vmatpush.bf16.msra.mxu0 0
      %297 = vmatpush.bf16.msra.mxu0 0
      %298 = vmatpush.bf16.msra.mxu0 0
      %299 = vmatpush.bf16.msra.mxu0 %v290
      %300 = vmatmul.bf16.gmra.mxu0 %v286
      %v301 = vpop.f32.mrf.mxu0
      %v302 = vadd.f32 0.0, %v301
      %v303 = vpop.f32.mrf.mxu0
      %304 = vdwg.mxu0
      %v305 = vpack.c.bf16 %v302, %v302
      %vm306 = vcmask 60416
      %307 = vst.msk [vmem:[%s240] sm:$0xf] %vm306, %v305
      %v308 = vld [vmem:[%s225] sm:$0xf]
      %v309 = vld [vmem:[%s229] sm:$0xf]
      %v310 = vld [vmem:[%s233] sm:$0xf]
      %v312 = vunpack.c.l.b16 %v308
      %v313 = vpack.c.b16 %v312, %v312
      %314 = vrot.lane.b32.xlu0 %v313, 120
      %v315 = vpop.permute.xlu0 %314
      %v317 = vunpack.c.l.b16 %v309
      %v318 = vpack.c.b16 %v317, %v317
      %319 = vrot.lane.b32.xlu0 %v318, 120
      %v320 = vpop.permute.xlu0 %319
      %v322 = vsel %vm248, %v315, 0
      %v325 = vsel %vm248, %v320, 0
      %327 = vmatpush.bf16.xpose.msra.mxu0 0
      %328 = vmatpush.bf16.xpose.msra.mxu0 0
      %329 = vmatpush.bf16.xpose.msra.mxu0 0
      %330 = vmatpush.bf16.xpose.msra.mxu0 0
      %331 = vmatpush.bf16.xpose.msra.mxu0 0
      %332 = vmatpush.bf16.xpose.msra.mxu0 0
      %333 = vmatpush.bf16.xpose.msra.mxu0 0
      %334 = vmatpush.bf16.xpose.msra.mxu0 %v325
      %335 = vmatmul.bf16.gmra.mxu0 %v322
      %v336 = vpop.f32.mrf.mxu0
      %v337 = vadd.f32 0.0, %v336
      %v338 = vpop.f32.mrf.mxu0
      %339 = vdwg.mxu0
      %v340 = vmul.f32 %v337, 0.35355338
      %v341 = vadd.f32 %v340, %v270
      %v342 = vsel %vm248, %v341, -inf
      %343 = vmax.xlane.f32.xlu0 %v342
      %v344 = vpop.xlane.xlu0 %343
      %v345 = vsub.f32 %v341, %v344
      %v346 = vmul.f32 %v345, 1.442695
      %v347 = vpow.pop %v346
      %v348 = vsel %vm248, %v347, 0.0
      %349 = vadd.xlane.f32.xlu0 %v348
      %v350 = vpop.xlane.xlu0 %349
      %v351 = vrcp.pop %v350
      %v352 = vmul.f32 %v347, %v351
      %v353 = vpack.c.bf16 %v352, %v352
      %v355 = vunpack.c.l.b16 %v310
      %v356 = vpack.c.b16 %v355, %v355
      %357 = vrot.lane.b32.xlu0 %v356, 120
      %v358 = vpop.permute.xlu0 %357
      %v360 = vsel %vm248, %v353, 0
      %v363 = vsel %vm288, %v358, 0
      %365 = vmatpush.bf16.msra.mxu0 0
      %366 = vmatpush.bf16.msra.mxu0 0
      %367 = vmatpush.bf16.msra.mxu0 0
      %368 = vmatpush.bf16.msra.mxu0 0
      %369 = vmatpush.bf16.msra.mxu0 0
      %370 = vmatpush.bf16.msra.mxu0 0
      %371 = vmatpush.bf16.msra.mxu0 0
      %372 = vmatpush.bf16.msra.mxu0 %v363
      %373 = vmatmul.bf16.gmra.mxu0 %v360
      %v374 = vpop.f32.mrf.mxu0
      %v375 = vadd.f32 0.0, %v374
      %v376 = vpop.f32.mrf.mxu0
      %377 = vdwg.mxu0
      %v378 = vpack.c.bf16 %v375, %v375
      %380 = vrot.lane.b32.xlu0 %v378, 8
      %v381 = vpop.permute.xlu0 %380
      %vm383 = vcmask 126016
      %384 = vst.msk [vmem:[%s240] sm:$0xf] %vm383, %v381
      %v385 = vld [vmem:[%s225] sm:$0xf]
      %v386 = vld [vmem:[%s229] sm:$0xf]
      %v387 = vld [vmem:[%s233] sm:$0xf]
      %v389 = vunpack.c.l.b16 %v385
      %v390 = vpack.c.b16 %v389, %v389
      %391 = vrot.lane.b32.xlu0 %v390, 112
      %v392 = vpop.permute.xlu0 %391
      %v394 = vunpack.c.l.b16 %v386
      %v395 = vpack.c.b16 %v394, %v394
      %396 = vrot.lane.b32.xlu0 %v395, 112
      %v397 = vpop.permute.xlu0 %396
      %v399 = vsel %vm248, %v392, 0
      %v402 = vsel %vm248, %v397, 0
      %404 = vmatpush.bf16.xpose.msra.mxu0 0
      %405 = vmatpush.bf16.xpose.msra.mxu0 0
      %406 = vmatpush.bf16.xpose.msra.mxu0 0
      %407 = vmatpush.bf16.xpose.msra.mxu0 0
      %408 = vmatpush.bf16.xpose.msra.mxu0 0
      %409 = vmatpush.bf16.xpose.msra.mxu0 0
      %410 = vmatpush.bf16.xpose.msra.mxu0 0
      %411 = vmatpush.bf16.xpose.msra.mxu0 %v402
      %412 = vmatmul.bf16.gmra.mxu0 %v399
      %v413 = vpop.f32.mrf.mxu0
      %v414 = vadd.f32 0.0, %v413
      %v415 = vpop.f32.mrf.mxu0
      %416 = vdwg.mxu0
      %v417 = vmul.f32 %v414, 0.35355338
      %v418 = vadd.f32 %v417, %v270
      %v419 = vsel %vm248, %v418, -inf
      %420 = vmax.xlane.f32.xlu0 %v419
      %v421 = vpop.xlane.xlu0 %420
      %v422 = vsub.f32 %v418, %v421
      %v423 = vmul.f32 %v422, 1.442695
      %v424 = vpow.pop %v423
      %v425 = vsel %vm248, %v424, 0.0
      %426 = vadd.xlane.f32.xlu0 %v425
      %v427 = vpop.xlane.xlu0 %426
      %v428 = vrcp.pop %v427
      %v429 = vmul.f32 %v424, %v428
      %v430 = vpack.c.bf16 %v429, %v429
      %v432 = vunpack.c.l.b16 %v387
      %v433 = vpack.c.b16 %v432, %v432
      %434 = vrot.lane.b32.xlu0 %v433, 112
      %v435 = vpop.permute.xlu0 %434
      %v437 = vsel %vm248, %v430, 0
      %v440 = vsel %vm288, %v435, 0
      %442 = vmatpush.bf16.msra.mxu0 0
      %443 = vmatpush.bf16.msra.mxu0 0
      %444 = vmatpush.bf16.msra.mxu0 0
      %445 = vmatpush.bf16.msra.mxu0 0
      %446 = vmatpush.bf16.msra.mxu0 0
      %447 = vmatpush.bf16.msra.mxu0 0
      %448 = vmatpush.bf16.msra.mxu0 0
      %449 = vmatpush.bf16.msra.mxu0 %v440
      %450 = vmatmul.bf16.gmra.mxu0 %v437
      %v451 = vpop.f32.mrf.mxu0
      %v452 = vadd.f32 0.0, %v451
      %v453 = vpop.f32.mrf.mxu0
      %454 = vdwg.mxu0
      %v455 = vpack.c.bf16 %v452, %v452
      %457 = vrot.lane.b32.xlu0 %v455, 16
      %v458 = vpop.permute.xlu0 %457
      %vm460 = vcmask 191616
      %461 = vst.msk [vmem:[%s240] sm:$0xf] %vm460, %v458
      %v462 = vld [vmem:[%s225] sm:$0xf]
      %v463 = vld [vmem:[%s229] sm:$0xf]
      %v464 = vld [vmem:[%s233] sm:$0xf]
      %v466 = vunpack.c.l.b16 %v462
      %v467 = vpack.c.b16 %v466, %v466
      %468 = vrot.lane.b32.xlu0 %v467, 104
      %v469 = vpop.permute.xlu0 %468
      %v471 = vunpack.c.l.b16 %v463
      %v472 = vpack.c.b16 %v471, %v471
      %473 = vrot.lane.b32.xlu0 %v472, 104
      %v474 = vpop.permute.xlu0 %473
      %v476 = vsel %vm248, %v469, 0
      %v479 = vsel %vm248, %v474, 0
      %481 = vmatpush.bf16.xpose.msra.mxu0 0
      %482 = vmatpush.bf16.xpose.msra.mxu0 0
      %483 = vmatpush.bf16.xpose.msra.mxu0 0
      %484 = vmatpush.bf16.xpose.msra.mxu0 0
      %485 = vmatpush.bf16.xpose.msra.mxu0 0
      %486 = vmatpush.bf16.xpose.msra.mxu0 0
      %487 = vmatpush.bf16.xpose.msra.mxu0 0
      %488 = vmatpush.bf16.xpose.msra.mxu0 %v479
      %489 = vmatmul.bf16.gmra.mxu0 %v476
      %v490 = vpop.f32.mrf.mxu0
      %v491 = vadd.f32 0.0, %v490
      %v492 = vpop.f32.mrf.mxu0
      %493 = vdwg.mxu0
      %v494 = vmul.f32 %v491, 0.35355338
      %v495 = vadd.f32 %v494, %v270
      %v496 = vsel %vm248, %v495, -inf
      %497 = vmax.xlane.f32.xlu0 %v496
      %v498 = vpop.xlane.xlu0 %497
      %v499 = vsub.f32 %v495, %v498
      %v500 = vmul.f32 %v499, 1.442695
      %v501 = vpow.pop %v500
      %v502 = vsel %vm248, %v501, 0.0
      %503 = vadd.xlane.f32.xlu0 %v502
      %v504 = vpop.xlane.xlu0 %503
      %v505 = vrcp.pop %v504
      %v506 = vmul.f32 %v501, %v505
      %v507 = vpack.c.bf16 %v506, %v506
      %v509 = vunpack.c.l.b16 %v464
      %v510 = vpack.c.b16 %v509, %v509
      %511 = vrot.lane.b32.xlu0 %v510, 104
      %v512 = vpop.permute.xlu0 %511
      %v514 = vsel %vm248, %v507, 0
      %v517 = vsel %vm288, %v512, 0
      %519 = vmatpush.bf16.msra.mxu0 0
      %520 = vmatpush.bf16.msra.mxu0 0
      %521 = vmatpush.bf16.msra.mxu0 0
      %522 = vmatpush.bf16.msra.mxu0 0
      %523 = vmatpush.bf16.msra.mxu0 0
      %524 = vmatpush.bf16.msra.mxu0 0
      %525 = vmatpush.bf16.msra.mxu0 0
      %526 = vmatpush.bf16.msra.mxu0 %v517
      %527 = vmatmul.bf16.gmra.mxu0 %v514
      %v528 = vpop.f32.mrf.mxu0
      %v529 = vadd.f32 0.0, %v528
      %v530 = vpop.f32.mrf.mxu0
      %531 = vdwg.mxu0
      %v532 = vpack.c.bf16 %v529, %v529
      %534 = vrot.lane.b32.xlu0 %v532, 24
      %v535 = vpop.permute.xlu0 %534
      %vm537 = vcmask 257216
      %538 = vst.msk [vmem:[%s240] sm:$0xf] %vm537, %v535
      %p539 = scmp.lt.s32.totalorder %s15, 1
      %s540 = scalar_select %p539, %s15, 1
      %s541 = smul.addr %s540, 4
      %s542 = scalar_lea.vmem %s4, %s541
      // Predicated region
      $region37: #{mtqe_forward.43} parent=35 // pred_check
        %p543 = pneg %p137
      $region38: #{mtqe_forward.43} parent=35 // pred_check_branch
        %545 = sbr.rel (%p543) target = $region40
      $region39: #{mtqe_forward.43} parent=35 // pred_region
        _
      $region40: #{mtqe_forward.43} parent=35 // pred_fallthru
        _
    $region36: #{mtqe_forward.43} parent=5 // pred_fallthru
      _
    %p546 = scmp.le.s32.totalorder 2, %s10
    // Predicated region
    $region41: #{mtqe_forward.43} parent=5 // pred_check
      %p547 = pneg %p546
    $region42: #{mtqe_forward.43} parent=5 // pred_check_branch
      %549 = sbr.rel (%p547) target = $region44
    $region43: #{mtqe_forward.43} parent=5 // pred_region
      %s550 = ssub.s32 %s10, 2
      // Predicated region
      $region45: #{mtqe_forward.43} parent=43 // pred_check
        %p551 = pneg %p143
      $region46: #{mtqe_forward.43} parent=43 // pred_check_branch
        %553 = sbr.rel (%p551) target = $region48
      $region47: #{mtqe_forward.43} parent=43 // pred_region
        %p554 = scmp.lt.s32.totalorder %s16, 1
        %s555 = scalar_select %p554, %s16, 1
        %s556 = smul.addr %s555, 4
        %s557 = scalar_lea.vmem %s4, %s556
      $region48: #{mtqe_forward.43} parent=43 // pred_fallthru
        _
    $region44: #{mtqe_forward.43} parent=5 // pred_fallthru
      _
  $region6: #{mtqe_forward.43} parent=0 // loop_footer
    %s14 = sadd.s32 1, %s10
  $region7: #{mtqe_forward.43} parent=0 // loop_footer_branch
    %9 = sbr.rel target = $region3
  $region8: #{mtqe_forward.43} parent=0 // loop_exit
    _

// kernel: mtqe_forward.47
$region0: #{mtqe_forward.47}
  #allocation0 [shape = 'u32[]', space=smem, size = 0x4, offset = 0x4, fixed_abs, tag = 'smem constant byte address 0x4 - core index']
  #allocation1 [shape = 'u32[72,128]{1,0:T(1,128)}', space=vmem, size = 0x9000, scoped, tag = 'internal scratch']
  %s0 = inlined_call_operand.vmem [shape: bf16[16,64], index: 0, kind: input, shape index: {}]
  %s1 = inlined_call_operand.vmem [shape: bf16[64,32], index: 1, kind: input, shape index: {}]
  %s2 = inlined_call_operand.vmem [shape: f32[1,32], index: 2, kind: input, shape index: {}]
  %s3 = inlined_call_operand.vmem [shape: bf16[16,32], index: 3, kind: output, shape index: {}]
  %s4 = sld [smem:[#allocation0]]
  $region22: #{mtqe_forward.47} parent=0
    _
  %s6 = ssub.s32 1, %s4
  %s7 = scalar_select 0, %s6, %s4
  // Predicated region
  $region2: #{mtqe_forward.47} parent=0 // pred_check
    _
  $region3: #{mtqe_forward.47} parent=0 // pred_check_branch
    %9 = sbr.rel (0) target = $region5
  $region4: #{mtqe_forward.47} parent=0 // pred_region
    _
  $region5: #{mtqe_forward.47} parent=0 // pred_fallthru
    _
  // Predicated region
  $region6: #{mtqe_forward.47} parent=0 // pred_check
    _
  $region7: #{mtqe_forward.47} parent=0 // pred_check_branch
    %11 = sbr.rel (0) target = $region9
  $region8: #{mtqe_forward.47} parent=0 // pred_region
    _
  $region9: #{mtqe_forward.47} parent=0 // pred_fallthru
    _
  // Predicated region
  $region10: #{mtqe_forward.47} parent=0 // pred_check
    _
  $region11: #{mtqe_forward.47} parent=0 // pred_check_branch
    %13 = sbr.rel (0) target = $region13
  $region12: #{mtqe_forward.47} parent=0 // pred_region
    _
  $region13: #{mtqe_forward.47} parent=0 // pred_fallthru
    _
  %v15 = vld [vmem:[%s0] sm:$0xf]
  %v16 = vld [vmem:[%s0 + $0x4] sm:$0xf]
  %v17 = vld [vmem:[%s1] sm:$0xf]
  %v18 = vld [vmem:[%s1 + $0x4] sm:$0xf]
  %v19 = vld [vmem:[%s1 + $0x8] sm:$0xf]
  %v20 = vld [vmem:[%s1 + $0xc] sm:$0xf]
  %v21 = vld [vmem:[%s1 + $0x10] sm:$0xf]
  %v22 = vld [vmem:[%s1 + $0x14] sm:$0xf]
  %v23 = vld [vmem:[%s1 + $0x18] sm:$0xf]
  %v24 = vld [vmem:[%s1 + $0x1c] sm:$0xf]
  %v25 = vld [vmem:[%s2] sm:$0x1]
  %v27 = vperm.slane %v25, 0
  %v31 = vunpack.c.l.b16 %v15
  %v32 = vunpack.c.l.b16 %v16
  %v33 = vpack.c.b16 %v32, %v31
  %v42 = vunpack.c.l.b16 %v17
  %v43 = vunpack.c.l.b16 %v18
  %v44 = vunpack.c.l.b16 %v19
  %v45 = vunpack.c.l.b16 %v20
  %v46 = vunpack.c.l.b16 %v21
  %v47 = vunpack.c.l.b16 %v22
  %v48 = vunpack.c.l.b16 %v23
  %v49 = vunpack.c.l.b16 %v24
  %v50 = vpack.c.b16 %v43, %v42
  %v51 = vpack.c.b16 %v45, %v44
  %v52 = vpack.c.b16 %v47, %v46
  %v53 = vpack.c.b16 %v49, %v48
  %vm58 = vcmask 523264
  %v60 = vsel %vm58, %v33, 0
  %62 = vmatpush.bf16.msra.mxu0 0
  %63 = vmatpush.bf16.msra.mxu0 0
  %64 = vmatpush.bf16.msra.mxu0 0
  %65 = vmatpush.bf16.msra.mxu0 0
  %66 = vmatpush.bf16.msra.mxu0 %v53
  %67 = vmatpush.bf16.msra.mxu0 %v52
  %68 = vmatpush.bf16.msra.mxu0 %v51
  %69 = vmatpush.bf16.msra.mxu0 %v50
  %70 = vmatmul.bf16.gmra.mxu0 %v60
  %v71 = vpop.f32.mrf.mxu0
  %v72 = vadd.f32 %v27, %v71
  %v73 = vpop.f32.mrf.mxu0
  %v74 = vadd.f32 %v27, %v73
  %75 = vdwg.mxu0
  %v76 = vpack.c.bf16 %v72, %v72
  %v77 = vpack.c.bf16 %v74, %v74
  %vm78 = vcmask 257024
  %79 = vst.msk [vmem:[%s3] sm:$0xf] %vm78, %v76
  %80 = vst.msk [vmem:[%s3 + $0x4] sm:$0xf] %vm78, %v77
  // Predicated region
  $region14: #{mtqe_forward.47} parent=0 // pred_check
    _
  $region15: #{mtqe_forward.47} parent=0 // pred_check_branch
    %82 = sbr.rel (0) target = $region17
  $region16: #{mtqe_forward.47} parent=0 // pred_region
    _
  $region17: #{mtqe_forward.47} parent=0 // pred_fallthru
    _
  // Predicated region
  $region18: #{mtqe_forward.47} parent=0 // pred_check
    _
  $region19: #{mtqe_forward.47} parent=0 // pred_check_branch
    %84 = sbr.rel (0) target = $region21
  $region20: #{mtqe_forward.47} parent=0 // pred_region
    _
  $region21: #{mtqe_forward.47} parent=0 // pred_fallthru
    _

// kernel: mtqe_forward.62
$region0: #{mtqe_forward.62}
  #allocation0 [shape = 'u32[]', space=smem, size = 0x4, offset = 0x4, fixed_abs, tag = 'smem constant byte address 0x4 - core index']
  #allocation1 [shape = 'u32[72,128]{1,0:T(1,128)}', space=vmem, size = 0x9000, scoped, tag = 'internal scratch']
  %s0 = inlined_call_operand.vmem [shape: bf16[16,32], index: 0, kind: input, shape index: {}]
  %s1 = inlined_call_operand.vmem [shape: bf16[32,64], index: 1, kind: input, shape index: {}]
  %s2 = inlined_call_operand.vmem [shape: f32[1,64], index: 2, kind: input, shape index: {}]
  %s3 = inlined_call_operand.vmem [shape: bf16[16,64], index: 3, kind: output, shape index: {}]
  %s4 = sld [smem:[#allocation0]]
  $region22: #{mtqe_forward.62} parent=0
    _
  %s6 = ssub.s32 1, %s4
  %s7 = scalar_select 0, %s6, %s4
  // Predicated region
  $region2: #{mtqe_forward.62} parent=0 // pred_check
    _
  $region3: #{mtqe_forward.62} parent=0 // pred_check_branch
    %9 = sbr.rel (0) target = $region5
  $region4: #{mtqe_forward.62} parent=0 // pred_region
    _
  $region5: #{mtqe_forward.62} parent=0 // pred_fallthru
    _
  // Predicated region
  $region6: #{mtqe_forward.62} parent=0 // pred_check
    _
  $region7: #{mtqe_forward.62} parent=0 // pred_check_branch
    %11 = sbr.rel (0) target = $region9
  $region8: #{mtqe_forward.62} parent=0 // pred_region
    _
  $region9: #{mtqe_forward.62} parent=0 // pred_fallthru
    _
  // Predicated region
  $region10: #{mtqe_forward.62} parent=0 // pred_check
    _
  $region11: #{mtqe_forward.62} parent=0 // pred_check_branch
    %13 = sbr.rel (0) target = $region13
  $region12: #{mtqe_forward.62} parent=0 // pred_region
    _
  $region13: #{mtqe_forward.62} parent=0 // pred_fallthru
    _
  %v15 = vld [vmem:[%s0] sm:$0xf]
  %v16 = vld [vmem:[%s0 + $0x4] sm:$0xf]
  %v17 = vld [vmem:[%s1] sm:$0xf]
  %v18 = vld [vmem:[%s1 + $0x4] sm:$0xf]
  %v19 = vld [vmem:[%s1 + $0x8] sm:$0xf]
  %v20 = vld [vmem:[%s1 + $0xc] sm:$0xf]
  %v21 = vld [vmem:[%s2] sm:$0x1]
  %v23 = vperm.slane %v21, 0
  %v27 = vunpack.c.l.b16 %v15
  %v28 = vunpack.c.l.b16 %v16
  %v29 = vpack.c.b16 %v28, %v27
  %v34 = vunpack.c.l.b16 %v17
  %v35 = vunpack.c.l.b16 %v18
  %v36 = vunpack.c.l.b16 %v19
  %v37 = vunpack.c.l.b16 %v20
  %v38 = vpack.c.b16 %v35, %v34
  %v39 = vpack.c.b16 %v37, %v36
  %vm42 = vcmask 261120
  %v44 = vsel %vm42, %v29, 0
  %46 = vmatpush.bf16.msra.mxu0 0
  %47 = vmatpush.bf16.msra.mxu0 0
  %48 = vmatpush.bf16.msra.mxu0 0
  %49 = vmatpush.bf16.msra.mxu0 0
  %50 = vmatpush.bf16.msra.mxu0 0
  %51 = vmatpush.bf16.msra.mxu0 0
  %52 = vmatpush.bf16.msra.mxu0 %v39
  %53 = vmatpush.bf16.msra.mxu0 %v38
  %54 = vmatmul.bf16.gmra.mxu0 %v44
  %v55 = vpop.f32.mrf.mxu0
  %v56 = vadd.f32 %v23, %v55
  %v57 = vpop.f32.mrf.mxu0
  %v58 = vadd.f32 %v23, %v57
  %59 = vdwg.mxu0
  %v60 = vpack.c.bf16 %v56, %v56
  %v61 = vpack.c.bf16 %v58, %v58
  %vm62 = vcmask 519168
  %63 = vst.msk [vmem:[%s3] sm:$0xf] %vm62, %v60
  %64 = vst.msk [vmem:[%s3 + $0x4] sm:$0xf] %vm62, %v61
  // Predicated region
  $region14: #{mtqe_forward.62} parent=0 // pred_check
    _
  $region15: #{mtqe_forward.62} parent=0 // pred_check_branch
    %66 = sbr.rel (0) target = $region17
  $region16: #{mtqe_forward.62} parent=0 // pred_region
    _
  $region17: #{mtqe_forward.62} parent=0 // pred_fallthru
    _
  // Predicated region
  $region18: #{mtqe_forward.62} parent=0 // pred_check
    _
  $region19: #{mtqe_forward.62} parent=0 // pred_check_branch
    %68 = sbr.rel (0) target = $region21
  $region20: #{mtqe_forward.62} parent=0 // pred_region
    _
  $region21: #{mtqe_forward.62} parent=0 // pred_fallthru
    _

// kernel: mtqe_forward.81
$region0: #{mtqe_forward.81}
  #allocation0 [shape = 'u32[]', space=smem, size = 0x4, offset = 0x4, fixed_abs, tag = 'smem constant byte address 0x4 - core index']
  #allocation1 [shape = 'u32[72,128]{1,0:T(1,128)}', space=vmem, size = 0x9000, scoped, tag = 'internal scratch']
  %s0 = inlined_call_operand.vmem [shape: bf16[16,32], index: 0, kind: input, shape index: {}]
  %s1 = inlined_call_operand.vmem [shape: bf16[32,128], index: 1, kind: input, shape index: {}]
  %s2 = inlined_call_operand.vmem [shape: f32[1,128], index: 2, kind: input, shape index: {}]
  %s3 = inlined_call_operand.vmem [shape: f32[16,128], index: 3, kind: output, shape index: {}]
  %s4 = sld [smem:[#allocation0]]
  $region22: #{mtqe_forward.81} parent=0
    _
  %s6 = ssub.s32 1, %s4
  %s7 = scalar_select 0, %s6, %s4
  // Predicated region
  $region2: #{mtqe_forward.81} parent=0 // pred_check
    _
  $region3: #{mtqe_forward.81} parent=0 // pred_check_branch
    %9 = sbr.rel (0) target = $region5
  $region4: #{mtqe_forward.81} parent=0 // pred_region
    _
  $region5: #{mtqe_forward.81} parent=0 // pred_fallthru
    _
  // Predicated region
  $region6: #{mtqe_forward.81} parent=0 // pred_check
    _
  $region7: #{mtqe_forward.81} parent=0 // pred_check_branch
    %11 = sbr.rel (0) target = $region9
  $region8: #{mtqe_forward.81} parent=0 // pred_region
    _
  $region9: #{mtqe_forward.81} parent=0 // pred_fallthru
    _
  // Predicated region
  $region10: #{mtqe_forward.81} parent=0 // pred_check
    _
  $region11: #{mtqe_forward.81} parent=0 // pred_check_branch
    %13 = sbr.rel (0) target = $region13
  $region12: #{mtqe_forward.81} parent=0 // pred_region
    _
  $region13: #{mtqe_forward.81} parent=0 // pred_fallthru
    _
  %v15 = vld [vmem:[%s0] sm:$0xf]
  %v16 = vld [vmem:[%s0 + $0x4] sm:$0xf]
  %v17 = vld [vmem:[%s1] sm:$0xf]
  %v18 = vld [vmem:[%s1 + $0x4] sm:$0xf]
  %v19 = vld [vmem:[%s1 + $0x8] sm:$0xf]
  %v20 = vld [vmem:[%s1 + $0xc] sm:$0xf]
  %v21 = vld [vmem:[%s2] sm:$0x1]
  %v23 = vperm.slane %v21, 0
  %v27 = vunpack.c.l.b16 %v15
  %v28 = vunpack.c.l.b16 %v16
  %v29 = vpack.c.b16 %v28, %v27
  %v34 = vunpack.c.l.b16 %v17
  %v35 = vunpack.c.l.b16 %v18
  %v36 = vunpack.c.l.b16 %v19
  %v37 = vunpack.c.l.b16 %v20
  %v38 = vpack.c.b16 %v35, %v34
  %v39 = vpack.c.b16 %v37, %v36
  %vm42 = vcmask 261120
  %v44 = vsel %vm42, %v29, 0
  %46 = vmatpush.bf16.msra.mxu0 0
  %47 = vmatpush.bf16.msra.mxu0 0
  %48 = vmatpush.bf16.msra.mxu0 0
  %49 = vmatpush.bf16.msra.mxu0 0
  %50 = vmatpush.bf16.msra.mxu0 0
  %51 = vmatpush.bf16.msra.mxu0 0
  %52 = vmatpush.bf16.msra.mxu0 %v39
  %53 = vmatpush.bf16.msra.mxu0 %v38
  %54 = vmatmul.bf16.gmra.mxu0 %v44
  %v55 = vpop.f32.mrf.mxu0
  %v56 = vadd.f32 %v23, %v55
  %v57 = vpop.f32.mrf.mxu0
  %v58 = vadd.f32 %v23, %v57
  %59 = vdwg.mxu0
  %60 = vst [vmem:[%s3] sm:$0xff] %v56
  %61 = vst [vmem:[%s3 + $0x8] sm:$0xff] %v58
  // Predicated region
  $region14: #{mtqe_forward.81} parent=0 // pred_check
    _
  $region15: #{mtqe_forward.81} parent=0 // pred_check_branch
    %63 = sbr.rel (0) target = $region17
  $region16: #{mtqe_forward.81} parent=0 // pred_region
    _
  $region17: #{mtqe_forward.81} parent=0 // pred_fallthru
    _
  // Predicated region
  $region18: #{mtqe_forward.81} parent=0 // pred_check
    _
  $region19: #{mtqe_forward.81} parent=0 // pred_check_branch
    %65 = sbr.rel (0) target = $region21
  $region20: #{mtqe_forward.81} parent=0 // pred_region
    _
  $region21: #{mtqe_forward.81} parent=0 // pred_fallthru
    _

</llo_original>
